<compile_context>
chip_gen: v5e
topology: v5e:2x2
jax: 0.10.0
libtpu: 0.0.40
codegen_flags: <defaults>
</compile_context>

<pallas_src>
import math

import jax
import jax.numpy as jnp
from jax.experimental import pallas as pl
from jax.experimental.pallas import tpu as pltpu

ROW_TILE = 1024              # rows per grid step (multiple of 8); sweep 512-2048
FORCE_OUT_PAD = 128          # lane-dense padded width for the force head output
VMEM_LIMIT_BYTES = 32 * 1024 * 1024   # explicit scoped-VMEM limit (v5e default is 16 MiB)


def _round_up(x, m):
    return ((x + m - 1) // m) * m


# ----------------------------- in-kernel math -------------------------------

def _silu(x):
    return x * jax.nn.sigmoid(x)


def _gelu(x):
    # TODO(synk): PyTorch nn.GELU default is the exact erf form; tanh
    # approximation used here (max abs deviation ~1e-3) since erf lowering on
    # Mosaic is not guaranteed.
    c = math.sqrt(2.0 / math.pi)
    return 0.5 * x * (1.0 + jnp.tanh(c * (x + 0.044715 * x * x * x)))


def _layernorm(x, gamma, beta, eps=1e-5):
    mu = jnp.mean(x, axis=-1, keepdims=True)
    var = jnp.mean((x - mu) ** 2, axis=-1, keepdims=True)
    return (x - mu) * jax.lax.rsqrt(var + eps) * gamma + beta


# ------------------------------- kernels -------------------------------------

def _edge_mlp_kernel(feat_ref, w1_ref, b1_ref, w2_ref, b2_ref, w3_ref, b3_ref,
                     g_ref, be_ref, out_ref):
    """edge_embedding_mlp (Linear->GELU->Linear->GELU->Linear) + LayerNorm."""
    x = feat_ref[...]                       # (T, 3)
    w1 = w1_ref[...]                        # (3, H)
    # K=3 first layer as 3 broadcast multiply-adds (too skinny for MXU; the
    # following HxH matmuls dominate this kernel anyway).
    h = b1_ref[...] + x[:, 0:1] * w1[0:1, :]
    h = h + x[:, 1:2] * w1[1:2, :]
    h = h + x[:, 2:3] * w1[2:3, :]
    h = _gelu(h)
    h = jnp.dot(h, w2_ref[...], preferred_element_type=jnp.float32) + b2_ref[...]
    h = _gelu(h)
    e = jnp.dot(h, w3_ref[...], preferred_element_type=jnp.float32) + b3_ref[...]
    out_ref[...] = _layernorm(e, g_ref[...], be_ref[...])


def _ln_kernel(x_ref, g_ref, b_ref, out_ref):
    """Per-layer LayerNorm over N node rows (computed once, then gathered)."""
    out_ref[...] = _layernorm(x_ref[...], g_ref[...], b_ref[...])


def _phi_msg_kernel(e_ref, c_ref, n_ref, w1_ref, b1_ref, w2_ref, b2_ref, out_ref):
    """phi(edge + LN(center) + LN(neighbor)) * LN(neighbor); inputs already LN'd."""
    n = n_ref[...]
    s = e_ref[...] + c_ref[...] + n
    h = _silu(s)
    h = jnp.dot(h, w1_ref[...], preferred_element_type=jnp.float32) + b1_ref[...]
    h = _silu(h)
    theta = jnp.dot(h, w2_ref[...], preferred_element_type=jnp.float32) + b2_ref[...]
    out_ref[...] = n * theta


def _theta_kernel(x_ref, xln_ref, agg_ref, w_ref, b_ref, out_ref):
    """theta(SiLU(LN(x) + agg)) + x  (MPNN residual fused; x_ln precomputed)."""
    h = _silu(xln_ref[...] + agg_ref[...])
    out_ref[...] = (jnp.dot(h, w_ref[...], preferred_element_type=jnp.float32)
                    + b_ref[...] + x_ref[...])


def _force_mlp_kernel(x_ref, w1_ref, b1_ref, w2_ref, b2_ref, out_ref):
    """Force head; final layer weights are zero-padded to 128 lanes."""
    h = jnp.dot(x_ref[...], w1_ref[...], preferred_element_type=jnp.float32) + b1_ref[...]
    h = _gelu(h)
    out_ref[...] = jnp.dot(h, w2_ref[...], preferred_element_type=jnp.float32) + b2_ref[...]


# --------------------------- pallas_call wrapper ------------------------------

def _pick_tile(rows):
    """Multiple of 8, <= ROW_TILE, and small enough that the grid has >= 2 steps
    (keeps both v7x TensorCores busy and gives DMA/compute overlap)."""
    half = _round_up((rows + 1) // 2, 8)
    return max(8, min(ROW_TILE, half))


def _run_rowwise(kernel, row_inputs, param_inputs, out_cols):
    """Tile `row_inputs` (all same #rows) over rows; params stay resident."""
    rows = row_inputs[0].shape[0]
    tile = _pick_tile(rows)
    grid = (pl.cdiv(rows, tile),)           # ragged last tile handled by Pallas

    in_specs = [pl.BlockSpec((tile, a.shape[1]), lambda i: (i, 0))
                for a in row_inputs]
    # Constant index maps -> weights/biases stay resident in VMEM across the grid.
    in_specs += [pl.BlockSpec(p.shape, lambda i: (0, 0)) for p in param_inputs]
    out_spec = pl.BlockSpec((tile, out_cols), lambda i: (i, 0))

    return pl.pallas_call(
        kernel,
        grid=grid,
        in_specs=in_specs,
        out_specs=out_spec,
        out_shape=jax.ShapeDtypeStruct((rows, out_cols), jnp.float32),
        compiler_params=pltpu.CompilerParams(
            dimension_semantics=("parallel",),
            vmem_limit_bytes=VMEM_LIMIT_BYTES),
    )(*row_inputs, *param_inputs)


# ------------------------------ parameters ------------------------------------

def init_params(key, embed_dim, hidden_dim, num_mpnn_layers):
    def xavier(k, shape):
        fan_in, fan_out = shape
        lim = math.sqrt(6.0 / (fan_in + fan_out))
        return jax.random.uniform(k, shape, jnp.float32, -lim, lim)

    keys = iter(jax.random.split(key, 64))

    # force head final layer, padded once to 128 lanes (lane-dense stores).
    force_w2 = xavier(next(keys), (hidden_dim, 3))
    force_w2_pad = jnp.zeros((hidden_dim, FORCE_OUT_PAD), jnp.float32).at[:, :3].set(force_w2)
    force_b2_pad = jnp.zeros((1, FORCE_OUT_PAD), jnp.float32)

    p = {
        # edge_embedding_mlp: Linear(3,h) GELU Linear(h,h) GELU Linear(h,e)
        "edge_w1": xavier(next(keys), (3, hidden_dim)),
        "edge_b1": jnp.zeros((1, hidden_dim), jnp.float32),
        "edge_w2": xavier(next(keys), (hidden_dim, hidden_dim)),
        "edge_b2": jnp.zeros((1, hidden_dim), jnp.float32),
        "edge_w3": xavier(next(keys), (hidden_dim, embed_dim)),
        "edge_b3": jnp.zeros((1, embed_dim), jnp.float32),
        "edge_ln_g": jnp.ones((1, embed_dim), jnp.float32),
        "edge_ln_b": jnp.zeros((1, embed_dim), jnp.float32),
        # force_pred_mlp: Linear(e,h) GELU Linear(h,3)
        "force_w1": xavier(next(keys), (embed_dim, hidden_dim)),
        "force_b1": jnp.zeros((1, hidden_dim), jnp.float32),
        "force_w2_pad": force_w2_pad,
        "force_b2_pad": force_b2_pad,
        # nn.Parameter(torch.randn((1, embed_dim)))
        "node_embed": jax.random.normal(next(keys), (1, embed_dim), jnp.float32),
        "mp_layers": [],
    }
    for _ in range(num_mpnn_layers):
        p["mp_layers"].append({
            "ln_g": jnp.ones((1, embed_dim), jnp.float32),
            "ln_b": jnp.zeros((1, embed_dim), jnp.float32),
            # phi: SiLU Linear(e,h) SiLU Linear(h,e)
            "phi_w1": xavier(next(keys), (embed_dim, hidden_dim)),
            "phi_b1": jnp.zeros((1, hidden_dim), jnp.float32),
            "phi_w2": xavier(next(keys), (hidden_dim, embed_dim)),
            "phi_b2": jnp.zeros((1, embed_dim), jnp.float32),
            # theta: SiLU Linear(e,e)
            "theta_w": xavier(next(keys), (embed_dim, embed_dim)),
            "theta_b": jnp.zeros((1, embed_dim), jnp.float32),
        })
    return p


# ------------------------------- forward --------------------------------------

@jax.jit
def gamdnet_forward(params, pos, edge_index_list):
    """pos: (N, 3) float32, edge_index_list: (2, E) int32 -> (N, 3) forces."""
    center = edge_index_list[0]
    neighbor = edge_index_list[1]
    embed_dim = params["node_embed"].shape[1]
    num_nodes = pos.shape[0]

    # Sort edges by center node once (edge order is irrelevant to the math) so
    # aggregation becomes a sorted streaming segment sum instead of a random
    # scatter-add.
    perm = jnp.argsort(center)
    center = center[perm]
    neighbor = neighbor[perm]

    # edge features: pos[j] - pos[i]  (glue gather)
    rel_pos = (pos[neighbor] - pos[center]).astype(jnp.float32)       # (E, 3)

    # edge embedding MLP + LayerNorm (Pallas)
    edge_emb = _run_rowwise(
        _edge_mlp_kernel, [rel_pos],
        [params["edge_w1"], params["edge_b1"], params["edge_w2"],
         params["edge_b2"], params["edge_w3"], params["edge_b3"],
         params["edge_ln_g"], params["edge_ln_b"]],
        embed_dim)

    node_emb = jnp.tile(params["node_embed"], (num_nodes, 1))         # (N, D)

    for layer in params["mp_layers"]:
        # One LayerNorm per layer over N rows (Pallas).  Gathering the LN'd
        # rows costs the same HBM bytes as gathering raw rows, but avoids
        # redoing the LN 2E times inside the E-row phi kernel.
        x_ln = _run_rowwise(_ln_kernel, [node_emb],
                            [layer["ln_g"], layer["ln_b"]], embed_dim)

        # TODO(synk): per-edge gathers and the sorted segment reduction stay in
        # XLA; fusing them into the phi kernel needs scalar-prefetched
        # per-node-block edge offsets (MoE group-matmul pattern).
        c_ln = x_ln[center]                                           # (E, D)
        n_ln = x_ln[neighbor]                                         # (E, D)

        # phi MLP + per-edge message (Pallas)
        msg = _run_rowwise(
            _phi_msg_kernel, [edge_emb, c_ln, n_ln],
            [layer["phi_w1"], layer["phi_b1"],
             layer["phi_w2"], layer["phi_b2"]],
            embed_dim)

        # sorted segment reduction (== torch index_add_ over center indices)
        agg = jax.ops.segment_sum(msg, center, num_segments=num_nodes,
                                  indices_are_sorted=True)

        # theta MLP + MPNN residual, consuming the precomputed x_ln (Pallas)
        node_emb = _run_rowwise(
            _theta_kernel, [node_emb, x_ln, agg],
            [layer["theta_w"], layer["theta_b"]],
            embed_dim)

    # force prediction MLP (Pallas), lane-dense 128-wide output; slice 3 cols.
    forces = _run_rowwise(
        _force_mlp_kernel, [node_emb],
        [params["force_w1"], params["force_b1"],
         params["force_w2_pad"], params["force_b2_pad"]],
        FORCE_OUT_PAD)
    return forces[:, :3]


# --------------------------------- main ---------------------------------------

if __name__ == "__main__":
    embed_dim = 32
    hidden_dim = 32
    num_mpnn_layers = 2
    num_nodes = 64
    num_edges = 256

    key = jax.random.PRNGKey(0)
    k_param, k_pos, k_edge = jax.random.split(key, 3)

    params = init_params(k_param, embed_dim, hidden_dim, num_mpnn_layers)
    pos = jax.random.normal(k_pos, (num_nodes, 3), jnp.float32)
    edge_index_list = jax.random.randint(
        k_edge, (2, num_edges), 0, num_nodes, dtype=jnp.int32)

    forces = gamdnet_forward(params, pos, edge_index_list)
    forces = jax.block_until_ready(forces)
    assert forces.shape == (num_nodes, 3)
    assert forces.dtype == jnp.float32
    print("KERNEL_OK")
</pallas_src>

<mosaic_0001>
module attributes {stable_mosaic.version = 11 : i64} {
  func.func @_ln_kernel(%arg0: i32, %arg1: memref<32x32xf32, #tpu.memory_space<vmem>>, %arg2: memref<1x32xf32, #tpu.memory_space<vmem>>, %arg3: memref<1x32xf32, #tpu.memory_space<vmem>>, %arg4: memref<32x32xf32, #tpu.memory_space<vmem>>) attributes {dimension_semantics = [#tpu.dimension_semantics<parallel>], iteration_bounds = array<i64: 2>, scalar_prefetch = 0 : i64, scratch_operands = 0 : i64, tpu.core_type = #tpu.core_type<tc>, window_params = [{transform_indices = @transform_0, window_bounds = array<i64: 32, 32>}, {pipeline_mode = #tpu.pipeline_mode<synchronous>, transform_indices = @transform_1, window_bounds = array<i64: 1, 32>}, {pipeline_mode = #tpu.pipeline_mode<synchronous>, transform_indices = @transform_2, window_bounds = array<i64: 1, 32>}, {transform_indices = @transform_3, window_bounds = array<i64: 32, 32>}]} {
    %c0 = arith.constant 0 : index
    %c0_0 = arith.constant 0 : index
    %0 = vector.load %arg1[%c0, %c0_0] : memref<32x32xf32, #tpu.memory_space<vmem>>, vector<32x32xf32>
    %c0_1 = arith.constant 0 : index
    %c0_2 = arith.constant 0 : index
    %1 = vector.load %arg2[%c0_1, %c0_2] : memref<1x32xf32, #tpu.memory_space<vmem>>, vector<1x32xf32>
    %c0_3 = arith.constant 0 : index
    %c0_4 = arith.constant 0 : index
    %2 = vector.load %arg3[%c0_3, %c0_4] : memref<1x32xf32, #tpu.memory_space<vmem>>, vector<1x32xf32>
    %cst = arith.constant dense<0.000000e+00> : vector<32xf32>
    %3 = vector.multi_reduction <add>, %0, %cst [1] : vector<32x32xf32> to vector<32xf32>
    %4 = vector.shape_cast %3 : vector<32xf32> to vector<32x1xf32>
    %cst_5 = arith.constant 3.200000e+01 : f32
    %5 = vector.broadcast %cst_5 : f32 to vector<32x1xf32>
    %6 = arith.divf %4, %5 : vector<32x1xf32>
    %7 = vector.broadcast %6 : vector<32x1xf32> to vector<32x32xf32>
    %8 = arith.subf %0, %7 : vector<32x32xf32>
    %9 = arith.mulf %8, %8 : vector<32x32xf32>
    %cst_6 = arith.constant dense<0.000000e+00> : vector<32xf32>
    %10 = vector.multi_reduction <add>, %9, %cst_6 [1] : vector<32x32xf32> to vector<32xf32>
    %11 = vector.shape_cast %10 : vector<32xf32> to vector<32x1xf32>
    %cst_7 = arith.constant 3.200000e+01 : f32
    %12 = vector.broadcast %cst_7 : f32 to vector<32x1xf32>
    %13 = arith.divf %11, %12 : vector<32x1xf32>
    %14 = vector.broadcast %6 : vector<32x1xf32> to vector<32x32xf32>
    %15 = arith.subf %0, %14 : vector<32x32xf32>
    %cst_8 = arith.constant 9.99999974E-6 : f32
    %16 = vector.broadcast %cst_8 : f32 to vector<32x1xf32>
    %17 = arith.addf %13, %16 : vector<32x1xf32>
    %18 = math.rsqrt %17 : vector<32x1xf32>
    %19 = vector.broadcast %18 : vector<32x1xf32> to vector<32x32xf32>
    %20 = arith.mulf %15, %19 : vector<32x32xf32>
    %21 = vector.broadcast %1 : vector<1x32xf32> to vector<32x32xf32>
    %22 = arith.mulf %20, %21 : vector<32x32xf32>
    %23 = vector.broadcast %2 : vector<1x32xf32> to vector<32x32xf32>
    %24 = arith.addf %22, %23 : vector<32x32xf32>
    %c0_9 = arith.constant 0 : index
    %c0_10 = arith.constant 0 : index
    %25 = vector.load %arg4[%c0_9, %c0_10] : memref<32x32xf32, #tpu.memory_space<vmem>>, vector<32x32xf32>
    tpu.vector_store %arg4[%c0_9, %c0_10], %24 {strides = array<i32>} : memref<32x32xf32, #tpu.memory_space<vmem>>, vector<32x32xf32>,
    return
  }
  func.func @transform_0(%arg0: i32) -> (i32, i32) {
    %c0_i32 = arith.constant 0 : i32
    %c0_i32_0 = arith.constant 0 : i32
    return %arg0, %c0_i32 : i32, i32
  }
  func.func @transform_1(%arg0: i32) -> (i32, i32) {
    %c0_i32 = arith.constant 0 : i32
    %c0_i32_0 = arith.constant 0 : i32
    %c0_i32_1 = arith.constant 0 : i32
    return %c0_i32, %c0_i32_0 : i32, i32
  }
  func.func @transform_2(%arg0: i32) -> (i32, i32) {
    %c0_i32 = arith.constant 0 : i32
    %c0_i32_0 = arith.constant 0 : i32
    %c0_i32_1 = arith.constant 0 : i32
    return %c0_i32, %c0_i32_0 : i32, i32
  }
  func.func @transform_3(%arg0: i32) -> (i32, i32) {
    %c0_i32 = arith.constant 0 : i32
    %c0_i32_0 = arith.constant 0 : i32
    return %arg0, %c0_i32 : i32, i32
  }
}

module attributes {stable_mosaic.version = 11 : i64} {
  func.func @_edge_mlp_kernel(%arg0: i32, %arg1: memref<128x3xf32, #tpu.memory_space<vmem>>, %arg2: memref<3x32xf32, #tpu.memory_space<vmem>>, %arg3: memref<1x32xf32, #tpu.memory_space<vmem>>, %arg4: memref<32x32xf32, #tpu.memory_space<vmem>>, %arg5: memref<1x32xf32, #tpu.memory_space<vmem>>, %arg6: memref<32x32xf32, #tpu.memory_space<vmem>>, %arg7: memref<1x32xf32, #tpu.memory_space<vmem>>, %arg8: memref<1x32xf32, #tpu.memory_space<vmem>>, %arg9: memref<1x32xf32, #tpu.memory_space<vmem>>, %arg10: memref<128x32xf32, #tpu.memory_space<vmem>>) attributes {dimension_semantics = [#tpu.dimension_semantics<parallel>], iteration_bounds = array<i64: 2>, scalar_prefetch = 0 : i64, scratch_operands = 0 : i64, tpu.core_type = #tpu.core_type<tc>, window_params = [{transform_indices = @transform_0, window_bounds = array<i64: 128, 3>}, {pipeline_mode = #tpu.pipeline_mode<synchronous>, transform_indices = @transform_1, window_bounds = array<i64: 3, 32>}, {pipeline_mode = #tpu.pipeline_mode<synchronous>, transform_indices = @transform_2, window_bounds = array<i64: 1, 32>}, {pipeline_mode = #tpu.pipeline_mode<synchronous>, transform_indices = @transform_3, window_bounds = array<i64: 32, 32>}, {pipeline_mode = #tpu.pipeline_mode<synchronous>, transform_indices = @transform_4, window_bounds = array<i64: 1, 32>}, {pipeline_mode = #tpu.pipeline_mode<synchronous>, transform_indices = @transform_5, window_bounds = array<i64: 32, 32>}, {pipeline_mode = #tpu.pipeline_mode<synchronous>, transform_indices = @transform_6, window_bounds = array<i64: 1, 32>}, {pipeline_mode = #tpu.pipeline_mode<synchronous>, transform_indices = @transform_7, window_bounds = array<i64: 1, 32>}, {pipeline_mode = #tpu.pipeline_mode<synchronous>, transform_indices = @transform_8, window_bounds = array<i64: 1, 32>}, {transform_indices = @transform_9, window_bounds = array<i64: 128, 32>}]} {
    %c0 = arith.constant 0 : index
    %c0_0 = arith.constant 0 : index
    %0 = vector.load %arg1[%c0, %c0_0] : memref<128x3xf32, #tpu.memory_space<vmem>>, vector<128x3xf32>
    %c0_1 = arith.constant 0 : index
    %c0_2 = arith.constant 0 : index
    %1 = vector.load %arg2[%c0_1, %c0_2] : memref<3x32xf32, #tpu.memory_space<vmem>>, vector<3x32xf32>
    %c0_3 = arith.constant 0 : index
    %c0_4 = arith.constant 0 : index
    %2 = vector.load %arg3[%c0_3, %c0_4] : memref<1x32xf32, #tpu.memory_space<vmem>>, vector<1x32xf32>
    %3 = vector.extract_strided_slice %0 {offsets = [0, 0], sizes = [128, 1], strides = [1, 1]} : vector<128x3xf32> to vector<128x1xf32>
    %4 = vector.extract_strided_slice %1 {offsets = [0, 0], sizes = [1, 32], strides = [1, 1]} : vector<3x32xf32> to vector<1x32xf32>
    %5 = vector.broadcast %3 : vector<128x1xf32> to vector<128x32xf32>
    %6 = vector.broadcast %4 : vector<1x32xf32> to vector<128x32xf32>
    %7 = arith.mulf %5, %6 : vector<128x32xf32>
    %8 = vector.broadcast %2 : vector<1x32xf32> to vector<128x32xf32>
    %9 = arith.addf %8, %7 : vector<128x32xf32>
    %10 = vector.extract_strided_slice %0 {offsets = [0, 1], sizes = [128, 1], strides = [1, 1]} : vector<128x3xf32> to vector<128x1xf32>
    %11 = vector.extract_strided_slice %1 {offsets = [1, 0], sizes = [1, 32], strides = [1, 1]} : vector<3x32xf32> to vector<1x32xf32>
    %12 = vector.broadcast %10 : vector<128x1xf32> to vector<128x32xf32>
    %13 = vector.broadcast %11 : vector<1x32xf32> to vector<128x32xf32>
    %14 = arith.mulf %12, %13 : vector<128x32xf32>
    %15 = arith.addf %9, %14 : vector<128x32xf32>
    %16 = vector.extract_strided_slice %0 {offsets = [0, 2], sizes = [128, 1], strides = [1, 1]} : vector<128x3xf32> to vector<128x1xf32>
    %17 = vector.extract_strided_slice %1 {offsets = [2, 0], sizes = [1, 32], strides = [1, 1]} : vector<3x32xf32> to vector<1x32xf32>
    %18 = vector.broadcast %16 : vector<128x1xf32> to vector<128x32xf32>
    %19 = vector.broadcast %17 : vector<1x32xf32> to vector<128x32xf32>
    %20 = arith.mulf %18, %19 : vector<128x32xf32>
    %21 = arith.addf %15, %20 : vector<128x32xf32>
    %cst = arith.constant 5.000000e-01 : f32
    %22 = vector.broadcast %cst : f32 to vector<128x32xf32>
    %23 = arith.mulf %22, %21 : vector<128x32xf32>
    %cst_5 = arith.constant 4.471500e-02 : f32
    %24 = vector.broadcast %cst_5 : f32 to vector<128x32xf32>
    %25 = arith.mulf %24, %21 : vector<128x32xf32>
    %26 = arith.mulf %25, %21 : vector<128x32xf32>
    %27 = arith.mulf %26, %21 : vector<128x32xf32>
    %28 = arith.addf %21, %27 : vector<128x32xf32>
    %cst_6 = arith.constant 0.797884583 : f32
    %29 = vector.broadcast %cst_6 : f32 to vector<128x32xf32>
    %30 = arith.mulf %29, %28 : vector<128x32xf32>
    %31 = math.tanh %30 : vector<128x32xf32>
    %cst_7 = arith.constant 1.000000e+00 : f32
    %32 = vector.broadcast %cst_7 : f32 to vector<128x32xf32>
    %33 = arith.addf %32, %31 : vector<128x32xf32>
    %34 = arith.mulf %23, %33 : vector<128x32xf32>
    %c0_8 = arith.constant 0 : index
    %c0_9 = arith.constant 0 : index
    %35 = vector.load %arg4[%c0_8, %c0_9] : memref<32x32xf32, #tpu.memory_space<vmem>>, vector<32x32xf32>
    %cst_10 = arith.constant dense<0.000000e+00> : vector<128x32xf32>
    %36 = tpu.matmul %34, %35, %cst_10 {dimension_numbers = #tpu.dot_dimension_numbers<[1], [0], [0], [1], [0, 0, 1, 1], [], []>} : vector<128x32xf32>, vector<32x32xf32>, vector<128x32xf32> -> vector<128x32xf32>
    %c0_11 = arith.constant 0 : index
    %c0_12 = arith.constant 0 : index
    %37 = vector.load %arg5[%c0_11, %c0_12] : memref<1x32xf32, #tpu.memory_space<vmem>>, vector<1x32xf32>
    %38 = vector.broadcast %37 : vector<1x32xf32> to vector<128x32xf32>
    %39 = arith.addf %36, %38 : vector<128x32xf32>
    %cst_13 = arith.constant 5.000000e-01 : f32
    %40 = vector.broadcast %cst_13 : f32 to vector<128x32xf32>
    %41 = arith.mulf %40, %39 : vector<128x32xf32>
    %cst_14 = arith.constant 4.471500e-02 : f32
    %42 = vector.broadcast %cst_14 : f32 to vector<128x32xf32>
    %43 = arith.mulf %42, %39 : vector<128x32xf32>
    %44 = arith.mulf %43, %39 : vector<128x32xf32>
    %45 = arith.mulf %44, %39 : vector<128x32xf32>
    %46 = arith.addf %39, %45 : vector<128x32xf32>
    %cst_15 = arith.constant 0.797884583 : f32
    %47 = vector.broadcast %cst_15 : f32 to vector<128x32xf32>
    %48 = arith.mulf %47, %46 : vector<128x32xf32>
    %49 = math.tanh %48 : vector<128x32xf32>
    %cst_16 = arith.constant 1.000000e+00 : f32
    %50 = vector.broadcast %cst_16 : f32 to vector<128x32xf32>
    %51 = arith.addf %50, %49 : vector<128x32xf32>
    %52 = arith.mulf %41, %51 : vector<128x32xf32>
    %c0_17 = arith.constant 0 : index
    %c0_18 = arith.constant 0 : index
    %53 = vector.load %arg6[%c0_17, %c0_18] : memref<32x32xf32, #tpu.memory_space<vmem>>, vector<32x32xf32>
    %cst_19 = arith.constant dense<0.000000e+00> : vector<128x32xf32>
    %54 = tpu.matmul %52, %53, %cst_19 {dimension_numbers = #tpu.dot_dimension_numbers<[1], [0], [0], [1], [0, 0, 1, 1], [], []>} : vector<128x32xf32>, vector<32x32xf32>, vector<128x32xf32> -> vector<128x32xf32>
    %c0_20 = arith.constant 0 : index
    %c0_21 = arith.constant 0 : index
    %55 = vector.load %arg7[%c0_20, %c0_21] : memref<1x32xf32, #tpu.memory_space<vmem>>, vector<1x32xf32>
    %56 = vector.broadcast %55 : vector<1x32xf32> to vector<128x32xf32>
    %57 = arith.addf %54, %56 : vector<128x32xf32>
    %c0_22 = arith.constant 0 : index
    %c0_23 = arith.constant 0 : index
    %58 = vector.load %arg8[%c0_22, %c0_23] : memref<1x32xf32, #tpu.memory_space<vmem>>, vector<1x32xf32>
    %c0_24 = arith.constant 0 : index
    %c0_25 = arith.constant 0 : index
    %59 = vector.load %arg9[%c0_24, %c0_25] : memref<1x32xf32, #tpu.memory_space<vmem>>, vector<1x32xf32>
    %cst_26 = arith.constant dense<0.000000e+00> : vector<128xf32>
    %60 = vector.multi_reduction <add>, %57, %cst_26 [1] : vector<128x32xf32> to vector<128xf32>
    %61 = vector.shape_cast %60 : vector<128xf32> to vector<128x1xf32>
    %cst_27 = arith.constant 3.200000e+01 : f32
    %62 = vector.broadcast %cst_27 : f32 to vector<128x1xf32>
    %63 = arith.divf %61, %62 : vector<128x1xf32>
    %64 = vector.broadcast %63 : vector<128x1xf32> to vector<128x32xf32>
    %65 = arith.subf %57, %64 : vector<128x32xf32>
    %66 = arith.mulf %65, %65 : vector<128x32xf32>
    %cst_28 = arith.constant dense<0.000000e+00> : vector<128xf32>
    %67 = vector.multi_reduction <add>, %66, %cst_28 [1] : vector<128x32xf32> to vector<128xf32>
    %68 = vector.shape_cast %67 : vector<128xf32> to vector<128x1xf32>
    %cst_29 = arith.constant 3.200000e+01 : f32
    %69 = vector.broadcast %cst_29 : f32 to vector<128x1xf32>
    %70 = arith.divf %68, %69 : vector<128x1xf32>
    %71 = vector.broadcast %63 : vector<128x1xf32> to vector<128x32xf32>
    %72 = arith.subf %57, %71 : vector<128x32xf32>
    %cst_30 = arith.constant 9.99999974E-6 : f32
    %73 = vector.broadcast %cst_30 : f32 to vector<128x1xf32>
    %74 = arith.addf %70, %73 : vector<128x1xf32>
    %75 = math.rsqrt %74 : vector<128x1xf32>
    %76 = vector.broadcast %75 : vector<128x1xf32> to vector<128x32xf32>
    %77 = arith.mulf %72, %76 : vector<128x32xf32>
    %78 = vector.broadcast %58 : vector<1x32xf32> to vector<128x32xf32>
    %79 = arith.mulf %77, %78 : vector<128x32xf32>
    %80 = vector.broadcast %59 : vector<1x32xf32> to vector<128x32xf32>
    %81 = arith.addf %79, %80 : vector<128x32xf32>
    %c0_31 = arith.constant 0 : index
    %c0_32 = arith.constant 0 : index
    %82 = vector.load %arg10[%c0_31, %c0_32] : memref<128x32xf32, #tpu.memory_space<vmem>>, vector<128x32xf32>
    tpu.vector_store %arg10[%c0_31, %c0_32], %81 {strides = array<i32>} : memref<128x32xf32, #tpu.memory_space<vmem>>, vector<128x32xf32>,
    return
  }
  func.func @transform_0(%arg0: i32) -> (i32, i32) {
    %c0_i32 = arith.constant 0 : i32
    %c0_i32_0 = arith.constant 0 : i32
    return %arg0, %c0_i32 : i32, i32
  }
  func.func @transform_1(%arg0: i32) -> (i32, i32) {
    %c0_i32 = arith.constant 0 : i32
    %c0_i32_0 = arith.constant 0 : i32
    %c0_i32_1 = arith.constant 0 : i32
    return %c0_i32, %c0_i32_0 : i32, i32
  }
  func.func @transform_2(%arg0: i32) -> (i32, i32) {
    %c0_i32 = arith.constant 0 : i32
    %c0_i32_0 = arith.constant 0 : i32
    %c0_i32_1 = arith.constant 0 : i32
    return %c0_i32, %c0_i32_0 : i32, i32
  }
  func.func @transform_3(%arg0: i32) -> (i32, i32) {
    %c0_i32 = arith.constant 0 : i32
    %c0_i32_0 = arith.constant 0 : i32
    %c0_i32_1 = arith.constant 0 : i32
    return %c0_i32, %c0_i32_0 : i32, i32
  }
  func.func @transform_4(%arg0: i32) -> (i32, i32) {
    %c0_i32 = arith.constant 0 : i32
    %c0_i32_0 = arith.constant 0 : i32
    %c0_i32_1 = arith.constant 0 : i32
    return %c0_i32, %c0_i32_0 : i32, i32
  }
  func.func @transform_5(%arg0: i32) -> (i32, i32) {
    %c0_i32 = arith.constant 0 : i32
    %c0_i32_0 = arith.constant 0 : i32
    %c0_i32_1 = arith.constant 0 : i32
    return %c0_i32, %c0_i32_0 : i32, i32
  }
  func.func @transform_6(%arg0: i32) -> (i32, i32) {
    %c0_i32 = arith.constant 0 : i32
    %c0_i32_0 = arith.constant 0 : i32
    %c0_i32_1 = arith.constant 0 : i32
    return %c0_i32, %c0_i32_0 : i32, i32
  }
  func.func @transform_7(%arg0: i32) -> (i32, i32) {
    %c0_i32 = arith.constant 0 : i32
    %c0_i32_0 = arith.constant 0 : i32
    %c0_i32_1 = arith.constant 0 : i32
    return %c0_i32, %c0_i32_0 : i32, i32
  }
  func.func @transform_8(%arg0: i32) -> (i32, i32) {
    %c0_i32 = arith.constant 0 : i32
    %c0_i32_0 = arith.constant 0 : i32
    %c0_i32_1 = arith.constant 0 : i32
    return %c0_i32, %c0_i32_0 : i32, i32
  }
  func.func @transform_9(%arg0: i32) -> (i32, i32) {
    %c0_i32 = arith.constant 0 : i32
    %c0_i32_0 = arith.constant 0 : i32
    return %arg0, %c0_i32 : i32, i32
  }
}

module attributes {stable_mosaic.version = 11 : i64} {
  func.func @_phi_msg_kernel(%arg0: i32, %arg1: memref<128x32xf32, #tpu.memory_space<vmem>>, %arg2: memref<128x32xf32, #tpu.memory_space<vmem>>, %arg3: memref<128x32xf32, #tpu.memory_space<vmem>>, %arg4: memref<32x32xf32, #tpu.memory_space<vmem>>, %arg5: memref<1x32xf32, #tpu.memory_space<vmem>>, %arg6: memref<32x32xf32, #tpu.memory_space<vmem>>, %arg7: memref<1x32xf32, #tpu.memory_space<vmem>>, %arg8: memref<128x32xf32, #tpu.memory_space<vmem>>) attributes {dimension_semantics = [#tpu.dimension_semantics<parallel>], iteration_bounds = array<i64: 2>, scalar_prefetch = 0 : i64, scratch_operands = 0 : i64, tpu.core_type = #tpu.core_type<tc>, window_params = [{transform_indices = @transform_0, window_bounds = array<i64: 128, 32>}, {transform_indices = @transform_1, window_bounds = array<i64: 128, 32>}, {transform_indices = @transform_2, window_bounds = array<i64: 128, 32>}, {pipeline_mode = #tpu.pipeline_mode<synchronous>, transform_indices = @transform_3, window_bounds = array<i64: 32, 32>}, {pipeline_mode = #tpu.pipeline_mode<synchronous>, transform_indices = @transform_4, window_bounds = array<i64: 1, 32>}, {pipeline_mode = #tpu.pipeline_mode<synchronous>, transform_indices = @transform_5, window_bounds = array<i64: 32, 32>}, {pipeline_mode = #tpu.pipeline_mode<synchronous>, transform_indices = @transform_6, window_bounds = array<i64: 1, 32>}, {transform_indices = @transform_7, window_bounds = array<i64: 128, 32>}]} {
    %c0 = arith.constant 0 : index
    %c0_0 = arith.constant 0 : index
    %0 = vector.load %arg3[%c0, %c0_0] : memref<128x32xf32, #tpu.memory_space<vmem>>, vector<128x32xf32>
    %c0_1 = arith.constant 0 : index
    %c0_2 = arith.constant 0 : index
    %1 = vector.load %arg1[%c0_1, %c0_2] : memref<128x32xf32, #tpu.memory_space<vmem>>, vector<128x32xf32>
    %c0_3 = arith.constant 0 : index
    %c0_4 = arith.constant 0 : index
    %2 = vector.load %arg2[%c0_3, %c0_4] : memref<128x32xf32, #tpu.memory_space<vmem>>, vector<128x32xf32>
    %3 = arith.addf %1, %2 : vector<128x32xf32>
    %4 = arith.addf %3, %0 : vector<128x32xf32>
    %5 = arith.negf %4 : vector<128x32xf32>
    %6 = math.exp %5 : vector<128x32xf32>
    %cst = arith.constant 1.000000e+00 : f32
    %7 = vector.broadcast %cst : f32 to vector<128x32xf32>
    %8 = arith.addf %7, %6 : vector<128x32xf32>
    %9 = arith.divf %7, %8 : vector<128x32xf32>
    %10 = arith.mulf %4, %9 : vector<128x32xf32>
    %c0_5 = arith.constant 0 : index
    %c0_6 = arith.constant 0 : index
    %11 = vector.load %arg4[%c0_5, %c0_6] : memref<32x32xf32, #tpu.memory_space<vmem>>, vector<32x32xf32>
    %cst_7 = arith.constant dense<0.000000e+00> : vector<128x32xf32>
    %12 = tpu.matmul %10, %11, %cst_7 {dimension_numbers = #tpu.dot_dimension_numbers<[1], [0], [0], [1], [0, 0, 1, 1], [], []>} : vector<128x32xf32>, vector<32x32xf32>, vector<128x32xf32> -> vector<128x32xf32>
    %c0_8 = arith.constant 0 : index
    %c0_9 = arith.constant 0 : index
    %13 = vector.load %arg5[%c0_8, %c0_9] : memref<1x32xf32, #tpu.memory_space<vmem>>, vector<1x32xf32>
    %14 = vector.broadcast %13 : vector<1x32xf32> to vector<128x32xf32>
    %15 = arith.addf %12, %14 : vector<128x32xf32>
    %16 = arith.negf %15 : vector<128x32xf32>
    %17 = math.exp %16 : vector<128x32xf32>
    %cst_10 = arith.constant 1.000000e+00 : f32
    %18 = vector.broadcast %cst_10 : f32 to vector<128x32xf32>
    %19 = arith.addf %18, %17 : vector<128x32xf32>
    %20 = arith.divf %18, %19 : vector<128x32xf32>
    %21 = arith.mulf %15, %20 : vector<128x32xf32>
    %c0_11 = arith.constant 0 : index
    %c0_12 = arith.constant 0 : index
    %22 = vector.load %arg6[%c0_11, %c0_12] : memref<32x32xf32, #tpu.memory_space<vmem>>, vector<32x32xf32>
    %cst_13 = arith.constant dense<0.000000e+00> : vector<128x32xf32>
    %23 = tpu.matmul %21, %22, %cst_13 {dimension_numbers = #tpu.dot_dimension_numbers<[1], [0], [0], [1], [0, 0, 1, 1], [], []>} : vector<128x32xf32>, vector<32x32xf32>, vector<128x32xf32> -> vector<128x32xf32>
    %c0_14 = arith.constant 0 : index
    %c0_15 = arith.constant 0 : index
    %24 = vector.load %arg7[%c0_14, %c0_15] : memref<1x32xf32, #tpu.memory_space<vmem>>, vector<1x32xf32>
    %25 = vector.broadcast %24 : vector<1x32xf32> to vector<128x32xf32>
    %26 = arith.addf %23, %25 : vector<128x32xf32>
    %27 = arith.mulf %0, %26 : vector<128x32xf32>
    %c0_16 = arith.constant 0 : index
    %c0_17 = arith.constant 0 : index
    %28 = vector.load %arg8[%c0_16, %c0_17] : memref<128x32xf32, #tpu.memory_space<vmem>>, vector<128x32xf32>
    tpu.vector_store %arg8[%c0_16, %c0_17], %27 {strides = array<i32>} : memref<128x32xf32, #tpu.memory_space<vmem>>, vector<128x32xf32>,
    return
  }
  func.func @transform_0(%arg0: i32) -> (i32, i32) {
    %c0_i32 = arith.constant 0 : i32
    %c0_i32_0 = arith.constant 0 : i32
    return %arg0, %c0_i32 : i32, i32
  }
  func.func @transform_1(%arg0: i32) -> (i32, i32) {
    %c0_i32 = arith.constant 0 : i32
    %c0_i32_0 = arith.constant 0 : i32
    return %arg0, %c0_i32 : i32, i32
  }
  func.func @transform_2(%arg0: i32) -> (i32, i32) {
    %c0_i32 = arith.constant 0 : i32
    %c0_i32_0 = arith.constant 0 : i32
    return %arg0, %c0_i32 : i32, i32
  }
  func.func @transform_3(%arg0: i32) -> (i32, i32) {
    %c0_i32 = arith.constant 0 : i32
    %c0_i32_0 = arith.constant 0 : i32
    %c0_i32_1 = arith.constant 0 : i32
    return %c0_i32, %c0_i32_0 : i32, i32
  }
  func.func @transform_4(%arg0: i32) -> (i32, i32) {
    %c0_i32 = arith.constant 0 : i32
    %c0_i32_0 = arith.constant 0 : i32
    %c0_i32_1 = arith.constant 0 : i32
    return %c0_i32, %c0_i32_0 : i32, i32
  }
  func.func @transform_5(%arg0: i32) -> (i32, i32) {
    %c0_i32 = arith.constant 0 : i32
    %c0_i32_0 = arith.constant 0 : i32
    %c0_i32_1 = arith.constant 0 : i32
    return %c0_i32, %c0_i32_0 : i32, i32
  }
  func.func @transform_6(%arg0: i32) -> (i32, i32) {
    %c0_i32 = arith.constant 0 : i32
    %c0_i32_0 = arith.constant 0 : i32
    %c0_i32_1 = arith.constant 0 : i32
    return %c0_i32, %c0_i32_0 : i32, i32
  }
  func.func @transform_7(%arg0: i32) -> (i32, i32) {
    %c0_i32 = arith.constant 0 : i32
    %c0_i32_0 = arith.constant 0 : i32
    return %arg0, %c0_i32 : i32, i32
  }
}

module attributes {stable_mosaic.version = 11 : i64} {
  func.func @_theta_kernel(%arg0: i32, %arg1: memref<32x32xf32, #tpu.memory_space<vmem>>, %arg2: memref<32x32xf32, #tpu.memory_space<vmem>>, %arg3: memref<32x32xf32, #tpu.memory_space<vmem>>, %arg4: memref<32x32xf32, #tpu.memory_space<vmem>>, %arg5: memref<1x32xf32, #tpu.memory_space<vmem>>, %arg6: memref<32x32xf32, #tpu.memory_space<vmem>>) attributes {dimension_semantics = [#tpu.dimension_semantics<parallel>], iteration_bounds = array<i64: 2>, scalar_prefetch = 0 : i64, scratch_operands = 0 : i64, tpu.core_type = #tpu.core_type<tc>, window_params = [{transform_indices = @transform_0, window_bounds = array<i64: 32, 32>}, {transform_indices = @transform_1, window_bounds = array<i64: 32, 32>}, {transform_indices = @transform_2, window_bounds = array<i64: 32, 32>}, {pipeline_mode = #tpu.pipeline_mode<synchronous>, transform_indices = @transform_3, window_bounds = array<i64: 32, 32>}, {pipeline_mode = #tpu.pipeline_mode<synchronous>, transform_indices = @transform_4, window_bounds = array<i64: 1, 32>}, {transform_indices = @transform_5, window_bounds = array<i64: 32, 32>}]} {
    %c0 = arith.constant 0 : index
    %c0_0 = arith.constant 0 : index
    %0 = vector.load %arg2[%c0, %c0_0] : memref<32x32xf32, #tpu.memory_space<vmem>>, vector<32x32xf32>
    %c0_1 = arith.constant 0 : index
    %c0_2 = arith.constant 0 : index
    %1 = vector.load %arg3[%c0_1, %c0_2] : memref<32x32xf32, #tpu.memory_space<vmem>>, vector<32x32xf32>
    %2 = arith.addf %0, %1 : vector<32x32xf32>
    %3 = arith.negf %2 : vector<32x32xf32>
    %4 = math.exp %3 : vector<32x32xf32>
    %cst = arith.constant 1.000000e+00 : f32
    %5 = vector.broadcast %cst : f32 to vector<32x32xf32>
    %6 = arith.addf %5, %4 : vector<32x32xf32>
    %7 = arith.divf %5, %6 : vector<32x32xf32>
    %8 = arith.mulf %2, %7 : vector<32x32xf32>
    %c0_3 = arith.constant 0 : index
    %c0_4 = arith.constant 0 : index
    %9 = vector.load %arg4[%c0_3, %c0_4] : memref<32x32xf32, #tpu.memory_space<vmem>>, vector<32x32xf32>
    %cst_5 = arith.constant dense<0.000000e+00> : vector<32x32xf32>
    %10 = tpu.matmul %8, %9, %cst_5 {dimension_numbers = #tpu.dot_dimension_numbers<[1], [0], [0], [1], [0, 0, 1, 1], [], []>} : vector<32x32xf32>, vector<32x32xf32>, vector<32x32xf32> -> vector<32x32xf32>
    %c0_6 = arith.constant 0 : index
    %c0_7 = arith.constant 0 : index
    %11 = vector.load %arg5[%c0_6, %c0_7] : memref<1x32xf32, #tpu.memory_space<vmem>>, vector<1x32xf32>
    %12 = vector.broadcast %11 : vector<1x32xf32> to vector<32x32xf32>
    %13 = arith.addf %10, %12 : vector<32x32xf32>
    %c0_8 = arith.constant 0 : index
    %c0_9 = arith.constant 0 : index
    %14 = vector.load %arg1[%c0_8, %c0_9] : memref<32x32xf32, #tpu.memory_space<vmem>>, vector<32x32xf32>
    %15 = arith.addf %13, %14 : vector<32x32xf32>
    %c0_10 = arith.constant 0 : index
    %c0_11 = arith.constant 0 : index
    %16 = vector.load %arg6[%c0_10, %c0_11] : memref<32x32xf32, #tpu.memory_space<vmem>>, vector<32x32xf32>
    tpu.vector_store %arg6[%c0_10, %c0_11], %15 {strides = array<i32>} : memref<32x32xf32, #tpu.memory_space<vmem>>, vector<32x32xf32>,
    return
  }
  func.func @transform_0(%arg0: i32) -> (i32, i32) {
    %c0_i32 = arith.constant 0 : i32
    %c0_i32_0 = arith.constant 0 : i32
    return %arg0, %c0_i32 : i32, i32
  }
  func.func @transform_1(%arg0: i32) -> (i32, i32) {
    %c0_i32 = arith.constant 0 : i32
    %c0_i32_0 = arith.constant 0 : i32
    return %arg0, %c0_i32 : i32, i32
  }
  func.func @transform_2(%arg0: i32) -> (i32, i32) {
    %c0_i32 = arith.constant 0 : i32
    %c0_i32_0 = arith.constant 0 : i32
    return %arg0, %c0_i32 : i32, i32
  }
  func.func @transform_3(%arg0: i32) -> (i32, i32) {
    %c0_i32 = arith.constant 0 : i32
    %c0_i32_0 = arith.constant 0 : i32
    %c0_i32_1 = arith.constant 0 : i32
    return %c0_i32, %c0_i32_0 : i32, i32
  }
  func.func @transform_4(%arg0: i32) -> (i32, i32) {
    %c0_i32 = arith.constant 0 : i32
    %c0_i32_0 = arith.constant 0 : i32
    %c0_i32_1 = arith.constant 0 : i32
    return %c0_i32, %c0_i32_0 : i32, i32
  }
  func.func @transform_5(%arg0: i32) -> (i32, i32) {
    %c0_i32 = arith.constant 0 : i32
    %c0_i32_0 = arith.constant 0 : i32
    return %arg0, %c0_i32 : i32, i32
  }
}

module attributes {stable_mosaic.version = 11 : i64} {
  func.func @_force_mlp_kernel(%arg0: i32, %arg1: memref<32x32xf32, #tpu.memory_space<vmem>>, %arg2: memref<32x32xf32, #tpu.memory_space<vmem>>, %arg3: memref<1x32xf32, #tpu.memory_space<vmem>>, %arg4: memref<32x128xf32, #tpu.memory_space<vmem>>, %arg5: memref<1x128xf32, #tpu.memory_space<vmem>>, %arg6: memref<32x128xf32, #tpu.memory_space<vmem>>) attributes {dimension_semantics = [#tpu.dimension_semantics<parallel>], iteration_bounds = array<i64: 2>, scalar_prefetch = 0 : i64, scratch_operands = 0 : i64, tpu.core_type = #tpu.core_type<tc>, window_params = [{transform_indices = @transform_0, window_bounds = array<i64: 32, 32>}, {pipeline_mode = #tpu.pipeline_mode<synchronous>, transform_indices = @transform_1, window_bounds = array<i64: 32, 32>}, {pipeline_mode = #tpu.pipeline_mode<synchronous>, transform_indices = @transform_2, window_bounds = array<i64: 1, 32>}, {pipeline_mode = #tpu.pipeline_mode<synchronous>, transform_indices = @transform_3, window_bounds = array<i64: 32, 128>}, {pipeline_mode = #tpu.pipeline_mode<synchronous>, transform_indices = @transform_4, window_bounds = array<i64: 1, 128>}, {transform_indices = @transform_5, window_bounds = array<i64: 32, 128>}]} {
    %c0 = arith.constant 0 : index
    %c0_0 = arith.constant 0 : index
    %0 = vector.load %arg1[%c0, %c0_0] : memref<32x32xf32, #tpu.memory_space<vmem>>, vector<32x32xf32>
    %c0_1 = arith.constant 0 : index
    %c0_2 = arith.constant 0 : index
    %1 = vector.load %arg2[%c0_1, %c0_2] : memref<32x32xf32, #tpu.memory_space<vmem>>, vector<32x32xf32>
    %cst = arith.constant dense<0.000000e+00> : vector<32x32xf32>
    %2 = tpu.matmul %0, %1, %cst {dimension_numbers = #tpu.dot_dimension_numbers<[1], [0], [0], [1], [0, 0, 1, 1], [], []>} : vector<32x32xf32>, vector<32x32xf32>, vector<32x32xf32> -> vector<32x32xf32>
    %c0_3 = arith.constant 0 : index
    %c0_4 = arith.constant 0 : index
    %3 = vector.load %arg3[%c0_3, %c0_4] : memref<1x32xf32, #tpu.memory_space<vmem>>, vector<1x32xf32>
    %4 = vector.broadcast %3 : vector<1x32xf32> to vector<32x32xf32>
    %5 = arith.addf %2, %4 : vector<32x32xf32>
    %cst_5 = arith.constant 5.000000e-01 : f32
    %6 = vector.broadcast %cst_5 : f32 to vector<32x32xf32>
    %7 = arith.mulf %6, %5 : vector<32x32xf32>
    %cst_6 = arith.constant 4.471500e-02 : f32
    %8 = vector.broadcast %cst_6 : f32 to vector<32x32xf32>
    %9 = arith.mulf %8, %5 : vector<32x32xf32>
    %10 = arith.mulf %9, %5 : vector<32x32xf32>
    %11 = arith.mulf %10, %5 : vector<32x32xf32>
    %12 = arith.addf %5, %11 : vector<32x32xf32>
    %cst_7 = arith.constant 0.797884583 : f32
    %13 = vector.broadcast %cst_7 : f32 to vector<32x32xf32>
    %14 = arith.mulf %13, %12 : vector<32x32xf32>
    %15 = math.tanh %14 : vector<32x32xf32>
    %cst_8 = arith.constant 1.000000e+00 : f32
    %16 = vector.broadcast %cst_8 : f32 to vector<32x32xf32>
    %17 = arith.addf %16, %15 : vector<32x32xf32>
    %18 = arith.mulf %7, %17 : vector<32x32xf32>
    %c0_9 = arith.constant 0 : index
    %c0_10 = arith.constant 0 : index
    %19 = vector.load %arg4[%c0_9, %c0_10] : memref<32x128xf32, #tpu.memory_space<vmem>>, vector<32x128xf32>
    %cst_11 = arith.constant dense<0.000000e+00> : vector<32x128xf32>
    %20 = tpu.matmul %18, %19, %cst_11 {dimension_numbers = #tpu.dot_dimension_numbers<[1], [0], [0], [1], [0, 0, 1, 1], [], []>} : vector<32x32xf32>, vector<32x128xf32>, vector<32x128xf32> -> vector<32x128xf32>
    %c0_12 = arith.constant 0 : index
    %c0_13 = arith.constant 0 : index
    %21 = vector.load %arg5[%c0_12, %c0_13] : memref<1x128xf32, #tpu.memory_space<vmem>>, vector<1x128xf32>
    %22 = vector.broadcast %21 : vector<1x128xf32> to vector<32x128xf32>
    %23 = arith.addf %20, %22 : vector<32x128xf32>
    %c0_14 = arith.constant 0 : index
    %c0_15 = arith.constant 0 : index
    %24 = vector.load %arg6[%c0_14, %c0_15] : memref<32x128xf32, #tpu.memory_space<vmem>>, vector<32x128xf32>
    tpu.vector_store %arg6[%c0_14, %c0_15], %23 {strides = array<i32>} : memref<32x128xf32, #tpu.memory_space<vmem>>, vector<32x128xf32>,
    return
  }
  func.func @transform_0(%arg0: i32) -> (i32, i32) {
    %c0_i32 = arith.constant 0 : i32
    %c0_i32_0 = arith.constant 0 : i32
    return %arg0, %c0_i32 : i32, i32
  }
  func.func @transform_1(%arg0: i32) -> (i32, i32) {
    %c0_i32 = arith.constant 0 : i32
    %c0_i32_0 = arith.constant 0 : i32
    %c0_i32_1 = arith.constant 0 : i32
    return %c0_i32, %c0_i32_0 : i32, i32
  }
  func.func @transform_2(%arg0: i32) -> (i32, i32) {
    %c0_i32 = arith.constant 0 : i32
    %c0_i32_0 = arith.constant 0 : i32
    %c0_i32_1 = arith.constant 0 : i32
    return %c0_i32, %c0_i32_0 : i32, i32
  }
  func.func @transform_3(%arg0: i32) -> (i32, i32) {
    %c0_i32 = arith.constant 0 : i32
    %c0_i32_0 = arith.constant 0 : i32
    %c0_i32_1 = arith.constant 0 : i32
    return %c0_i32, %c0_i32_0 : i32, i32
  }
  func.func @transform_4(%arg0: i32) -> (i32, i32) {
    %c0_i32 = arith.constant 0 : i32
    %c0_i32_0 = arith.constant 0 : i32
    %c0_i32_1 = arith.constant 0 : i32
    return %c0_i32, %c0_i32_0 : i32, i32
  }
  func.func @transform_5(%arg0: i32) -> (i32, i32) {
    %c0_i32 = arith.constant 0 : i32
    %c0_i32_0 = arith.constant 0 : i32
    return %arg0, %c0_i32 : i32, i32
  }
}

</mosaic_0001>

<llo_original>
// kernel: sub.1
$region0: #{sub.1}
  #allocation0 [shape = 's32[1]{0}', space=sflag, size = 0x4, scoped, tag = 'scoped memory for sub.1']
  %s0 = inlined_call_operand.vmem [shape: f32[256,3], index: 0, kind: input, shape index: {}]
  %s1 = inlined_call_operand.vmem [shape: f32[256,3], index: 1, kind: input, shape index: {}]
  %s2 = inlined_call_operand.vmem [shape: f32[256,3], index: 2, kind: output, shape index: {}]
  %v3 = vld [vmem:[%s0] sm:$0xff]
  %v4 = vld [vmem:[%s1] sm:$0xff]
  %5 = xla_tuple %v3, %v4
  %6 = xla_tuple %5
  %v7 = vsub.f32 %v3, %v4
  %8 = xla_tuple %v7
  %9 = vst [vmem:[%s2] sm:$0xff] %v7
  %s10 = scalar_lea.vmem %s0, 8
  %v11 = vld [vmem:[%s10] sm:$0xff]
  %s12 = scalar_lea.vmem %s1, 8
  %v13 = vld [vmem:[%s12] sm:$0xff]
  %14 = xla_tuple %v11, %v13
  %15 = xla_tuple %14
  %v16 = vsub.f32 %v11, %v13
  %17 = xla_tuple %v16
  %s18 = scalar_lea.vmem %s2, 8
  %19 = vst [vmem:[%s18] sm:$0xff] %v16
  %s20 = scalar_lea.vmem %s0, 16
  %v21 = vld [vmem:[%s20] sm:$0xff]
  %s22 = scalar_lea.vmem %s1, 16
  %v23 = vld [vmem:[%s22] sm:$0xff]
  %24 = xla_tuple %v21, %v23
  %25 = xla_tuple %24
  %v26 = vsub.f32 %v21, %v23
  %27 = xla_tuple %v26
  %s28 = scalar_lea.vmem %s2, 16
  %29 = vst [vmem:[%s28] sm:$0xff] %v26
  %s30 = scalar_lea.vmem %s0, 24
  %v31 = vld [vmem:[%s30] sm:$0xff]
  %s32 = scalar_lea.vmem %s1, 24
  %v33 = vld [vmem:[%s32] sm:$0xff]
  %34 = xla_tuple %v31, %v33
  %35 = xla_tuple %34
  %v36 = vsub.f32 %v31, %v33
  %37 = xla_tuple %v36
  %s38 = scalar_lea.vmem %s2, 24
  %39 = vst [vmem:[%s38] sm:$0xff] %v36
  %s40 = scalar_lea.vmem %s0, 32
  %v41 = vld [vmem:[%s40] sm:$0xff]
  %s42 = scalar_lea.vmem %s1, 32
  %v43 = vld [vmem:[%s42] sm:$0xff]
  %44 = xla_tuple %v41, %v43
  %45 = xla_tuple %44
  %v46 = vsub.f32 %v41, %v43
  %47 = xla_tuple %v46
  %s48 = scalar_lea.vmem %s2, 32
  %49 = vst [vmem:[%s48] sm:$0xff] %v46
  %s50 = scalar_lea.vmem %s0, 40
  %v51 = vld [vmem:[%s50] sm:$0xff]
  %s52 = scalar_lea.vmem %s1, 40
  %v53 = vld [vmem:[%s52] sm:$0xff]
  %54 = xla_tuple %v51, %v53
  %55 = xla_tuple %54
  %v56 = vsub.f32 %v51, %v53
  %57 = xla_tuple %v56
  %s58 = scalar_lea.vmem %s2, 40
  %59 = vst [vmem:[%s58] sm:$0xff] %v56
  %s60 = scalar_lea.vmem %s0, 48
  %v61 = vld [vmem:[%s60] sm:$0xff]
  %s62 = scalar_lea.vmem %s1, 48
  %v63 = vld [vmem:[%s62] sm:$0xff]
  %64 = xla_tuple %v61, %v63
  %65 = xla_tuple %64
  %v66 = vsub.f32 %v61, %v63
  %67 = xla_tuple %v66
  %s68 = scalar_lea.vmem %s2, 48
  %69 = vst [vmem:[%s68] sm:$0xff] %v66
  %s70 = scalar_lea.vmem %s0, 56
  %v71 = vld [vmem:[%s70] sm:$0xff]
  %s72 = scalar_lea.vmem %s1, 56
  %v73 = vld [vmem:[%s72] sm:$0xff]
  %74 = xla_tuple %v71, %v73
  %75 = xla_tuple %74
  %v76 = vsub.f32 %v71, %v73
  %77 = xla_tuple %v76
  %s78 = scalar_lea.vmem %s2, 56
  %79 = vst [vmem:[%s78] sm:$0xff] %v76
  %s80 = scalar_lea.vmem %s0, 64
  %v81 = vld [vmem:[%s80] sm:$0xff]
  %s82 = scalar_lea.vmem %s1, 64
  %v83 = vld [vmem:[%s82] sm:$0xff]
  %84 = xla_tuple %v81, %v83
  %85 = xla_tuple %84
  %v86 = vsub.f32 %v81, %v83
  %87 = xla_tuple %v86
  %s88 = scalar_lea.vmem %s2, 64
  %89 = vst [vmem:[%s88] sm:$0xff] %v86
  %s90 = scalar_lea.vmem %s0, 72
  %v91 = vld [vmem:[%s90] sm:$0xff]
  %s92 = scalar_lea.vmem %s1, 72
  %v93 = vld [vmem:[%s92] sm:$0xff]
  %94 = xla_tuple %v91, %v93
  %95 = xla_tuple %94
  %v96 = vsub.f32 %v91, %v93
  %97 = xla_tuple %v96
  %s98 = scalar_lea.vmem %s2, 72
  %99 = vst [vmem:[%s98] sm:$0xff] %v96
  %s100 = scalar_lea.vmem %s0, 80
  %v101 = vld [vmem:[%s100] sm:$0xff]
  %s102 = scalar_lea.vmem %s1, 80
  %v103 = vld [vmem:[%s102] sm:$0xff]
  %104 = xla_tuple %v101, %v103
  %105 = xla_tuple %104
  %v106 = vsub.f32 %v101, %v103
  %107 = xla_tuple %v106
  %s108 = scalar_lea.vmem %s2, 80
  %109 = vst [vmem:[%s108] sm:$0xff] %v106
  %s110 = scalar_lea.vmem %s0, 88
  %v111 = vld [vmem:[%s110] sm:$0xff]
  %s112 = scalar_lea.vmem %s1, 88
  %v113 = vld [vmem:[%s112] sm:$0xff]
  %114 = xla_tuple %v111, %v113
  %115 = xla_tuple %114
  %v116 = vsub.f32 %v111, %v113
  %117 = xla_tuple %v116
  %s118 = scalar_lea.vmem %s2, 88
  %119 = vst [vmem:[%s118] sm:$0xff] %v116
  %s120 = scalar_lea.vmem %s0, 96
  %v121 = vld [vmem:[%s120] sm:$0xff]
  %s122 = scalar_lea.vmem %s1, 96
  %v123 = vld [vmem:[%s122] sm:$0xff]
  %124 = xla_tuple %v121, %v123
  %125 = xla_tuple %124
  %v126 = vsub.f32 %v121, %v123
  %127 = xla_tuple %v126
  %s128 = scalar_lea.vmem %s2, 96
  %129 = vst [vmem:[%s128] sm:$0xff] %v126
  %s130 = scalar_lea.vmem %s0, 104
  %v131 = vld [vmem:[%s130] sm:$0xff]
  %s132 = scalar_lea.vmem %s1, 104
  %v133 = vld [vmem:[%s132] sm:$0xff]
  %134 = xla_tuple %v131, %v133
  %135 = xla_tuple %134
  %v136 = vsub.f32 %v131, %v133
  %137 = xla_tuple %v136
  %s138 = scalar_lea.vmem %s2, 104
  %139 = vst [vmem:[%s138] sm:$0xff] %v136
  %s140 = scalar_lea.vmem %s0, 112
  %v141 = vld [vmem:[%s140] sm:$0xff]
  %s142 = scalar_lea.vmem %s1, 112
  %v143 = vld [vmem:[%s142] sm:$0xff]
  %144 = xla_tuple %v141, %v143
  %145 = xla_tuple %144
  %v146 = vsub.f32 %v141, %v143
  %147 = xla_tuple %v146
  %s148 = scalar_lea.vmem %s2, 112
  %149 = vst [vmem:[%s148] sm:$0xff] %v146
  %s150 = scalar_lea.vmem %s0, 120
  %v151 = vld [vmem:[%s150] sm:$0xff]
  %s152 = scalar_lea.vmem %s1, 120
  %v153 = vld [vmem:[%s152] sm:$0xff]
  %154 = xla_tuple %v151, %v153
  %155 = xla_tuple %154
  %v156 = vsub.f32 %v151, %v153
  %157 = xla_tuple %v156
  %s158 = scalar_lea.vmem %s2, 120
  %159 = vst [vmem:[%s158] sm:$0xff] %v156
  %s160 = scalar_lea.vmem %s0, 128
  %v161 = vld [vmem:[%s160] sm:$0xff]
  %s162 = scalar_lea.vmem %s1, 128
  %v163 = vld [vmem:[%s162] sm:$0xff]
  %164 = xla_tuple %v161, %v163
  %165 = xla_tuple %164
  %v166 = vsub.f32 %v161, %v163
  %167 = xla_tuple %v166
  %s168 = scalar_lea.vmem %s2, 128
  %169 = vst [vmem:[%s168] sm:$0xff] %v166
  %s170 = scalar_lea.vmem %s0, 136
  %v171 = vld [vmem:[%s170] sm:$0xff]
  %s172 = scalar_lea.vmem %s1, 136
  %v173 = vld [vmem:[%s172] sm:$0xff]
  %174 = xla_tuple %v171, %v173
  %175 = xla_tuple %174
  %v176 = vsub.f32 %v171, %v173
  %177 = xla_tuple %v176
  %s178 = scalar_lea.vmem %s2, 136
  %179 = vst [vmem:[%s178] sm:$0xff] %v176
  %s180 = scalar_lea.vmem %s0, 144
  %v181 = vld [vmem:[%s180] sm:$0xff]
  %s182 = scalar_lea.vmem %s1, 144
  %v183 = vld [vmem:[%s182] sm:$0xff]
  %184 = xla_tuple %v181, %v183
  %185 = xla_tuple %184
  %v186 = vsub.f32 %v181, %v183
  %187 = xla_tuple %v186
  %s188 = scalar_lea.vmem %s2, 144
  %189 = vst [vmem:[%s188] sm:$0xff] %v186
  %s190 = scalar_lea.vmem %s0, 152
  %v191 = vld [vmem:[%s190] sm:$0xff]
  %s192 = scalar_lea.vmem %s1, 152
  %v193 = vld [vmem:[%s192] sm:$0xff]
  %194 = xla_tuple %v191, %v193
  %195 = xla_tuple %194
  %v196 = vsub.f32 %v191, %v193
  %197 = xla_tuple %v196
  %s198 = scalar_lea.vmem %s2, 152
  %199 = vst [vmem:[%s198] sm:$0xff] %v196
  %s200 = scalar_lea.vmem %s0, 160
  %v201 = vld [vmem:[%s200] sm:$0xff]
  %s202 = scalar_lea.vmem %s1, 160
  %v203 = vld [vmem:[%s202] sm:$0xff]
  %204 = xla_tuple %v201, %v203
  %205 = xla_tuple %204
  %v206 = vsub.f32 %v201, %v203
  %207 = xla_tuple %v206
  %s208 = scalar_lea.vmem %s2, 160
  %209 = vst [vmem:[%s208] sm:$0xff] %v206
  %s210 = scalar_lea.vmem %s0, 168
  %v211 = vld [vmem:[%s210] sm:$0xff]
  %s212 = scalar_lea.vmem %s1, 168
  %v213 = vld [vmem:[%s212] sm:$0xff]
  %214 = xla_tuple %v211, %v213
  %215 = xla_tuple %214
  %v216 = vsub.f32 %v211, %v213
  %217 = xla_tuple %v216
  %s218 = scalar_lea.vmem %s2, 168
  %219 = vst [vmem:[%s218] sm:$0xff] %v216
  %s220 = scalar_lea.vmem %s0, 176
  %v221 = vld [vmem:[%s220] sm:$0xff]
  %s222 = scalar_lea.vmem %s1, 176
  %v223 = vld [vmem:[%s222] sm:$0xff]
  %224 = xla_tuple %v221, %v223
  %225 = xla_tuple %224
  %v226 = vsub.f32 %v221, %v223
  %227 = xla_tuple %v226
  %s228 = scalar_lea.vmem %s2, 176
  %229 = vst [vmem:[%s228] sm:$0xff] %v226
  %s230 = scalar_lea.vmem %s0, 184
  %v231 = vld [vmem:[%s230] sm:$0xff]
  %s232 = scalar_lea.vmem %s1, 184
  %v233 = vld [vmem:[%s232] sm:$0xff]
  %234 = xla_tuple %v231, %v233
  %235 = xla_tuple %234
  %v236 = vsub.f32 %v231, %v233
  %237 = xla_tuple %v236
  %s238 = scalar_lea.vmem %s2, 184
  %239 = vst [vmem:[%s238] sm:$0xff] %v236
  %s240 = scalar_lea.vmem %s0, 192
  %v241 = vld [vmem:[%s240] sm:$0xff]
  %s242 = scalar_lea.vmem %s1, 192
  %v243 = vld [vmem:[%s242] sm:$0xff]
  %244 = xla_tuple %v241, %v243
  %245 = xla_tuple %244
  %v246 = vsub.f32 %v241, %v243
  %247 = xla_tuple %v246
  %s248 = scalar_lea.vmem %s2, 192
  %249 = vst [vmem:[%s248] sm:$0xff] %v246
  %s250 = scalar_lea.vmem %s0, 200
  %v251 = vld [vmem:[%s250] sm:$0xff]
  %s252 = scalar_lea.vmem %s1, 200
  %v253 = vld [vmem:[%s252] sm:$0xff]
  %254 = xla_tuple %v251, %v253
  %255 = xla_tuple %254
  %v256 = vsub.f32 %v251, %v253
  %257 = xla_tuple %v256
  %s258 = scalar_lea.vmem %s2, 200
  %259 = vst [vmem:[%s258] sm:$0xff] %v256
  %s260 = scalar_lea.vmem %s0, 208
  %v261 = vld [vmem:[%s260] sm:$0xff]
  %s262 = scalar_lea.vmem %s1, 208
  %v263 = vld [vmem:[%s262] sm:$0xff]
  %264 = xla_tuple %v261, %v263
  %265 = xla_tuple %264
  %v266 = vsub.f32 %v261, %v263
  %267 = xla_tuple %v266
  %s268 = scalar_lea.vmem %s2, 208
  %269 = vst [vmem:[%s268] sm:$0xff] %v266
  %s270 = scalar_lea.vmem %s0, 216
  %v271 = vld [vmem:[%s270] sm:$0xff]
  %s272 = scalar_lea.vmem %s1, 216
  %v273 = vld [vmem:[%s272] sm:$0xff]
  %274 = xla_tuple %v271, %v273
  %275 = xla_tuple %274
  %v276 = vsub.f32 %v271, %v273
  %277 = xla_tuple %v276
  %s278 = scalar_lea.vmem %s2, 216
  %279 = vst [vmem:[%s278] sm:$0xff] %v276
  %s280 = scalar_lea.vmem %s0, 224
  %v281 = vld [vmem:[%s280] sm:$0xff]
  %s282 = scalar_lea.vmem %s1, 224
  %v283 = vld [vmem:[%s282] sm:$0xff]
  %284 = xla_tuple %v281, %v283
  %285 = xla_tuple %284
  %v286 = vsub.f32 %v281, %v283
  %287 = xla_tuple %v286
  %s288 = scalar_lea.vmem %s2, 224
  %289 = vst [vmem:[%s288] sm:$0xff] %v286
  %s290 = scalar_lea.vmem %s0, 232
  %v291 = vld [vmem:[%s290] sm:$0xff]
  %s292 = scalar_lea.vmem %s1, 232
  %v293 = vld [vmem:[%s292] sm:$0xff]
  %294 = xla_tuple %v291, %v293
  %295 = xla_tuple %294
  %v296 = vsub.f32 %v291, %v293
  %297 = xla_tuple %v296
  %s298 = scalar_lea.vmem %s2, 232
  %299 = vst [vmem:[%s298] sm:$0xff] %v296
  %s300 = scalar_lea.vmem %s0, 240
  %v301 = vld [vmem:[%s300] sm:$0xff]
  %s302 = scalar_lea.vmem %s1, 240
  %v303 = vld [vmem:[%s302] sm:$0xff]
  %304 = xla_tuple %v301, %v303
  %305 = xla_tuple %304
  %v306 = vsub.f32 %v301, %v303
  %307 = xla_tuple %v306
  %s308 = scalar_lea.vmem %s2, 240
  %309 = vst [vmem:[%s308] sm:$0xff] %v306
  %s310 = scalar_lea.vmem %s0, 248
  %v311 = vld [vmem:[%s310] sm:$0xff]
  %s312 = scalar_lea.vmem %s1, 248
  %v313 = vld [vmem:[%s312] sm:$0xff]
  %314 = xla_tuple %v311, %v313
  %315 = xla_tuple %314
  %v316 = vsub.f32 %v311, %v313
  %317 = xla_tuple %v316
  %s318 = scalar_lea.vmem %s2, 248
  %319 = vst [vmem:[%s318] sm:$0xff] %v316

// kernel: gamdnet_forward.9
$region0: #{gamdnet_forward.9}
  #allocation0 [shape = 'u32[]', space=smem, size = 0x4, offset = 0x4, fixed_abs, tag = 'smem constant byte address 0x4 - core index']
  #allocation1 [shape = 'u32[72,128]{1,0:T(1,128)}', space=vmem, size = 0x9000, scoped, tag = 'internal scratch']
  %s0 = inlined_call_operand.vmem [shape: f32[64,32], index: 0, kind: input, shape index: {}]
  %s1 = inlined_call_operand.vmem [shape: f32[1,32], index: 1, kind: input, shape index: {}]
  %s2 = inlined_call_operand.vmem [shape: f32[1,32], index: 2, kind: input, shape index: {}]
  %s3 = inlined_call_operand.vmem [shape: f32[64,32], index: 3, kind: output, shape index: {}]
  %s4 = sld [smem:[#allocation0]]
  $region45: #{gamdnet_forward.9} parent=0
    _
  %s6 = ssub.s32 1, %s4
  %s7 = scalar_select 0, %s6, %s4
  loop: start=0, step=1, limit=4
  $region2: #{gamdnet_forward.9} parent=0 // loop_pre_header
    _
  $region3: #{gamdnet_forward.9} parent=0 // loop_header
    %s9 = sphi 0, %s13
    %p10 = scmp.ge.s32.totalorder %s9, 4
    %s19 = sphi 0, %s21
    %s22 = sphi 0, %s19
    %s23 = sphi 0, %s22
    %s39 = sphi 0, %s23
    %s43 = sphi 0, %s43
    %s45 = sphi 0, %s43
    %s46 = sphi 0, %s45
    %s60 = sphi 0, %s46
    %s64 = sphi 0, %s64
    %s66 = sphi 0, %s64
    %s67 = sphi 0, %s66
    %s81 = sphi 0, %s67
    %s87 = sphi 0, %s89
    %s90 = sphi 0, %s87
    %s91 = sphi 0, %s90
    %s107 = sphi 0, %s91
  $region4: #{gamdnet_forward.9} parent=0 // loop_header_branch
    %12 = sbr.rel (%p10) target = $region8
  $region5: #{gamdnet_forward.9} parent=0 // loop_body
    %s14 = ssub.s32 %s9, 1
    %s15 = ssub.s32 %s9, 2
    %s16 = sadd.s32 %s9, 1
    %s17 = ssub.s32 %s9, %s16
    %p18 = scmp.eq.s32.totalorder %s17, 0
    %s20 = sadd.s32 %s19, 1
    %s21 = scalar_select %p18, %s19, %s20
    %p24 = pneg %p18
    %p25 = scmp.eq.s32.totalorder %s9, 1
    %p26 = por %p24, %p25
    %p27 = scmp.ne.s32.totalorder %s19, %s22
    %p28 = scmp.eq.s32.totalorder %s9, 0
    %p29 = por %p27, %p28
    %p30 = scmp.ne.s32.totalorder %s19, %s22
    %p31 = scmp.eq.s32.totalorder %s14, 1
    %p32 = por %p30, %p31
    %p33 = scmp.ne.s32.totalorder %s22, %s23
    %p34 = scmp.eq.s32.totalorder %s14, 0
    %p35 = por %p33, %p34
    %p36 = scmp.ne.s32.totalorder %s22, %s23
    %p37 = scmp.eq.s32.totalorder %s15, 1
    %p38 = por %p36, %p37
    %p40 = scmp.ne.s32.totalorder %s23, %s39
    %p41 = scmp.eq.s32.totalorder %s15, 0
    %p42 = por %p40, %p41
    %s44 = sadd.s32 %s43, 1
    %p47 = scmp.eq.s32.totalorder %s9, 1
    %p48 = scmp.ne.s32.totalorder %s43, %s45
    %p49 = scmp.eq.s32.totalorder %s9, 0
    %p50 = por %p48, %p49
    %p51 = scmp.ne.s32.totalorder %s43, %s45
    %p52 = scmp.eq.s32.totalorder %s14, 1
    %p53 = por %p51, %p52
    %p54 = scmp.ne.s32.totalorder %s45, %s46
    %p55 = scmp.eq.s32.totalorder %s14, 0
    %p56 = por %p54, %p55
    %p57 = scmp.ne.s32.totalorder %s45, %s46
    %p58 = scmp.eq.s32.totalorder %s15, 1
    %p59 = por %p57, %p58
    %p61 = scmp.ne.s32.totalorder %s46, %s60
    %p62 = scmp.eq.s32.totalorder %s15, 0
    %p63 = por %p61, %p62
    %s65 = sadd.s32 %s64, 1
    %p68 = scmp.eq.s32.totalorder %s9, 1
    %p69 = scmp.ne.s32.totalorder %s64, %s66
    %p70 = scmp.eq.s32.totalorder %s9, 0
    %p71 = por %p69, %p70
    %p72 = scmp.ne.s32.totalorder %s64, %s66
    %p73 = scmp.eq.s32.totalorder %s14, 1
    %p74 = por %p72, %p73
    %p75 = scmp.ne.s32.totalorder %s66, %s67
    %p76 = scmp.eq.s32.totalorder %s14, 0
    %p77 = por %p75, %p76
    %p78 = scmp.ne.s32.totalorder %s66, %s67
    %p79 = scmp.eq.s32.totalorder %s15, 1
    %p80 = por %p78, %p79
    %p82 = scmp.ne.s32.totalorder %s67, %s81
    %p83 = scmp.eq.s32.totalorder %s15, 0
    %p84 = por %p82, %p83
    %s85 = ssub.s32 %s9, %s16
    %p86 = scmp.eq.s32.totalorder %s85, 0
    %s88 = sadd.s32 %s87, 1
    %s89 = scalar_select %p86, %s87, %s88
    %p92 = pneg %p86
    %p93 = scmp.eq.s32.totalorder %s9, 1
    %p94 = por %p92, %p93
    %p95 = scmp.ne.s32.totalorder %s87, %s90
    %p96 = scmp.eq.s32.totalorder %s9, 0
    %p97 = por %p95, %p96
    %p98 = scmp.ne.s32.totalorder %s87, %s90
    %p99 = scmp.eq.s32.totalorder %s14, 1
    %p100 = por %p98, %p99
    %p101 = scmp.ne.s32.totalorder %s90, %s91
    %p102 = scmp.eq.s32.totalorder %s14, 0
    %p103 = por %p101, %p102
    %p104 = scmp.ne.s32.totalorder %s90, %s91
    %p105 = scmp.eq.s32.totalorder %s15, 1
    %p106 = por %p104, %p105
    %p108 = scmp.ne.s32.totalorder %s91, %s107
    %p109 = scmp.eq.s32.totalorder %s15, 0
    %p110 = por %p108, %p109
    %p111 = scmp.le.s32.totalorder 1, %s9
    %p112 = scmp.lt.s32.totalorder %s9, 3
    %p113 = pnand %p111, %p112
    %p114 = pneg %p113
    // Predicated region
    $region9: #{gamdnet_forward.9} parent=5 // pred_check
      _
    $region10: #{gamdnet_forward.9} parent=5 // pred_check_branch
      %116 = sbr.rel (%p113) target = $region12
    $region11: #{gamdnet_forward.9} parent=5 // pred_region
      %s117 = ssub.s32 %s9, 1
      // Predicated region
      $region13: #{gamdnet_forward.9} parent=11 // pred_check
        %p118 = pneg %p56
      $region14: #{gamdnet_forward.9} parent=11 // pred_check_branch
        %120 = sbr.rel (%p118) target = $region16
      $region15: #{gamdnet_forward.9} parent=11 // pred_region
        _
      $region16: #{gamdnet_forward.9} parent=11 // pred_fallthru
        _
      // Predicated region
      $region17: #{gamdnet_forward.9} parent=11 // pred_check
        %p121 = pneg %p77
      $region18: #{gamdnet_forward.9} parent=11 // pred_check_branch
        %123 = sbr.rel (%p121) target = $region20
      $region19: #{gamdnet_forward.9} parent=11 // pred_region
        _
      $region20: #{gamdnet_forward.9} parent=11 // pred_fallthru
        _
    $region12: #{gamdnet_forward.9} parent=5 // pred_fallthru
      _
    %p124 = scmp.lt.s32.totalorder %s9, 2
    // Predicated region
    $region21: #{gamdnet_forward.9} parent=5 // pred_check
      %p125 = pneg %p124
    $region22: #{gamdnet_forward.9} parent=5 // pred_check_branch
      %127 = sbr.rel (%p125) target = $region24
    $region23: #{gamdnet_forward.9} parent=5 // pred_region
      // Predicated region
      $region25: #{gamdnet_forward.9} parent=23 // pred_check
        %p128 = pneg %p29
      $region26: #{gamdnet_forward.9} parent=23 // pred_check_branch
        %130 = sbr.rel (%p128) target = $region28
      $region27: #{gamdnet_forward.9} parent=23 // pred_region
        %s131 = smul.u32 4, %s9
        %p132 = scmp.lt.s32.totalorder %s131, 7
        %s133 = scalar_select %p132, %s131, 7
        %s134 = smul.addr %s133, 8
        %s135 = scalar_lea.vmem %s0, %s134
        %s136 = smul.u32 4, %s9
      $region28: #{gamdnet_forward.9} parent=23 // pred_fallthru
        _
    $region24: #{gamdnet_forward.9} parent=5 // pred_fallthru
      _
    %p137 = scmp.le.s32.totalorder 1, %s9
    %p138 = scmp.lt.s32.totalorder %s9, 3
    %p139 = pnand %p137, %p138
    %p140 = pneg %p139
    // Predicated region
    $region29: #{gamdnet_forward.9} parent=5 // pred_check
      _
    $region30: #{gamdnet_forward.9} parent=5 // pred_check_branch
      %142 = sbr.rel (%p139) target = $region32
    $region31: #{gamdnet_forward.9} parent=5 // pred_region
      %s143 = ssub.s32 %s9, 1
      %s144 = smul.u32 4, %s14
      %p145 = scmp.lt.s32.totalorder %s144, 7
      %s146 = scalar_select %p145, %s144, 7
      %s147 = smul.addr %s146, 8
      %s148 = scalar_lea.vmem %s0, %s147
      %p149 = pneg %p35
      %p150 = pneg %p32
      %p151 = pneg %p56
      %p152 = pneg %p53
      %p153 = pneg %p77
      %p154 = pneg %p74
      %p155 = pneg %p103
      %p156 = pneg %p100
      %s157 = smul.u32 4, %s14
      %p158 = scmp.lt.s32.totalorder %s157, 7
      %s159 = scalar_select %p158, %s157, 7
      %s160 = smul.addr %s159, 8
      %s161 = scalar_lea.vmem %s3, %s160
      %s162 = smul.u32 4, %s14
      %p163 = scmp.lt.s32.totalorder %s162, 7
      %s164 = scalar_select %p163, %s162, 7
      %s165 = smul.addr %s164, 8
      %s166 = scalar_lea.vmem %s0, %s165
      %s167 = smul.u32 4, %s14
      %s168 = smul.u32 4, %s14
      %p169 = scmp.lt.s32.totalorder %s168, 7
      %s170 = scalar_select %p169, %s168, 7
      %s171 = smul.addr %s170, 8
      %s172 = scalar_lea.vmem %s3, %s171
      %s173 = smul.u32 4, %s14
      %v174 = vld [vmem:[%s166] sm:$0xff]
      %v175 = vld [vmem:[%s166 + $0x8] sm:$0xff]
      %v176 = vld [vmem:[%s166 + $0x10] sm:$0xff]
      %v177 = vld [vmem:[%s166 + $0x18] sm:$0xff]
      %v178 = vld [vmem:[%s1] sm:$0x1]
      %v179 = vld [vmem:[%s2] sm:$0x1]
      %vm180 = vcmask 261120
      %v181 = vsel %vm180, %v174, 0.0
      %182 = vadd.xlane.f32.xlu0 %v181
      %v183 = vpop.xlane.xlu0 %182
      %v184 = vsel %vm180, %v175, 0.0
      %185 = vadd.xlane.f32.xlu0 %v184
      %v186 = vpop.xlane.xlu0 %185
      %v187 = vsel %vm180, %v176, 0.0
      %188 = vadd.xlane.f32.xlu0 %v187
      %v189 = vpop.xlane.xlu0 %188
      %v190 = vsel %vm180, %v177, 0.0
      %191 = vadd.xlane.f32.xlu0 %v190
      %v192 = vpop.xlane.xlu0 %191
      %v193 = vrcp.pop 32.0
      %v194 = vmul.f32 32.0, %v193
      %v195 = vsub.f32 1.0, %v194
      %v196 = vmul.f32 %v193, %v195
      %v197 = vadd.f32 %v193, %v196
      %vm198 = vweird.f32 %v193
      %v199 = vsel %vm198, %v193, %v197
      %v200 = vmul.f32 %v183, %v199
      %v201 = vmul.f32 %v186, %v199
      %v202 = vmul.f32 %v189, %v199
      %v203 = vmul.f32 %v192, %v199
      %v204 = vsub.f32 %v174, %v200
      %v205 = vsub.f32 %v175, %v201
      %v206 = vsub.f32 %v176, %v202
      %v207 = vsub.f32 %v177, %v203
      %v208 = vmul.f32 %v204, %v204
      %v209 = vmul.f32 %v205, %v205
      %v210 = vmul.f32 %v206, %v206
      %v211 = vmul.f32 %v207, %v207
      %v212 = vsel %vm180, %v208, 0.0
      %213 = vadd.xlane.f32.xlu0 %v212
      %v214 = vpop.xlane.xlu0 %213
      %v215 = vsel %vm180, %v209, 0.0
      %216 = vadd.xlane.f32.xlu0 %v215
      %v217 = vpop.xlane.xlu0 %216
      %v218 = vsel %vm180, %v210, 0.0
      %219 = vadd.xlane.f32.xlu0 %v218
      %v220 = vpop.xlane.xlu0 %219
      %v221 = vsel %vm180, %v211, 0.0
      %222 = vadd.xlane.f32.xlu0 %v221
      %v223 = vpop.xlane.xlu0 %222
      %v224 = vmul.f32 %v214, %v199
      %v225 = vmul.f32 %v217, %v199
      %v226 = vmul.f32 %v220, %v199
      %v227 = vmul.f32 %v223, %v199
      %v228 = vadd.f32 %v224, 1e-05
      %v229 = vadd.f32 %v225, 1e-05
      %v230 = vadd.f32 %v226, 1e-05
      %v231 = vadd.f32 %v227, 1e-05
      %v232 = vrsqrt.pop %v228
      %v233 = vmul.f32 %v232, %v228
      %v234 = vmul.f32 %v233, %v232
      %v235 = vmul.f32 0.5, %v234
      %v236 = vsub.f32 1.5, %v235
      %v237 = vmul.f32 %v232, %v236
      %vm238 = vweird.f32 %v228
      %vm239 = vweird.f32 %v232
      %vm240 = vmor %vm238, %vm239
      %v241 = vsel %vm240, %v232, %v237
      %v242 = vrsqrt.pop %v229
      %v243 = vmul.f32 %v242, %v229
      %v244 = vmul.f32 %v243, %v242
      %v245 = vmul.f32 0.5, %v244
      %v246 = vsub.f32 1.5, %v245
      %v247 = vmul.f32 %v242, %v246
      %vm248 = vweird.f32 %v229
      %vm249 = vweird.f32 %v242
      %vm250 = vmor %vm248, %vm249
      %v251 = vsel %vm250, %v242, %v247
      %v252 = vrsqrt.pop %v230
      %v253 = vmul.f32 %v252, %v230
      %v254 = vmul.f32 %v253, %v252
      %v255 = vmul.f32 0.5, %v254
      %v256 = vsub.f32 1.5, %v255
      %v257 = vmul.f32 %v252, %v256
      %vm258 = vweird.f32 %v230
      %vm259 = vweird.f32 %v252
      %vm260 = vmor %vm258, %vm259
      %v261 = vsel %vm260, %v252, %v257
      %v262 = vrsqrt.pop %v231
      %v263 = vmul.f32 %v262, %v231
      %v264 = vmul.f32 %v263, %v262
      %v265 = vmul.f32 0.5, %v264
      %v266 = vsub.f32 1.5, %v265
      %v267 = vmul.f32 %v262, %v266
      %vm268 = vweird.f32 %v231
      %vm269 = vweird.f32 %v262
      %vm270 = vmor %vm268, %vm269
      %v271 = vsel %vm270, %v262, %v267
      %v272 = vmul.f32 %v204, %v241
      %v273 = vmul.f32 %v205, %v251
      %v274 = vmul.f32 %v206, %v261
      %v275 = vmul.f32 %v207, %v271
      %v277 = vperm.slane %v178, 0
      %v279 = vmul.f32 %v272, %v277
      %v280 = vmul.f32 %v273, %v277
      %v281 = vmul.f32 %v274, %v277
      %v282 = vmul.f32 %v275, %v277
      %v284 = vperm.slane %v179, 0
      %v286 = vadd.f32 %v279, %v284
      %v287 = vadd.f32 %v280, %v284
      %v288 = vadd.f32 %v281, %v284
      %v289 = vadd.f32 %v282, %v284
      %290 = vst.msk [vmem:[%s172] sm:$0xff] %vm180, %v286
      %291 = vst.msk [vmem:[%s172 + $0x8] sm:$0xff] %vm180, %v287
      %292 = vst.msk [vmem:[%s172 + $0x10] sm:$0xff] %vm180, %v288
      %293 = vst.msk [vmem:[%s172 + $0x18] sm:$0xff] %vm180, %v289
      %s294 = smul.u32 4, %s14
      %p295 = scmp.lt.s32.totalorder %s294, 7
      %s296 = scalar_select %p295, %s294, 7
      %s297 = smul.addr %s296, 8
      %s298 = scalar_lea.vmem %s3, %s297
      // Predicated region
      $region33: #{gamdnet_forward.9} parent=31 // pred_check
        %p299 = pneg %p100
      $region34: #{gamdnet_forward.9} parent=31 // pred_check_branch
        %301 = sbr.rel (%p299) target = $region36
      $region35: #{gamdnet_forward.9} parent=31 // pred_region
        %s302 = smul.u32 4, %s14
      $region36: #{gamdnet_forward.9} parent=31 // pred_fallthru
        _
    $region32: #{gamdnet_forward.9} parent=5 // pred_fallthru
      _
    %p303 = scmp.le.s32.totalorder 2, %s9
    // Predicated region
    $region37: #{gamdnet_forward.9} parent=5 // pred_check
      %p304 = pneg %p303
    $region38: #{gamdnet_forward.9} parent=5 // pred_check_branch
      %306 = sbr.rel (%p304) target = $region40
    $region39: #{gamdnet_forward.9} parent=5 // pred_region
      %s307 = ssub.s32 %s9, 2
      // Predicated region
      $region41: #{gamdnet_forward.9} parent=39 // pred_check
        %p308 = pneg %p106
      $region42: #{gamdnet_forward.9} parent=39 // pred_check_branch
        %310 = sbr.rel (%p308) target = $region44
      $region43: #{gamdnet_forward.9} parent=39 // pred_region
        %s311 = smul.u32 4, %s15
        %p312 = scmp.lt.s32.totalorder %s311, 7
        %s313 = scalar_select %p312, %s311, 7
        %s314 = smul.addr %s313, 8
        %s315 = scalar_lea.vmem %s3, %s314
      $region44: #{gamdnet_forward.9} parent=39 // pred_fallthru
        _
    $region40: #{gamdnet_forward.9} parent=5 // pred_fallthru
      _
  $region6: #{gamdnet_forward.9} parent=0 // loop_footer
    %s13 = sadd.s32 1, %s9
  $region7: #{gamdnet_forward.9} parent=0 // loop_footer_branch
    %8 = sbr.rel target = $region3
  $region8: #{gamdnet_forward.9} parent=0 // loop_exit
    _

// kernel: gamdnet_forward.10
$region0: #{gamdnet_forward.10}
  #allocation0 [shape = 'u32[]', space=smem, size = 0x4, offset = 0x4, fixed_abs, tag = 'smem constant byte address 0x4 - core index']
  #allocation1 [shape = 'u32[72,128]{1,0:T(1,128)}', space=vmem, size = 0x9000, scoped, tag = 'internal scratch']
  %s0 = inlined_call_operand.vmem [shape: f32[256,32], index: 0, kind: input, shape index: {}]
  %s1 = inlined_call_operand.vmem [shape: f32[256,32], index: 1, kind: input, shape index: {}]
  %s2 = inlined_call_operand.vmem [shape: f32[256,32], index: 2, kind: input, shape index: {}]
  %s3 = inlined_call_operand.vmem [shape: f32[32,32], index: 3, kind: input, shape index: {}]
  %s4 = inlined_call_operand.vmem [shape: f32[1,32], index: 4, kind: input, shape index: {}]
  %s5 = inlined_call_operand.vmem [shape: f32[32,32], index: 5, kind: input, shape index: {}]
  %s6 = inlined_call_operand.vmem [shape: f32[1,32], index: 6, kind: input, shape index: {}]
  %s7 = inlined_call_operand.vmem [shape: f32[256,32], index: 7, kind: output, shape index: {}]
  %s8 = sld [smem:[#allocation0]]
  $region61: #{gamdnet_forward.10} parent=0
    _
  %s10 = ssub.s32 1, %s8
  %s11 = scalar_select 0, %s10, %s8
  loop: start=0, step=1, limit=4
  $region2: #{gamdnet_forward.10} parent=0 // loop_pre_header
    _
  $region3: #{gamdnet_forward.10} parent=0 // loop_header
    %s13 = sphi 0, %s17
    %p14 = scmp.ge.s32.totalorder %s13, 4
    %s23 = sphi 0, %s25
    %s26 = sphi 0, %s23
    %s27 = sphi 0, %s26
    %s43 = sphi 0, %s27
    %s49 = sphi 0, %s51
    %s52 = sphi 0, %s49
    %s53 = sphi 0, %s52
    %s69 = sphi 0, %s53
    %s75 = sphi 0, %s77
    %s78 = sphi 0, %s75
    %s79 = sphi 0, %s78
    %s95 = sphi 0, %s79
    %s99 = sphi 0, %s99
    %s101 = sphi 0, %s99
    %s102 = sphi 0, %s101
    %s116 = sphi 0, %s102
    %s120 = sphi 0, %s120
    %s122 = sphi 0, %s120
    %s123 = sphi 0, %s122
    %s137 = sphi 0, %s123
    %s141 = sphi 0, %s141
    %s143 = sphi 0, %s141
    %s144 = sphi 0, %s143
    %s158 = sphi 0, %s144
    %s162 = sphi 0, %s162
    %s164 = sphi 0, %s162
    %s165 = sphi 0, %s164
    %s179 = sphi 0, %s165
    %s185 = sphi 0, %s187
    %s188 = sphi 0, %s185
    %s189 = sphi 0, %s188
    %s205 = sphi 0, %s189
  $region4: #{gamdnet_forward.10} parent=0 // loop_header_branch
    %16 = sbr.rel (%p14) target = $region8
  $region5: #{gamdnet_forward.10} parent=0 // loop_body
    %s18 = ssub.s32 %s13, 1
    %s19 = ssub.s32 %s13, 2
    %s20 = sadd.s32 %s13, 1
    %s21 = ssub.s32 %s13, %s20
    %p22 = scmp.eq.s32.totalorder %s21, 0
    %s24 = sadd.s32 %s23, 1
    %s25 = scalar_select %p22, %s23, %s24
    %p28 = pneg %p22
    %p29 = scmp.eq.s32.totalorder %s13, 1
    %p30 = por %p28, %p29
    %p31 = scmp.ne.s32.totalorder %s23, %s26
    %p32 = scmp.eq.s32.totalorder %s13, 0
    %p33 = por %p31, %p32
    %p34 = scmp.ne.s32.totalorder %s23, %s26
    %p35 = scmp.eq.s32.totalorder %s18, 1
    %p36 = por %p34, %p35
    %p37 = scmp.ne.s32.totalorder %s26, %s27
    %p38 = scmp.eq.s32.totalorder %s18, 0
    %p39 = por %p37, %p38
    %p40 = scmp.ne.s32.totalorder %s26, %s27
    %p41 = scmp.eq.s32.totalorder %s19, 1
    %p42 = por %p40, %p41
    %p44 = scmp.ne.s32.totalorder %s27, %s43
    %p45 = scmp.eq.s32.totalorder %s19, 0
    %p46 = por %p44, %p45
    %s47 = ssub.s32 %s13, %s20
    %p48 = scmp.eq.s32.totalorder %s47, 0
    %s50 = sadd.s32 %s49, 1
    %s51 = scalar_select %p48, %s49, %s50
    %p54 = pneg %p48
    %p55 = scmp.eq.s32.totalorder %s13, 1
    %p56 = por %p54, %p55
    %p57 = scmp.ne.s32.totalorder %s49, %s52
    %p58 = scmp.eq.s32.totalorder %s13, 0
    %p59 = por %p57, %p58
    %p60 = scmp.ne.s32.totalorder %s49, %s52
    %p61 = scmp.eq.s32.totalorder %s18, 1
    %p62 = por %p60, %p61
    %p63 = scmp.ne.s32.totalorder %s52, %s53
    %p64 = scmp.eq.s32.totalorder %s18, 0
    %p65 = por %p63, %p64
    %p66 = scmp.ne.s32.totalorder %s52, %s53
    %p67 = scmp.eq.s32.totalorder %s19, 1
    %p68 = por %p66, %p67
    %p70 = scmp.ne.s32.totalorder %s53, %s69
    %p71 = scmp.eq.s32.totalorder %s19, 0
    %p72 = por %p70, %p71
    %s73 = ssub.s32 %s13, %s20
    %p74 = scmp.eq.s32.totalorder %s73, 0
    %s76 = sadd.s32 %s75, 1
    %s77 = scalar_select %p74, %s75, %s76
    %p80 = pneg %p74
    %p81 = scmp.eq.s32.totalorder %s13, 1
    %p82 = por %p80, %p81
    %p83 = scmp.ne.s32.totalorder %s75, %s78
    %p84 = scmp.eq.s32.totalorder %s13, 0
    %p85 = por %p83, %p84
    %p86 = scmp.ne.s32.totalorder %s75, %s78
    %p87 = scmp.eq.s32.totalorder %s18, 1
    %p88 = por %p86, %p87
    %p89 = scmp.ne.s32.totalorder %s78, %s79
    %p90 = scmp.eq.s32.totalorder %s18, 0
    %p91 = por %p89, %p90
    %p92 = scmp.ne.s32.totalorder %s78, %s79
    %p93 = scmp.eq.s32.totalorder %s19, 1
    %p94 = por %p92, %p93
    %p96 = scmp.ne.s32.totalorder %s79, %s95
    %p97 = scmp.eq.s32.totalorder %s19, 0
    %p98 = por %p96, %p97
    %s100 = sadd.s32 %s99, 1
    %p103 = scmp.eq.s32.totalorder %s13, 1
    %p104 = scmp.ne.s32.totalorder %s99, %s101
    %p105 = scmp.eq.s32.totalorder %s13, 0
    %p106 = por %p104, %p105
    %p107 = scmp.ne.s32.totalorder %s99, %s101
    %p108 = scmp.eq.s32.totalorder %s18, 1
    %p109 = por %p107, %p108
    %p110 = scmp.ne.s32.totalorder %s101, %s102
    %p111 = scmp.eq.s32.totalorder %s18, 0
    %p112 = por %p110, %p111
    %p113 = scmp.ne.s32.totalorder %s101, %s102
    %p114 = scmp.eq.s32.totalorder %s19, 1
    %p115 = por %p113, %p114
    %p117 = scmp.ne.s32.totalorder %s102, %s116
    %p118 = scmp.eq.s32.totalorder %s19, 0
    %p119 = por %p117, %p118
    %s121 = sadd.s32 %s120, 1
    %p124 = scmp.eq.s32.totalorder %s13, 1
    %p125 = scmp.ne.s32.totalorder %s120, %s122
    %p126 = scmp.eq.s32.totalorder %s13, 0
    %p127 = por %p125, %p126
    %p128 = scmp.ne.s32.totalorder %s120, %s122
    %p129 = scmp.eq.s32.totalorder %s18, 1
    %p130 = por %p128, %p129
    %p131 = scmp.ne.s32.totalorder %s122, %s123
    %p132 = scmp.eq.s32.totalorder %s18, 0
    %p133 = por %p131, %p132
    %p134 = scmp.ne.s32.totalorder %s122, %s123
    %p135 = scmp.eq.s32.totalorder %s19, 1
    %p136 = por %p134, %p135
    %p138 = scmp.ne.s32.totalorder %s123, %s137
    %p139 = scmp.eq.s32.totalorder %s19, 0
    %p140 = por %p138, %p139
    %s142 = sadd.s32 %s141, 1
    %p145 = scmp.eq.s32.totalorder %s13, 1
    %p146 = scmp.ne.s32.totalorder %s141, %s143
    %p147 = scmp.eq.s32.totalorder %s13, 0
    %p148 = por %p146, %p147
    %p149 = scmp.ne.s32.totalorder %s141, %s143
    %p150 = scmp.eq.s32.totalorder %s18, 1
    %p151 = por %p149, %p150
    %p152 = scmp.ne.s32.totalorder %s143, %s144
    %p153 = scmp.eq.s32.totalorder %s18, 0
    %p154 = por %p152, %p153
    %p155 = scmp.ne.s32.totalorder %s143, %s144
    %p156 = scmp.eq.s32.totalorder %s19, 1
    %p157 = por %p155, %p156
    %p159 = scmp.ne.s32.totalorder %s144, %s158
    %p160 = scmp.eq.s32.totalorder %s19, 0
    %p161 = por %p159, %p160
    %s163 = sadd.s32 %s162, 1
    %p166 = scmp.eq.s32.totalorder %s13, 1
    %p167 = scmp.ne.s32.totalorder %s162, %s164
    %p168 = scmp.eq.s32.totalorder %s13, 0
    %p169 = por %p167, %p168
    %p170 = scmp.ne.s32.totalorder %s162, %s164
    %p171 = scmp.eq.s32.totalorder %s18, 1
    %p172 = por %p170, %p171
    %p173 = scmp.ne.s32.totalorder %s164, %s165
    %p174 = scmp.eq.s32.totalorder %s18, 0
    %p175 = por %p173, %p174
    %p176 = scmp.ne.s32.totalorder %s164, %s165
    %p177 = scmp.eq.s32.totalorder %s19, 1
    %p178 = por %p176, %p177
    %p180 = scmp.ne.s32.totalorder %s165, %s179
    %p181 = scmp.eq.s32.totalorder %s19, 0
    %p182 = por %p180, %p181
    %s183 = ssub.s32 %s13, %s20
    %p184 = scmp.eq.s32.totalorder %s183, 0
    %s186 = sadd.s32 %s185, 1
    %s187 = scalar_select %p184, %s185, %s186
    %p190 = pneg %p184
    %p191 = scmp.eq.s32.totalorder %s13, 1
    %p192 = por %p190, %p191
    %p193 = scmp.ne.s32.totalorder %s185, %s188
    %p194 = scmp.eq.s32.totalorder %s13, 0
    %p195 = por %p193, %p194
    %p196 = scmp.ne.s32.totalorder %s185, %s188
    %p197 = scmp.eq.s32.totalorder %s18, 1
    %p198 = por %p196, %p197
    %p199 = scmp.ne.s32.totalorder %s188, %s189
    %p200 = scmp.eq.s32.totalorder %s18, 0
    %p201 = por %p199, %p200
    %p202 = scmp.ne.s32.totalorder %s188, %s189
    %p203 = scmp.eq.s32.totalorder %s19, 1
    %p204 = por %p202, %p203
    %p206 = scmp.ne.s32.totalorder %s189, %s205
    %p207 = scmp.eq.s32.totalorder %s19, 0
    %p208 = por %p206, %p207
    %p209 = scmp.le.s32.totalorder 1, %s13
    %p210 = scmp.lt.s32.totalorder %s13, 3
    %p211 = pnand %p209, %p210
    %p212 = pneg %p211
    // Predicated region
    $region9: #{gamdnet_forward.10} parent=5 // pred_check
      _
    $region10: #{gamdnet_forward.10} parent=5 // pred_check_branch
      %214 = sbr.rel (%p211) target = $region12
    $region11: #{gamdnet_forward.10} parent=5 // pred_region
      %s215 = ssub.s32 %s13, 1
      // Predicated region
      $region13: #{gamdnet_forward.10} parent=11 // pred_check
        %p216 = pneg %p112
      $region14: #{gamdnet_forward.10} parent=11 // pred_check_branch
        %218 = sbr.rel (%p216) target = $region16
      $region15: #{gamdnet_forward.10} parent=11 // pred_region
        _
      $region16: #{gamdnet_forward.10} parent=11 // pred_fallthru
        _
      // Predicated region
      $region17: #{gamdnet_forward.10} parent=11 // pred_check
        %p219 = pneg %p133
      $region18: #{gamdnet_forward.10} parent=11 // pred_check_branch
        %221 = sbr.rel (%p219) target = $region20
      $region19: #{gamdnet_forward.10} parent=11 // pred_region
        _
      $region20: #{gamdnet_forward.10} parent=11 // pred_fallthru
        _
      // Predicated region
      $region21: #{gamdnet_forward.10} parent=11 // pred_check
        %p222 = pneg %p154
      $region22: #{gamdnet_forward.10} parent=11 // pred_check_branch
        %224 = sbr.rel (%p222) target = $region24
      $region23: #{gamdnet_forward.10} parent=11 // pred_region
        _
      $region24: #{gamdnet_forward.10} parent=11 // pred_fallthru
        _
      // Predicated region
      $region25: #{gamdnet_forward.10} parent=11 // pred_check
        %p225 = pneg %p175
      $region26: #{gamdnet_forward.10} parent=11 // pred_check_branch
        %227 = sbr.rel (%p225) target = $region28
      $region27: #{gamdnet_forward.10} parent=11 // pred_region
        _
      $region28: #{gamdnet_forward.10} parent=11 // pred_fallthru
        _
    $region12: #{gamdnet_forward.10} parent=5 // pred_fallthru
      _
    %p228 = scmp.lt.s32.totalorder %s13, 2
    // Predicated region
    $region29: #{gamdnet_forward.10} parent=5 // pred_check
      %p229 = pneg %p228
    $region30: #{gamdnet_forward.10} parent=5 // pred_check_branch
      %231 = sbr.rel (%p229) target = $region32
    $region31: #{gamdnet_forward.10} parent=5 // pred_region
      // Predicated region
      $region33: #{gamdnet_forward.10} parent=31 // pred_check
        %p232 = pneg %p33
      $region34: #{gamdnet_forward.10} parent=31 // pred_check_branch
        %234 = sbr.rel (%p232) target = $region36
      $region35: #{gamdnet_forward.10} parent=31 // pred_region
        %s235 = smul.u32 16, %s13
        %p236 = scmp.lt.s32.totalorder %s235, 31
        %s237 = scalar_select %p236, %s235, 31
        %s238 = smul.addr %s237, 8
        %s239 = scalar_lea.vmem %s0, %s238
        %s240 = smul.u32 16, %s13
      $region36: #{gamdnet_forward.10} parent=31 // pred_fallthru
        _
      // Predicated region
      $region37: #{gamdnet_forward.10} parent=31 // pred_check
        %p241 = pneg %p59
      $region38: #{gamdnet_forward.10} parent=31 // pred_check_branch
        %243 = sbr.rel (%p241) target = $region40
      $region39: #{gamdnet_forward.10} parent=31 // pred_region
        %s244 = smul.u32 16, %s13
        %p245 = scmp.lt.s32.totalorder %s244, 31
        %s246 = scalar_select %p245, %s244, 31
        %s247 = smul.addr %s246, 8
        %s248 = scalar_lea.vmem %s1, %s247
        %s249 = smul.u32 16, %s13
      $region40: #{gamdnet_forward.10} parent=31 // pred_fallthru
        _
      // Predicated region
      $region41: #{gamdnet_forward.10} parent=31 // pred_check
        %p250 = pneg %p85
      $region42: #{gamdnet_forward.10} parent=31 // pred_check_branch
        %252 = sbr.rel (%p250) target = $region44
      $region43: #{gamdnet_forward.10} parent=31 // pred_region
        %s253 = smul.u32 16, %s13
        %p254 = scmp.lt.s32.totalorder %s253, 31
        %s255 = scalar_select %p254, %s253, 31
        %s256 = smul.addr %s255, 8
        %s257 = scalar_lea.vmem %s2, %s256
        %s258 = smul.u32 16, %s13
      $region44: #{gamdnet_forward.10} parent=31 // pred_fallthru
        _
    $region32: #{gamdnet_forward.10} parent=5 // pred_fallthru
      _
    %p259 = scmp.le.s32.totalorder 1, %s13
    %p260 = scmp.lt.s32.totalorder %s13, 3
    %p261 = pnand %p259, %p260
    %p262 = pneg %p261
    // Predicated region
    $region45: #{gamdnet_forward.10} parent=5 // pred_check
      _
    $region46: #{gamdnet_forward.10} parent=5 // pred_check_branch
      %264 = sbr.rel (%p261) target = $region48
    $region47: #{gamdnet_forward.10} parent=5 // pred_region
      %s265 = ssub.s32 %s13, 1
      %s266 = smul.u32 16, %s18
      %p267 = scmp.lt.s32.totalorder %s266, 31
      %s268 = scalar_select %p267, %s266, 31
      %s269 = smul.addr %s268, 8
      %s270 = scalar_lea.vmem %s0, %s269
      %p271 = pneg %p39
      %p272 = pneg %p36
      %s273 = smul.u32 16, %s18
      %p274 = scmp.lt.s32.totalorder %s273, 31
      %s275 = scalar_select %p274, %s273, 31
      %s276 = smul.addr %s275, 8
      %s277 = scalar_lea.vmem %s1, %s276
      %p278 = pneg %p65
      %p279 = pneg %p62
      %s280 = smul.u32 16, %s18
      %p281 = scmp.lt.s32.totalorder %s280, 31
      %s282 = scalar_select %p281, %s280, 31
      %s283 = smul.addr %s282, 8
      %s284 = scalar_lea.vmem %s2, %s283
      %p285 = pneg %p91
      %p286 = pneg %p88
      %p287 = pneg %p112
      %p288 = pneg %p109
      %p289 = pneg %p133
      %p290 = pneg %p130
      %p291 = pneg %p154
      %p292 = pneg %p151
      %p293 = pneg %p175
      %p294 = pneg %p172
      %p295 = pneg %p201
      %p296 = pneg %p198
      %s297 = smul.u32 16, %s18
      %p298 = scmp.lt.s32.totalorder %s297, 31
      %s299 = scalar_select %p298, %s297, 31
      %s300 = smul.addr %s299, 8
      %s301 = scalar_lea.vmem %s7, %s300
      %s302 = smul.u32 16, %s18
      %p303 = scmp.lt.s32.totalorder %s302, 31
      %s304 = scalar_select %p303, %s302, 31
      %s305 = smul.addr %s304, 8
      %s306 = scalar_lea.vmem %s0, %s305
      %s307 = smul.u32 16, %s18
      %s308 = smul.u32 16, %s18
      %p309 = scmp.lt.s32.totalorder %s308, 31
      %s310 = scalar_select %p309, %s308, 31
      %s311 = smul.addr %s310, 8
      %s312 = scalar_lea.vmem %s1, %s311
      %s313 = smul.u32 16, %s18
      %s314 = smul.u32 16, %s18
      %p315 = scmp.lt.s32.totalorder %s314, 31
      %s316 = scalar_select %p315, %s314, 31
      %s317 = smul.addr %s316, 8
      %s318 = scalar_lea.vmem %s2, %s317
      %s319 = smul.u32 16, %s18
      %s320 = smul.u32 16, %s18
      %p321 = scmp.lt.s32.totalorder %s320, 31
      %s322 = scalar_select %p321, %s320, 31
      %s323 = smul.addr %s322, 8
      %s324 = scalar_lea.vmem %s7, %s323
      %s325 = smul.u32 16, %s18
      %v326 = vld [vmem:[%s318] sm:$0xff]
      %v327 = vld [vmem:[%s318 + $0x8] sm:$0xff]
      %v328 = vld [vmem:[%s318 + $0x10] sm:$0xff]
      %v329 = vld [vmem:[%s318 + $0x18] sm:$0xff]
      %v330 = vld [vmem:[%s318 + $0x20] sm:$0xff]
      %v331 = vld [vmem:[%s318 + $0x28] sm:$0xff]
      %v332 = vld [vmem:[%s318 + $0x30] sm:$0xff]
      %v333 = vld [vmem:[%s318 + $0x38] sm:$0xff]
      %v334 = vld [vmem:[%s318 + $0x40] sm:$0xff]
      %v335 = vld [vmem:[%s318 + $0x48] sm:$0xff]
      %v336 = vld [vmem:[%s318 + $0x50] sm:$0xff]
      %v337 = vld [vmem:[%s318 + $0x58] sm:$0xff]
      %v338 = vld [vmem:[%s318 + $0x60] sm:$0xff]
      %v339 = vld [vmem:[%s318 + $0x68] sm:$0xff]
      %v340 = vld [vmem:[%s318 + $0x70] sm:$0xff]
      %v341 = vld [vmem:[%s318 + $0x78] sm:$0xff]
      %v342 = vld [vmem:[%s306] sm:$0xff]
      %v343 = vld [vmem:[%s306 + $0x8] sm:$0xff]
      %v344 = vld [vmem:[%s306 + $0x10] sm:$0xff]
      %v345 = vld [vmem:[%s306 + $0x18] sm:$0xff]
      %v346 = vld [vmem:[%s306 + $0x20] sm:$0xff]
      %v347 = vld [vmem:[%s306 + $0x28] sm:$0xff]
      %v348 = vld [vmem:[%s306 + $0x30] sm:$0xff]
      %v349 = vld [vmem:[%s306 + $0x38] sm:$0xff]
      %v350 = vld [vmem:[%s306 + $0x40] sm:$0xff]
      %v351 = vld [vmem:[%s306 + $0x48] sm:$0xff]
      %v352 = vld [vmem:[%s306 + $0x50] sm:$0xff]
      %v353 = vld [vmem:[%s306 + $0x58] sm:$0xff]
      %v354 = vld [vmem:[%s306 + $0x60] sm:$0xff]
      %v355 = vld [vmem:[%s306 + $0x68] sm:$0xff]
      %v356 = vld [vmem:[%s306 + $0x70] sm:$0xff]
      %v357 = vld [vmem:[%s306 + $0x78] sm:$0xff]
      %v358 = vld [vmem:[%s312] sm:$0xff]
      %v359 = vld [vmem:[%s312 + $0x8] sm:$0xff]
      %v360 = vld [vmem:[%s312 + $0x10] sm:$0xff]
      %v361 = vld [vmem:[%s312 + $0x18] sm:$0xff]
      %v362 = vld [vmem:[%s312 + $0x20] sm:$0xff]
      %v363 = vld [vmem:[%s312 + $0x28] sm:$0xff]
      %v364 = vld [vmem:[%s312 + $0x30] sm:$0xff]
      %v365 = vld [vmem:[%s312 + $0x38] sm:$0xff]
      %v366 = vld [vmem:[%s312 + $0x40] sm:$0xff]
      %v367 = vld [vmem:[%s312 + $0x48] sm:$0xff]
      %v368 = vld [vmem:[%s312 + $0x50] sm:$0xff]
      %v369 = vld [vmem:[%s312 + $0x58] sm:$0xff]
      %v370 = vld [vmem:[%s312 + $0x60] sm:$0xff]
      %v371 = vld [vmem:[%s312 + $0x68] sm:$0xff]
      %v372 = vld [vmem:[%s312 + $0x70] sm:$0xff]
      %v373 = vld [vmem:[%s312 + $0x78] sm:$0xff]
      %v374 = vadd.f32 %v342, %v358
      %v375 = vadd.f32 %v343, %v359
      %v376 = vadd.f32 %v344, %v360
      %v377 = vadd.f32 %v345, %v361
      %v378 = vadd.f32 %v346, %v362
      %v379 = vadd.f32 %v347, %v363
      %v380 = vadd.f32 %v348, %v364
      %v381 = vadd.f32 %v349, %v365
      %v382 = vadd.f32 %v350, %v366
      %v383 = vadd.f32 %v351, %v367
      %v384 = vadd.f32 %v352, %v368
      %v385 = vadd.f32 %v353, %v369
      %v386 = vadd.f32 %v354, %v370
      %v387 = vadd.f32 %v355, %v371
      %v388 = vadd.f32 %v356, %v372
      %v389 = vadd.f32 %v357, %v373
      %v390 = vadd.f32 %v374, %v326
      %v391 = vadd.f32 %v375, %v327
      %v392 = vadd.f32 %v376, %v328
      %v393 = vadd.f32 %v377, %v329
      %v394 = vadd.f32 %v378, %v330
      %v395 = vadd.f32 %v379, %v331
      %v396 = vadd.f32 %v380, %v332
      %v397 = vadd.f32 %v381, %v333
      %v398 = vadd.f32 %v382, %v334
      %v399 = vadd.f32 %v383, %v335
      %v400 = vadd.f32 %v384, %v336
      %v401 = vadd.f32 %v385, %v337
      %v402 = vadd.f32 %v386, %v338
      %v403 = vadd.f32 %v387, %v339
      %v404 = vadd.f32 %v388, %v340
      %v405 = vadd.f32 %v389, %v341
      %v406 = vxor.u32 %v390, 2147483648
      %v407 = vxor.u32 %v391, 2147483648
      %v408 = vxor.u32 %v392, 2147483648
      %v409 = vxor.u32 %v393, 2147483648
      %v410 = vxor.u32 %v394, 2147483648
      %v411 = vxor.u32 %v395, 2147483648
      %v412 = vxor.u32 %v396, 2147483648
      %v413 = vxor.u32 %v397, 2147483648
      %v414 = vxor.u32 %v398, 2147483648
      %v415 = vxor.u32 %v399, 2147483648
      %v416 = vxor.u32 %v400, 2147483648
      %v417 = vxor.u32 %v401, 2147483648
      %v418 = vxor.u32 %v402, 2147483648
      %v419 = vxor.u32 %v403, 2147483648
      %v420 = vxor.u32 %v404, 2147483648
      %v421 = vxor.u32 %v405, 2147483648
      %v422 = vmul.f32 %v406, 1.442695
      %v423 = vpow.pop %v422
      %v424 = vmul.f32 %v407, 1.442695
      %v425 = vpow.pop %v424
      %v426 = vmul.f32 %v408, 1.442695
      %v427 = vpow.pop %v426
      %v428 = vmul.f32 %v409, 1.442695
      %v429 = vpow.pop %v428
      %v430 = vmul.f32 %v410, 1.442695
      %v431 = vpow.pop %v430
      %v432 = vmul.f32 %v411, 1.442695
      %v433 = vpow.pop %v432
      %v434 = vmul.f32 %v412, 1.442695
      %v435 = vpow.pop %v434
      %v436 = vmul.f32 %v413, 1.442695
      %v437 = vpow.pop %v436
      %v438 = vmul.f32 %v414, 1.442695
      %v439 = vpow.pop %v438
      %v440 = vmul.f32 %v415, 1.442695
      %v441 = vpow.pop %v440
      %v442 = vmul.f32 %v416, 1.442695
      %v443 = vpow.pop %v442
      %v444 = vmul.f32 %v417, 1.442695
      %v445 = vpow.pop %v444
      %v446 = vmul.f32 %v418, 1.442695
      %v447 = vpow.pop %v446
      %v448 = vmul.f32 %v419, 1.442695
      %v449 = vpow.pop %v448
      %v450 = vmul.f32 %v420, 1.442695
      %v451 = vpow.pop %v450
      %v452 = vmul.f32 %v421, 1.442695
      %v453 = vpow.pop %v452
      %v454 = vadd.f32 %v423, 1.0
      %v455 = vadd.f32 %v425, 1.0
      %v456 = vadd.f32 %v427, 1.0
      %v457 = vadd.f32 %v429, 1.0
      %v458 = vadd.f32 %v431, 1.0
      %v459 = vadd.f32 %v433, 1.0
      %v460 = vadd.f32 %v435, 1.0
      %v461 = vadd.f32 %v437, 1.0
      %v462 = vadd.f32 %v439, 1.0
      %v463 = vadd.f32 %v441, 1.0
      %v464 = vadd.f32 %v443, 1.0
      %v465 = vadd.f32 %v445, 1.0
      %v466 = vadd.f32 %v447, 1.0
      %v467 = vadd.f32 %v449, 1.0
      %v468 = vadd.f32 %v451, 1.0
      %v469 = vadd.f32 %v453, 1.0
      %v470 = vrcp.pop %v454
      %v471 = vmul.f32 %v454, %v470
      %v472 = vsub.f32 1.0, %v471
      %v473 = vmul.f32 %v470, %v472
      %v474 = vadd.f32 %v470, %v473
      %vm475 = vweird.f32 %v454
      %vm476 = vweird.f32 %v470
      %vm477 = vmor %vm475, %vm476
      %v478 = vsel %vm477, %v470, %v474
      %v479 = vand.u32 2147483647, %v454
      %vm480 = vcmp.eq.f32.partialorder %v479, 8.507059e+37
      %v481 = vand.u32 %v454, 2147483648
      %v482 = vor.u32 1.1754944e-38, %v481
      %v483 = vsel %vm480, %v482, %v478
      %v484 = vmul.f32 1.0, %v483
      %v485 = vrcp.pop %v455
      %v486 = vmul.f32 %v455, %v485
      %v487 = vsub.f32 1.0, %v486
      %v488 = vmul.f32 %v485, %v487
      %v489 = vadd.f32 %v485, %v488
      %vm490 = vweird.f32 %v455
      %vm491 = vweird.f32 %v485
      %vm492 = vmor %vm490, %vm491
      %v493 = vsel %vm492, %v485, %v489
      %v494 = vand.u32 2147483647, %v455
      %vm495 = vcmp.eq.f32.partialorder %v494, 8.507059e+37
      %v496 = vand.u32 %v455, 2147483648
      %v497 = vor.u32 1.1754944e-38, %v496
      %v498 = vsel %vm495, %v497, %v493
      %v499 = vmul.f32 1.0, %v498
      %v500 = vrcp.pop %v456
      %v501 = vmul.f32 %v456, %v500
      %v502 = vsub.f32 1.0, %v501
      %v503 = vmul.f32 %v500, %v502
      %v504 = vadd.f32 %v500, %v503
      %vm505 = vweird.f32 %v456
      %vm506 = vweird.f32 %v500
      %vm507 = vmor %vm505, %vm506
      %v508 = vsel %vm507, %v500, %v504
      %v509 = vand.u32 2147483647, %v456
      %vm510 = vcmp.eq.f32.partialorder %v509, 8.507059e+37
      %v511 = vand.u32 %v456, 2147483648
      %v512 = vor.u32 1.1754944e-38, %v511
      %v513 = vsel %vm510, %v512, %v508
      %v514 = vmul.f32 1.0, %v513
      %v515 = vrcp.pop %v457
      %v516 = vmul.f32 %v457, %v515
      %v517 = vsub.f32 1.0, %v516
      %v518 = vmul.f32 %v515, %v517
      %v519 = vadd.f32 %v515, %v518
      %vm520 = vweird.f32 %v457
      %vm521 = vweird.f32 %v515
      %vm522 = vmor %vm520, %vm521
      %v523 = vsel %vm522, %v515, %v519
      %v524 = vand.u32 2147483647, %v457
      %vm525 = vcmp.eq.f32.partialorder %v524, 8.507059e+37
      %v526 = vand.u32 %v457, 2147483648
      %v527 = vor.u32 1.1754944e-38, %v526
      %v528 = vsel %vm525, %v527, %v523
      %v529 = vmul.f32 1.0, %v528
      %v530 = vrcp.pop %v458
      %v531 = vmul.f32 %v458, %v530
      %v532 = vsub.f32 1.0, %v531
      %v533 = vmul.f32 %v530, %v532
      %v534 = vadd.f32 %v530, %v533
      %vm535 = vweird.f32 %v458
      %vm536 = vweird.f32 %v530
      %vm537 = vmor %vm535, %vm536
      %v538 = vsel %vm537, %v530, %v534
      %v539 = vand.u32 2147483647, %v458
      %vm540 = vcmp.eq.f32.partialorder %v539, 8.507059e+37
      %v541 = vand.u32 %v458, 2147483648
      %v542 = vor.u32 1.1754944e-38, %v541
      %v543 = vsel %vm540, %v542, %v538
      %v544 = vmul.f32 1.0, %v543
      %v545 = vrcp.pop %v459
      %v546 = vmul.f32 %v459, %v545
      %v547 = vsub.f32 1.0, %v546
      %v548 = vmul.f32 %v545, %v547
      %v549 = vadd.f32 %v545, %v548
      %vm550 = vweird.f32 %v459
      %vm551 = vweird.f32 %v545
      %vm552 = vmor %vm550, %vm551
      %v553 = vsel %vm552, %v545, %v549
      %v554 = vand.u32 2147483647, %v459
      %vm555 = vcmp.eq.f32.partialorder %v554, 8.507059e+37
      %v556 = vand.u32 %v459, 2147483648
      %v557 = vor.u32 1.1754944e-38, %v556
      %v558 = vsel %vm555, %v557, %v553
      %v559 = vmul.f32 1.0, %v558
      %v560 = vrcp.pop %v460
      %v561 = vmul.f32 %v460, %v560
      %v562 = vsub.f32 1.0, %v561
      %v563 = vmul.f32 %v560, %v562
      %v564 = vadd.f32 %v560, %v563
      %vm565 = vweird.f32 %v460
      %vm566 = vweird.f32 %v560
      %vm567 = vmor %vm565, %vm566
      %v568 = vsel %vm567, %v560, %v564
      %v569 = vand.u32 2147483647, %v460
      %vm570 = vcmp.eq.f32.partialorder %v569, 8.507059e+37
      %v571 = vand.u32 %v460, 2147483648
      %v572 = vor.u32 1.1754944e-38, %v571
      %v573 = vsel %vm570, %v572, %v568
      %v574 = vmul.f32 1.0, %v573
      %v575 = vrcp.pop %v461
      %v576 = vmul.f32 %v461, %v575
      %v577 = vsub.f32 1.0, %v576
      %v578 = vmul.f32 %v575, %v577
      %v579 = vadd.f32 %v575, %v578
      %vm580 = vweird.f32 %v461
      %vm581 = vweird.f32 %v575
      %vm582 = vmor %vm580, %vm581
      %v583 = vsel %vm582, %v575, %v579
      %v584 = vand.u32 2147483647, %v461
      %vm585 = vcmp.eq.f32.partialorder %v584, 8.507059e+37
      %v586 = vand.u32 %v461, 2147483648
      %v587 = vor.u32 1.1754944e-38, %v586
      %v588 = vsel %vm585, %v587, %v583
      %v589 = vmul.f32 1.0, %v588
      %v590 = vrcp.pop %v462
      %v591 = vmul.f32 %v462, %v590
      %v592 = vsub.f32 1.0, %v591
      %v593 = vmul.f32 %v590, %v592
      %v594 = vadd.f32 %v590, %v593
      %vm595 = vweird.f32 %v462
      %vm596 = vweird.f32 %v590
      %vm597 = vmor %vm595, %vm596
      %v598 = vsel %vm597, %v590, %v594
      %v599 = vand.u32 2147483647, %v462
      %vm600 = vcmp.eq.f32.partialorder %v599, 8.507059e+37
      %v601 = vand.u32 %v462, 2147483648
      %v602 = vor.u32 1.1754944e-38, %v601
      %v603 = vsel %vm600, %v602, %v598
      %v604 = vmul.f32 1.0, %v603
      %v605 = vrcp.pop %v463
      %v606 = vmul.f32 %v463, %v605
      %v607 = vsub.f32 1.0, %v606
      %v608 = vmul.f32 %v605, %v607
      %v609 = vadd.f32 %v605, %v608
      %vm610 = vweird.f32 %v463
      %vm611 = vweird.f32 %v605
      %vm612 = vmor %vm610, %vm611
      %v613 = vsel %vm612, %v605, %v609
      %v614 = vand.u32 2147483647, %v463
      %vm615 = vcmp.eq.f32.partialorder %v614, 8.507059e+37
      %v616 = vand.u32 %v463, 2147483648
      %v617 = vor.u32 1.1754944e-38, %v616
      %v618 = vsel %vm615, %v617, %v613
      %v619 = vmul.f32 1.0, %v618
      %v620 = vrcp.pop %v464
      %v621 = vmul.f32 %v464, %v620
      %v622 = vsub.f32 1.0, %v621
      %v623 = vmul.f32 %v620, %v622
      %v624 = vadd.f32 %v620, %v623
      %vm625 = vweird.f32 %v464
      %vm626 = vweird.f32 %v620
      %vm627 = vmor %vm625, %vm626
      %v628 = vsel %vm627, %v620, %v624
      %v629 = vand.u32 2147483647, %v464
      %vm630 = vcmp.eq.f32.partialorder %v629, 8.507059e+37
      %v631 = vand.u32 %v464, 2147483648
      %v632 = vor.u32 1.1754944e-38, %v631
      %v633 = vsel %vm630, %v632, %v628
      %v634 = vmul.f32 1.0, %v633
      %v635 = vrcp.pop %v465
      %v636 = vmul.f32 %v465, %v635
      %v637 = vsub.f32 1.0, %v636
      %v638 = vmul.f32 %v635, %v637
      %v639 = vadd.f32 %v635, %v638
      %vm640 = vweird.f32 %v465
      %vm641 = vweird.f32 %v635
      %vm642 = vmor %vm640, %vm641
      %v643 = vsel %vm642, %v635, %v639
      %v644 = vand.u32 2147483647, %v465
      %vm645 = vcmp.eq.f32.partialorder %v644, 8.507059e+37
      %v646 = vand.u32 %v465, 2147483648
      %v647 = vor.u32 1.1754944e-38, %v646
      %v648 = vsel %vm645, %v647, %v643
      %v649 = vmul.f32 1.0, %v648
      %v650 = vrcp.pop %v466
      %v651 = vmul.f32 %v466, %v650
      %v652 = vsub.f32 1.0, %v651
      %v653 = vmul.f32 %v650, %v652
      %v654 = vadd.f32 %v650, %v653
      %vm655 = vweird.f32 %v466
      %vm656 = vweird.f32 %v650
      %vm657 = vmor %vm655, %vm656
      %v658 = vsel %vm657, %v650, %v654
      %v659 = vand.u32 2147483647, %v466
      %vm660 = vcmp.eq.f32.partialorder %v659, 8.507059e+37
      %v661 = vand.u32 %v466, 2147483648
      %v662 = vor.u32 1.1754944e-38, %v661
      %v663 = vsel %vm660, %v662, %v658
      %v664 = vmul.f32 1.0, %v663
      %v665 = vrcp.pop %v467
      %v666 = vmul.f32 %v467, %v665
      %v667 = vsub.f32 1.0, %v666
      %v668 = vmul.f32 %v665, %v667
      %v669 = vadd.f32 %v665, %v668
      %vm670 = vweird.f32 %v467
      %vm671 = vweird.f32 %v665
      %vm672 = vmor %vm670, %vm671
      %v673 = vsel %vm672, %v665, %v669
      %v674 = vand.u32 2147483647, %v467
      %vm675 = vcmp.eq.f32.partialorder %v674, 8.507059e+37
      %v676 = vand.u32 %v467, 2147483648
      %v677 = vor.u32 1.1754944e-38, %v676
      %v678 = vsel %vm675, %v677, %v673
      %v679 = vmul.f32 1.0, %v678
      %v680 = vrcp.pop %v468
      %v681 = vmul.f32 %v468, %v680
      %v682 = vsub.f32 1.0, %v681
      %v683 = vmul.f32 %v680, %v682
      %v684 = vadd.f32 %v680, %v683
      %vm685 = vweird.f32 %v468
      %vm686 = vweird.f32 %v680
      %vm687 = vmor %vm685, %vm686
      %v688 = vsel %vm687, %v680, %v684
      %v689 = vand.u32 2147483647, %v468
      %vm690 = vcmp.eq.f32.partialorder %v689, 8.507059e+37
      %v691 = vand.u32 %v468, 2147483648
      %v692 = vor.u32 1.1754944e-38, %v691
      %v693 = vsel %vm690, %v692, %v688
      %v694 = vmul.f32 1.0, %v693
      %v695 = vrcp.pop %v469
      %v696 = vmul.f32 %v469, %v695
      %v697 = vsub.f32 1.0, %v696
      %v698 = vmul.f32 %v695, %v697
      %v699 = vadd.f32 %v695, %v698
      %vm700 = vweird.f32 %v469
      %vm701 = vweird.f32 %v695
      %vm702 = vmor %vm700, %vm701
      %v703 = vsel %vm702, %v695, %v699
      %v704 = vand.u32 2147483647, %v469
      %vm705 = vcmp.eq.f32.partialorder %v704, 8.507059e+37
      %v706 = vand.u32 %v469, 2147483648
      %v707 = vor.u32 1.1754944e-38, %v706
      %v708 = vsel %vm705, %v707, %v703
      %v709 = vmul.f32 1.0, %v708
      %v710 = vmul.f32 %v390, %v484
      %v711 = vmul.f32 %v391, %v499
      %v712 = vmul.f32 %v392, %v514
      %v713 = vmul.f32 %v393, %v529
      %v714 = vmul.f32 %v394, %v544
      %v715 = vmul.f32 %v395, %v559
      %v716 = vmul.f32 %v396, %v574
      %v717 = vmul.f32 %v397, %v589
      %v718 = vmul.f32 %v398, %v604
      %v719 = vmul.f32 %v399, %v619
      %v720 = vmul.f32 %v400, %v634
      %v721 = vmul.f32 %v401, %v649
      %v722 = vmul.f32 %v402, %v664
      %v723 = vmul.f32 %v403, %v679
      %v724 = vmul.f32 %v404, %v694
      %v725 = vmul.f32 %v405, %v709
      %v726 = vld [vmem:[%s3] sm:$0xff]
      %v727 = vld [vmem:[%s3 + $0x8] sm:$0xff]
      %v728 = vld [vmem:[%s3 + $0x10] sm:$0xff]
      %v729 = vld [vmem:[%s3 + $0x18] sm:$0xff]
      %v730 = vld [vmem:[%s4] sm:$0x1]
      %v732 = vperm.slane %v730, 0
      %vm734 = vcmask 261120
      %v736 = vsel %vm734, %v710, 0
      %v739 = vsel %vm734, %v711, 0
      %v742 = vsel %vm734, %v712, 0
      %v745 = vsel %vm734, %v713, 0
      %v748 = vsel %vm734, %v714, 0
      %v751 = vsel %vm734, %v715, 0
      %v754 = vsel %vm734, %v716, 0
      %v757 = vsel %vm734, %v717, 0
      %v760 = vsel %vm734, %v718, 0
      %v763 = vsel %vm734, %v719, 0
      %v766 = vsel %vm734, %v720, 0
      %v769 = vsel %vm734, %v721, 0
      %v772 = vsel %vm734, %v722, 0
      %v775 = vsel %vm734, %v723, 0
      %v778 = vsel %vm734, %v724, 0
      %v781 = vsel %vm734, %v725, 0
      %783 = vmatpush.msra.mxu0 0.0
      %784 = vmatpush.msra.mxu0 0.0
      %785 = vmatpush.msra.mxu0 0.0
      %786 = vmatpush.msra.mxu0 0.0
      %787 = vmatpush.msra.mxu0 0.0
      %788 = vmatpush.msra.mxu0 0.0
      %789 = vmatpush.msra.mxu0 0.0
      %790 = vmatpush.msra.mxu0 0.0
      %791 = vmatpush.msra.mxu0 0.0
      %792 = vmatpush.msra.mxu0 0.0
      %793 = vmatpush.msra.mxu0 0.0
      %794 = vmatpush.msra.mxu0 0.0
      %795 = vmatpush.msra.mxu0 %v729
      %796 = vmatpush.msra.mxu0 %v728
      %797 = vmatpush.msra.mxu0 %v727
      %798 = vmatpush.msra.mxu0 %v726
      %799 = vmatmul.f32.gmra.mxu0 %v736
      %v800 = vpop.f32.mrf.mxu0
      %v801 = vadd.f32 %v732, %v800
      %802 = vmatmul.f32.gmra.mxu0 %v739
      %v803 = vpop.f32.mrf.mxu0
      %v804 = vadd.f32 %v732, %v803
      %805 = vmatmul.f32.gmra.mxu0 %v742
      %v806 = vpop.f32.mrf.mxu0
      %v807 = vadd.f32 %v732, %v806
      %808 = vmatmul.f32.gmra.mxu0 %v745
      %v809 = vpop.f32.mrf.mxu0
      %v810 = vadd.f32 %v732, %v809
      %811 = vmatmul.f32.gmra.mxu0 %v748
      %v812 = vpop.f32.mrf.mxu0
      %v813 = vadd.f32 %v732, %v812
      %814 = vmatmul.f32.gmra.mxu0 %v751
      %v815 = vpop.f32.mrf.mxu0
      %v816 = vadd.f32 %v732, %v815
      %817 = vmatmul.f32.gmra.mxu0 %v754
      %v818 = vpop.f32.mrf.mxu0
      %v819 = vadd.f32 %v732, %v818
      %820 = vmatmul.f32.gmra.mxu0 %v757
      %v821 = vpop.f32.mrf.mxu0
      %v822 = vadd.f32 %v732, %v821
      %823 = vmatmul.f32.gmra.mxu0 %v760
      %v824 = vpop.f32.mrf.mxu0
      %v825 = vadd.f32 %v732, %v824
      %826 = vmatmul.f32.gmra.mxu0 %v763
      %v827 = vpop.f32.mrf.mxu0
      %v828 = vadd.f32 %v732, %v827
      %829 = vmatmul.f32.gmra.mxu0 %v766
      %v830 = vpop.f32.mrf.mxu0
      %v831 = vadd.f32 %v732, %v830
      %832 = vmatmul.f32.gmra.mxu0 %v769
      %v833 = vpop.f32.mrf.mxu0
      %v834 = vadd.f32 %v732, %v833
      %835 = vmatmul.f32.gmra.mxu0 %v772
      %v836 = vpop.f32.mrf.mxu0
      %v837 = vadd.f32 %v732, %v836
      %838 = vmatmul.f32.gmra.mxu0 %v775
      %v839 = vpop.f32.mrf.mxu0
      %v840 = vadd.f32 %v732, %v839
      %841 = vmatmul.f32.gmra.mxu0 %v778
      %v842 = vpop.f32.mrf.mxu0
      %v843 = vadd.f32 %v732, %v842
      %844 = vmatmul.f32.gmra.mxu0 %v781
      %v845 = vpop.f32.mrf.mxu0
      %v846 = vadd.f32 %v732, %v845
      %847 = vdwg.mxu0
      %v848 = vxor.u32 %v801, 2147483648
      %v849 = vxor.u32 %v804, 2147483648
      %v850 = vxor.u32 %v807, 2147483648
      %v851 = vxor.u32 %v810, 2147483648
      %v852 = vxor.u32 %v813, 2147483648
      %v853 = vxor.u32 %v816, 2147483648
      %v854 = vxor.u32 %v819, 2147483648
      %v855 = vxor.u32 %v822, 2147483648
      %v856 = vxor.u32 %v825, 2147483648
      %v857 = vxor.u32 %v828, 2147483648
      %v858 = vxor.u32 %v831, 2147483648
      %v859 = vxor.u32 %v834, 2147483648
      %v860 = vxor.u32 %v837, 2147483648
      %v861 = vxor.u32 %v840, 2147483648
      %v862 = vxor.u32 %v843, 2147483648
      %v863 = vxor.u32 %v846, 2147483648
      %v864 = vmul.f32 %v848, 1.442695
      %v865 = vpow.pop %v864
      %v866 = vmul.f32 %v849, 1.442695
      %v867 = vpow.pop %v866
      %v868 = vmul.f32 %v850, 1.442695
      %v869 = vpow.pop %v868
      %v870 = vmul.f32 %v851, 1.442695
      %v871 = vpow.pop %v870
      %v872 = vmul.f32 %v852, 1.442695
      %v873 = vpow.pop %v872
      %v874 = vmul.f32 %v853, 1.442695
      %v875 = vpow.pop %v874
      %v876 = vmul.f32 %v854, 1.442695
      %v877 = vpow.pop %v876
      %v878 = vmul.f32 %v855, 1.442695
      %v879 = vpow.pop %v878
      %v880 = vmul.f32 %v856, 1.442695
      %v881 = vpow.pop %v880
      %v882 = vmul.f32 %v857, 1.442695
      %v883 = vpow.pop %v882
      %v884 = vmul.f32 %v858, 1.442695
      %v885 = vpow.pop %v884
      %v886 = vmul.f32 %v859, 1.442695
      %v887 = vpow.pop %v886
      %v888 = vmul.f32 %v860, 1.442695
      %v889 = vpow.pop %v888
      %v890 = vmul.f32 %v861, 1.442695
      %v891 = vpow.pop %v890
      %v892 = vmul.f32 %v862, 1.442695
      %v893 = vpow.pop %v892
      %v894 = vmul.f32 %v863, 1.442695
      %v895 = vpow.pop %v894
      %v896 = vadd.f32 %v865, 1.0
      %v897 = vadd.f32 %v867, 1.0
      %v898 = vadd.f32 %v869, 1.0
      %v899 = vadd.f32 %v871, 1.0
      %v900 = vadd.f32 %v873, 1.0
      %v901 = vadd.f32 %v875, 1.0
      %v902 = vadd.f32 %v877, 1.0
      %v903 = vadd.f32 %v879, 1.0
      %v904 = vadd.f32 %v881, 1.0
      %v905 = vadd.f32 %v883, 1.0
      %v906 = vadd.f32 %v885, 1.0
      %v907 = vadd.f32 %v887, 1.0
      %v908 = vadd.f32 %v889, 1.0
      %v909 = vadd.f32 %v891, 1.0
      %v910 = vadd.f32 %v893, 1.0
      %v911 = vadd.f32 %v895, 1.0
      %v912 = vrcp.pop %v896
      %v913 = vmul.f32 %v896, %v912
      %v914 = vsub.f32 1.0, %v913
      %v915 = vmul.f32 %v912, %v914
      %v916 = vadd.f32 %v912, %v915
      %vm917 = vweird.f32 %v896
      %vm918 = vweird.f32 %v912
      %vm919 = vmor %vm917, %vm918
      %v920 = vsel %vm919, %v912, %v916
      %v921 = vand.u32 2147483647, %v896
      %vm922 = vcmp.eq.f32.partialorder %v921, 8.507059e+37
      %v923 = vand.u32 %v896, 2147483648
      %v924 = vor.u32 1.1754944e-38, %v923
      %v925 = vsel %vm922, %v924, %v920
      %v926 = vmul.f32 1.0, %v925
      %v927 = vrcp.pop %v897
      %v928 = vmul.f32 %v897, %v927
      %v929 = vsub.f32 1.0, %v928
      %v930 = vmul.f32 %v927, %v929
      %v931 = vadd.f32 %v927, %v930
      %vm932 = vweird.f32 %v897
      %vm933 = vweird.f32 %v927
      %vm934 = vmor %vm932, %vm933
      %v935 = vsel %vm934, %v927, %v931
      %v936 = vand.u32 2147483647, %v897
      %vm937 = vcmp.eq.f32.partialorder %v936, 8.507059e+37
      %v938 = vand.u32 %v897, 2147483648
      %v939 = vor.u32 1.1754944e-38, %v938
      %v940 = vsel %vm937, %v939, %v935
      %v941 = vmul.f32 1.0, %v940
      %v942 = vrcp.pop %v898
      %v943 = vmul.f32 %v898, %v942
      %v944 = vsub.f32 1.0, %v943
      %v945 = vmul.f32 %v942, %v944
      %v946 = vadd.f32 %v942, %v945
      %vm947 = vweird.f32 %v898
      %vm948 = vweird.f32 %v942
      %vm949 = vmor %vm947, %vm948
      %v950 = vsel %vm949, %v942, %v946
      %v951 = vand.u32 2147483647, %v898
      %vm952 = vcmp.eq.f32.partialorder %v951, 8.507059e+37
      %v953 = vand.u32 %v898, 2147483648
      %v954 = vor.u32 1.1754944e-38, %v953
      %v955 = vsel %vm952, %v954, %v950
      %v956 = vmul.f32 1.0, %v955
      %v957 = vrcp.pop %v899
      %v958 = vmul.f32 %v899, %v957
      %v959 = vsub.f32 1.0, %v958
      %v960 = vmul.f32 %v957, %v959
      %v961 = vadd.f32 %v957, %v960
      %vm962 = vweird.f32 %v899
      %vm963 = vweird.f32 %v957
      %vm964 = vmor %vm962, %vm963
      %v965 = vsel %vm964, %v957, %v961
      %v966 = vand.u32 2147483647, %v899
      %vm967 = vcmp.eq.f32.partialorder %v966, 8.507059e+37
      %v968 = vand.u32 %v899, 2147483648
      %v969 = vor.u32 1.1754944e-38, %v968
      %v970 = vsel %vm967, %v969, %v965
      %v971 = vmul.f32 1.0, %v970
      %v972 = vrcp.pop %v900
      %v973 = vmul.f32 %v900, %v972
      %v974 = vsub.f32 1.0, %v973
      %v975 = vmul.f32 %v972, %v974
      %v976 = vadd.f32 %v972, %v975
      %vm977 = vweird.f32 %v900
      %vm978 = vweird.f32 %v972
      %vm979 = vmor %vm977, %vm978
      %v980 = vsel %vm979, %v972, %v976
      %v981 = vand.u32 2147483647, %v900
      %vm982 = vcmp.eq.f32.partialorder %v981, 8.507059e+37
      %v983 = vand.u32 %v900, 2147483648
      %v984 = vor.u32 1.1754944e-38, %v983
      %v985 = vsel %vm982, %v984, %v980
      %v986 = vmul.f32 1.0, %v985
      %v987 = vrcp.pop %v901
      %v988 = vmul.f32 %v901, %v987
      %v989 = vsub.f32 1.0, %v988
      %v990 = vmul.f32 %v987, %v989
      %v991 = vadd.f32 %v987, %v990
      %vm992 = vweird.f32 %v901
      %vm993 = vweird.f32 %v987
      %vm994 = vmor %vm992, %vm993
      %v995 = vsel %vm994, %v987, %v991
      %v996 = vand.u32 2147483647, %v901
      %vm997 = vcmp.eq.f32.partialorder %v996, 8.507059e+37
      %v998 = vand.u32 %v901, 2147483648
      %v999 = vor.u32 1.1754944e-38, %v998
      %v1000 = vsel %vm997, %v999, %v995
      %v1001 = vmul.f32 1.0, %v1000
      %v1002 = vrcp.pop %v902
      %v1003 = vmul.f32 %v902, %v1002
      %v1004 = vsub.f32 1.0, %v1003
      %v1005 = vmul.f32 %v1002, %v1004
      %v1006 = vadd.f32 %v1002, %v1005
      %vm1007 = vweird.f32 %v902
      %vm1008 = vweird.f32 %v1002
      %vm1009 = vmor %vm1007, %vm1008
      %v1010 = vsel %vm1009, %v1002, %v1006
      %v1011 = vand.u32 2147483647, %v902
      %vm1012 = vcmp.eq.f32.partialorder %v1011, 8.507059e+37
      %v1013 = vand.u32 %v902, 2147483648
      %v1014 = vor.u32 1.1754944e-38, %v1013
      %v1015 = vsel %vm1012, %v1014, %v1010
      %v1016 = vmul.f32 1.0, %v1015
      %v1017 = vrcp.pop %v903
      %v1018 = vmul.f32 %v903, %v1017
      %v1019 = vsub.f32 1.0, %v1018
      %v1020 = vmul.f32 %v1017, %v1019
      %v1021 = vadd.f32 %v1017, %v1020
      %vm1022 = vweird.f32 %v903
      %vm1023 = vweird.f32 %v1017
      %vm1024 = vmor %vm1022, %vm1023
      %v1025 = vsel %vm1024, %v1017, %v1021
      %v1026 = vand.u32 2147483647, %v903
      %vm1027 = vcmp.eq.f32.partialorder %v1026, 8.507059e+37
      %v1028 = vand.u32 %v903, 2147483648
      %v1029 = vor.u32 1.1754944e-38, %v1028
      %v1030 = vsel %vm1027, %v1029, %v1025
      %v1031 = vmul.f32 1.0, %v1030
      %v1032 = vrcp.pop %v904
      %v1033 = vmul.f32 %v904, %v1032
      %v1034 = vsub.f32 1.0, %v1033
      %v1035 = vmul.f32 %v1032, %v1034
      %v1036 = vadd.f32 %v1032, %v1035
      %vm1037 = vweird.f32 %v904
      %vm1038 = vweird.f32 %v1032
      %vm1039 = vmor %vm1037, %vm1038
      %v1040 = vsel %vm1039, %v1032, %v1036
      %v1041 = vand.u32 2147483647, %v904
      %vm1042 = vcmp.eq.f32.partialorder %v1041, 8.507059e+37
      %v1043 = vand.u32 %v904, 2147483648
      %v1044 = vor.u32 1.1754944e-38, %v1043
      %v1045 = vsel %vm1042, %v1044, %v1040
      %v1046 = vmul.f32 1.0, %v1045
      %v1047 = vrcp.pop %v905
      %v1048 = vmul.f32 %v905, %v1047
      %v1049 = vsub.f32 1.0, %v1048
      %v1050 = vmul.f32 %v1047, %v1049
      %v1051 = vadd.f32 %v1047, %v1050
      %vm1052 = vweird.f32 %v905
      %vm1053 = vweird.f32 %v1047
      %vm1054 = vmor %vm1052, %vm1053
      %v1055 = vsel %vm1054, %v1047, %v1051
      %v1056 = vand.u32 2147483647, %v905
      %vm1057 = vcmp.eq.f32.partialorder %v1056, 8.507059e+37
      %v1058 = vand.u32 %v905, 2147483648
      %v1059 = vor.u32 1.1754944e-38, %v1058
      %v1060 = vsel %vm1057, %v1059, %v1055
      %v1061 = vmul.f32 1.0, %v1060
      %v1062 = vrcp.pop %v906
      %v1063 = vmul.f32 %v906, %v1062
      %v1064 = vsub.f32 1.0, %v1063
      %v1065 = vmul.f32 %v1062, %v1064
      %v1066 = vadd.f32 %v1062, %v1065
      %vm1067 = vweird.f32 %v906
      %vm1068 = vweird.f32 %v1062
      %vm1069 = vmor %vm1067, %vm1068
      %v1070 = vsel %vm1069, %v1062, %v1066
      %v1071 = vand.u32 2147483647, %v906
      %vm1072 = vcmp.eq.f32.partialorder %v1071, 8.507059e+37
      %v1073 = vand.u32 %v906, 2147483648
      %v1074 = vor.u32 1.1754944e-38, %v1073
      %v1075 = vsel %vm1072, %v1074, %v1070
      %v1076 = vmul.f32 1.0, %v1075
      %v1077 = vrcp.pop %v907
      %v1078 = vmul.f32 %v907, %v1077
      %v1079 = vsub.f32 1.0, %v1078
      %v1080 = vmul.f32 %v1077, %v1079
      %v1081 = vadd.f32 %v1077, %v1080
      %vm1082 = vweird.f32 %v907
      %vm1083 = vweird.f32 %v1077
      %vm1084 = vmor %vm1082, %vm1083
      %v1085 = vsel %vm1084, %v1077, %v1081
      %v1086 = vand.u32 2147483647, %v907
      %vm1087 = vcmp.eq.f32.partialorder %v1086, 8.507059e+37
      %v1088 = vand.u32 %v907, 2147483648
      %v1089 = vor.u32 1.1754944e-38, %v1088
      %v1090 = vsel %vm1087, %v1089, %v1085
      %v1091 = vmul.f32 1.0, %v1090
      %v1092 = vrcp.pop %v908
      %v1093 = vmul.f32 %v908, %v1092
      %v1094 = vsub.f32 1.0, %v1093
      %v1095 = vmul.f32 %v1092, %v1094
      %v1096 = vadd.f32 %v1092, %v1095
      %vm1097 = vweird.f32 %v908
      %vm1098 = vweird.f32 %v1092
      %vm1099 = vmor %vm1097, %vm1098
      %v1100 = vsel %vm1099, %v1092, %v1096
      %v1101 = vand.u32 2147483647, %v908
      %vm1102 = vcmp.eq.f32.partialorder %v1101, 8.507059e+37
      %v1103 = vand.u32 %v908, 2147483648
      %v1104 = vor.u32 1.1754944e-38, %v1103
      %v1105 = vsel %vm1102, %v1104, %v1100
      %v1106 = vmul.f32 1.0, %v1105
      %v1107 = vrcp.pop %v909
      %v1108 = vmul.f32 %v909, %v1107
      %v1109 = vsub.f32 1.0, %v1108
      %v1110 = vmul.f32 %v1107, %v1109
      %v1111 = vadd.f32 %v1107, %v1110
      %vm1112 = vweird.f32 %v909
      %vm1113 = vweird.f32 %v1107
      %vm1114 = vmor %vm1112, %vm1113
      %v1115 = vsel %vm1114, %v1107, %v1111
      %v1116 = vand.u32 2147483647, %v909
      %vm1117 = vcmp.eq.f32.partialorder %v1116, 8.507059e+37
      %v1118 = vand.u32 %v909, 2147483648
      %v1119 = vor.u32 1.1754944e-38, %v1118
      %v1120 = vsel %vm1117, %v1119, %v1115
      %v1121 = vmul.f32 1.0, %v1120
      %v1122 = vrcp.pop %v910
      %v1123 = vmul.f32 %v910, %v1122
      %v1124 = vsub.f32 1.0, %v1123
      %v1125 = vmul.f32 %v1122, %v1124
      %v1126 = vadd.f32 %v1122, %v1125
      %vm1127 = vweird.f32 %v910
      %vm1128 = vweird.f32 %v1122
      %vm1129 = vmor %vm1127, %vm1128
      %v1130 = vsel %vm1129, %v1122, %v1126
      %v1131 = vand.u32 2147483647, %v910
      %vm1132 = vcmp.eq.f32.partialorder %v1131, 8.507059e+37
      %v1133 = vand.u32 %v910, 2147483648
      %v1134 = vor.u32 1.1754944e-38, %v1133
      %v1135 = vsel %vm1132, %v1134, %v1130
      %v1136 = vmul.f32 1.0, %v1135
      %v1137 = vrcp.pop %v911
      %v1138 = vmul.f32 %v911, %v1137
      %v1139 = vsub.f32 1.0, %v1138
      %v1140 = vmul.f32 %v1137, %v1139
      %v1141 = vadd.f32 %v1137, %v1140
      %vm1142 = vweird.f32 %v911
      %vm1143 = vweird.f32 %v1137
      %vm1144 = vmor %vm1142, %vm1143
      %v1145 = vsel %vm1144, %v1137, %v1141
      %v1146 = vand.u32 2147483647, %v911
      %vm1147 = vcmp.eq.f32.partialorder %v1146, 8.507059e+37
      %v1148 = vand.u32 %v911, 2147483648
      %v1149 = vor.u32 1.1754944e-38, %v1148
      %v1150 = vsel %vm1147, %v1149, %v1145
      %v1151 = vmul.f32 1.0, %v1150
      %v1152 = vmul.f32 %v801, %v926
      %v1153 = vmul.f32 %v804, %v941
      %v1154 = vmul.f32 %v807, %v956
      %v1155 = vmul.f32 %v810, %v971
      %v1156 = vmul.f32 %v813, %v986
      %v1157 = vmul.f32 %v816, %v1001
      %v1158 = vmul.f32 %v819, %v1016
      %v1159 = vmul.f32 %v822, %v1031
      %v1160 = vmul.f32 %v825, %v1046
      %v1161 = vmul.f32 %v828, %v1061
      %v1162 = vmul.f32 %v831, %v1076
      %v1163 = vmul.f32 %v834, %v1091
      %v1164 = vmul.f32 %v837, %v1106
      %v1165 = vmul.f32 %v840, %v1121
      %v1166 = vmul.f32 %v843, %v1136
      %v1167 = vmul.f32 %v846, %v1151
      %v1168 = vld [vmem:[%s5] sm:$0xff]
      %v1169 = vld [vmem:[%s5 + $0x8] sm:$0xff]
      %v1170 = vld [vmem:[%s5 + $0x10] sm:$0xff]
      %v1171 = vld [vmem:[%s5 + $0x18] sm:$0xff]
      %v1172 = vld [vmem:[%s6] sm:$0x1]
      %v1174 = vperm.slane %v1172, 0
      %v1177 = vsel %vm734, %v1152, 0
      %v1180 = vsel %vm734, %v1153, 0
      %v1183 = vsel %vm734, %v1154, 0
      %v1186 = vsel %vm734, %v1155, 0
      %v1189 = vsel %vm734, %v1156, 0
      %v1192 = vsel %vm734, %v1157, 0
      %v1195 = vsel %vm734, %v1158, 0
      %v1198 = vsel %vm734, %v1159, 0
      %v1201 = vsel %vm734, %v1160, 0
      %v1204 = vsel %vm734, %v1161, 0
      %v1207 = vsel %vm734, %v1162, 0
      %v1210 = vsel %vm734, %v1163, 0
      %v1213 = vsel %vm734, %v1164, 0
      %v1216 = vsel %vm734, %v1165, 0
      %v1219 = vsel %vm734, %v1166, 0
      %v1222 = vsel %vm734, %v1167, 0
      %1224 = vmatpush.msra.mxu0 0.0
      %1225 = vmatpush.msra.mxu0 0.0
      %1226 = vmatpush.msra.mxu0 0.0
      %1227 = vmatpush.msra.mxu0 0.0
      %1228 = vmatpush.msra.mxu0 0.0
      %1229 = vmatpush.msra.mxu0 0.0
      %1230 = vmatpush.msra.mxu0 0.0
      %1231 = vmatpush.msra.mxu0 0.0
      %1232 = vmatpush.msra.mxu0 0.0
      %1233 = vmatpush.msra.mxu0 0.0
      %1234 = vmatpush.msra.mxu0 0.0
      %1235 = vmatpush.msra.mxu0 0.0
      %1236 = vmatpush.msra.mxu0 %v1171
      %1237 = vmatpush.msra.mxu0 %v1170
      %1238 = vmatpush.msra.mxu0 %v1169
      %1239 = vmatpush.msra.mxu0 %v1168
      %1240 = vmatmul.f32.gmra.mxu0 %v1177
      %v1241 = vpop.f32.mrf.mxu0
      %v1242 = vadd.f32 %v1174, %v1241
      %1243 = vmatmul.f32.gmra.mxu0 %v1180
      %v1244 = vpop.f32.mrf.mxu0
      %v1245 = vadd.f32 %v1174, %v1244
      %1246 = vmatmul.f32.gmra.mxu0 %v1183
      %v1247 = vpop.f32.mrf.mxu0
      %v1248 = vadd.f32 %v1174, %v1247
      %1249 = vmatmul.f32.gmra.mxu0 %v1186
      %v1250 = vpop.f32.mrf.mxu0
      %v1251 = vadd.f32 %v1174, %v1250
      %1252 = vmatmul.f32.gmra.mxu0 %v1189
      %v1253 = vpop.f32.mrf.mxu0
      %v1254 = vadd.f32 %v1174, %v1253
      %1255 = vmatmul.f32.gmra.mxu0 %v1192
      %v1256 = vpop.f32.mrf.mxu0
      %v1257 = vadd.f32 %v1174, %v1256
      %1258 = vmatmul.f32.gmra.mxu0 %v1195
      %v1259 = vpop.f32.mrf.mxu0
      %v1260 = vadd.f32 %v1174, %v1259
      %1261 = vmatmul.f32.gmra.mxu0 %v1198
      %v1262 = vpop.f32.mrf.mxu0
      %v1263 = vadd.f32 %v1174, %v1262
      %1264 = vmatmul.f32.gmra.mxu0 %v1201
      %v1265 = vpop.f32.mrf.mxu0
      %v1266 = vadd.f32 %v1174, %v1265
      %1267 = vmatmul.f32.gmra.mxu0 %v1204
      %v1268 = vpop.f32.mrf.mxu0
      %v1269 = vadd.f32 %v1174, %v1268
      %1270 = vmatmul.f32.gmra.mxu0 %v1207
      %v1271 = vpop.f32.mrf.mxu0
      %v1272 = vadd.f32 %v1174, %v1271
      %1273 = vmatmul.f32.gmra.mxu0 %v1210
      %v1274 = vpop.f32.mrf.mxu0
      %v1275 = vadd.f32 %v1174, %v1274
      %1276 = vmatmul.f32.gmra.mxu0 %v1213
      %v1277 = vpop.f32.mrf.mxu0
      %v1278 = vadd.f32 %v1174, %v1277
      %1279 = vmatmul.f32.gmra.mxu0 %v1216
      %v1280 = vpop.f32.mrf.mxu0
      %v1281 = vadd.f32 %v1174, %v1280
      %1282 = vmatmul.f32.gmra.mxu0 %v1219
      %v1283 = vpop.f32.mrf.mxu0
      %v1284 = vadd.f32 %v1174, %v1283
      %1285 = vmatmul.f32.gmra.mxu0 %v1222
      %v1286 = vpop.f32.mrf.mxu0
      %v1287 = vadd.f32 %v1174, %v1286
      %1288 = vdwg.mxu0
      %v1289 = vmul.f32 %v326, %v1242
      %v1290 = vmul.f32 %v327, %v1245
      %v1291 = vmul.f32 %v328, %v1248
      %v1292 = vmul.f32 %v329, %v1251
      %v1293 = vmul.f32 %v330, %v1254
      %v1294 = vmul.f32 %v331, %v1257
      %v1295 = vmul.f32 %v332, %v1260
      %v1296 = vmul.f32 %v333, %v1263
      %v1297 = vmul.f32 %v334, %v1266
      %v1298 = vmul.f32 %v335, %v1269
      %v1299 = vmul.f32 %v336, %v1272
      %v1300 = vmul.f32 %v337, %v1275
      %v1301 = vmul.f32 %v338, %v1278
      %v1302 = vmul.f32 %v339, %v1281
      %v1303 = vmul.f32 %v340, %v1284
      %v1304 = vmul.f32 %v341, %v1287
      %1305 = vst.msk [vmem:[%s324] sm:$0xff] %vm734, %v1289
      %1306 = vst.msk [vmem:[%s324 + $0x8] sm:$0xff] %vm734, %v1290
      %1307 = vst.msk [vmem:[%s324 + $0x10] sm:$0xff] %vm734, %v1291
      %1308 = vst.msk [vmem:[%s324 + $0x18] sm:$0xff] %vm734, %v1292
      %1309 = vst.msk [vmem:[%s324 + $0x20] sm:$0xff] %vm734, %v1293
      %1310 = vst.msk [vmem:[%s324 + $0x28] sm:$0xff] %vm734, %v1294
      %1311 = vst.msk [vmem:[%s324 + $0x30] sm:$0xff] %vm734, %v1295
      %1312 = vst.msk [vmem:[%s324 + $0x38] sm:$0xff] %vm734, %v1296
      %1313 = vst.msk [vmem:[%s324 + $0x40] sm:$0xff] %vm734, %v1297
      %1314 = vst.msk [vmem:[%s324 + $0x48] sm:$0xff] %vm734, %v1298
      %1315 = vst.msk [vmem:[%s324 + $0x50] sm:$0xff] %vm734, %v1299
      %1316 = vst.msk [vmem:[%s324 + $0x58] sm:$0xff] %vm734, %v1300
      %1317 = vst.msk [vmem:[%s324 + $0x60] sm:$0xff] %vm734, %v1301
      %1318 = vst.msk [vmem:[%s324 + $0x68] sm:$0xff] %vm734, %v1302
      %1319 = vst.msk [vmem:[%s324 + $0x70] sm:$0xff] %vm734, %v1303
      %1320 = vst.msk [vmem:[%s324 + $0x78] sm:$0xff] %vm734, %v1304
      %s1321 = smul.u32 16, %s18
      %p1322 = scmp.lt.s32.totalorder %s1321, 31
      %s1323 = scalar_select %p1322, %s1321, 31
      %s1324 = smul.addr %s1323, 8
      %s1325 = scalar_lea.vmem %s7, %s1324
      // Predicated region
      $region49: #{gamdnet_forward.10} parent=47 // pred_check
        %p1326 = pneg %p198
      $region50: #{gamdnet_forward.10} parent=47 // pred_check_branch
        %1328 = sbr.rel (%p1326) target = $region52
      $region51: #{gamdnet_forward.10} parent=47 // pred_region
        %s1329 = smul.u32 16, %s18
      $region52: #{gamdnet_forward.10} parent=47 // pred_fallthru
        _
    $region48: #{gamdnet_forward.10} parent=5 // pred_fallthru
      _
    %p1330 = scmp.le.s32.totalorder 2, %s13
    // Predicated region
    $region53: #{gamdnet_forward.10} parent=5 // pred_check
      %p1331 = pneg %p1330
    $region54: #{gamdnet_forward.10} parent=5 // pred_check_branch
      %1333 = sbr.rel (%p1331) target = $region56
    $region55: #{gamdnet_forward.10} parent=5 // pred_region
      %s1334 = ssub.s32 %s13, 2
      // Predicated region
      $region57: #{gamdnet_forward.10} parent=55 // pred_check
        %p1335 = pneg %p204
      $region58: #{gamdnet_forward.10} parent=55 // pred_check_branch
        %1337 = sbr.rel (%p1335) target = $region60
      $region59: #{gamdnet_forward.10} parent=55 // pred_region
        %s1338 = smul.u32 16, %s19
        %p1339 = scmp.lt.s32.totalorder %s1338, 31
        %s1340 = scalar_select %p1339, %s1338, 31
        %s1341 = smul.addr %s1340, 8
        %s1342 = scalar_lea.vmem %s7, %s1341
      $region60: #{gamdnet_forward.10} parent=55 // pred_fallthru
        _
    $region56: #{gamdnet_forward.10} parent=5 // pred_fallthru
      _
  $region6: #{gamdnet_forward.10} parent=0 // loop_footer
    %s17 = sadd.s32 1, %s13
  $region7: #{gamdnet_forward.10} parent=0 // loop_footer_branch
    %12 = sbr.rel target = $region3
  $region8: #{gamdnet_forward.10} parent=0 // loop_exit
    _

// kernel: gamdnet_forward.8
$region0: #{gamdnet_forward.8}
  #allocation0 [shape = 'u32[]', space=smem, size = 0x4, offset = 0x4, fixed_abs, tag = 'smem constant byte address 0x4 - core index']
  #allocation1 [shape = 'u32[72,128]{1,0:T(1,128)}', space=vmem, size = 0x9000, scoped, tag = 'internal scratch']
  %s0 = inlined_call_operand.vmem [shape: f32[256,3], index: 0, kind: input, shape index: {}]
  %s1 = inlined_call_operand.vmem [shape: f32[3,32], index: 1, kind: input, shape index: {}]
  %s2 = inlined_call_operand.vmem [shape: f32[1,32], index: 2, kind: input, shape index: {}]
  %s3 = inlined_call_operand.vmem [shape: f32[32,32], index: 3, kind: input, shape index: {}]
  %s4 = inlined_call_operand.vmem [shape: f32[1,32], index: 4, kind: input, shape index: {}]
  %s5 = inlined_call_operand.vmem [shape: f32[32,32], index: 5, kind: input, shape index: {}]
  %s6 = inlined_call_operand.vmem [shape: f32[1,32], index: 6, kind: input, shape index: {}]
  %s7 = inlined_call_operand.vmem [shape: f32[1,32], index: 7, kind: input, shape index: {}]
  %s8 = inlined_call_operand.vmem [shape: f32[1,32], index: 8, kind: input, shape index: {}]
  %s9 = inlined_call_operand.vmem [shape: f32[256,32], index: 9, kind: output, shape index: {}]
  %s10 = sld [smem:[#allocation0]]
  $region69: #{gamdnet_forward.8} parent=0
    _
  %s12 = ssub.s32 1, %s10
  %s13 = scalar_select 0, %s12, %s10
  loop: start=0, step=1, limit=4
  $region2: #{gamdnet_forward.8} parent=0 // loop_pre_header
    _
  $region3: #{gamdnet_forward.8} parent=0 // loop_header
    %s15 = sphi 0, %s19
    %p16 = scmp.ge.s32.totalorder %s15, 4
    %s25 = sphi 0, %s27
    %s28 = sphi 0, %s25
    %s29 = sphi 0, %s28
    %s45 = sphi 0, %s29
    %s49 = sphi 0, %s49
    %s51 = sphi 0, %s49
    %s52 = sphi 0, %s51
    %s66 = sphi 0, %s52
    %s70 = sphi 0, %s70
    %s72 = sphi 0, %s70
    %s73 = sphi 0, %s72
    %s87 = sphi 0, %s73
    %s91 = sphi 0, %s91
    %s93 = sphi 0, %s91
    %s94 = sphi 0, %s93
    %s108 = sphi 0, %s94
    %s112 = sphi 0, %s112
    %s114 = sphi 0, %s112
    %s115 = sphi 0, %s114
    %s129 = sphi 0, %s115
    %s133 = sphi 0, %s133
    %s135 = sphi 0, %s133
    %s136 = sphi 0, %s135
    %s150 = sphi 0, %s136
    %s154 = sphi 0, %s154
    %s156 = sphi 0, %s154
    %s157 = sphi 0, %s156
    %s171 = sphi 0, %s157
    %s175 = sphi 0, %s175
    %s177 = sphi 0, %s175
    %s178 = sphi 0, %s177
    %s192 = sphi 0, %s178
    %s196 = sphi 0, %s196
    %s198 = sphi 0, %s196
    %s199 = sphi 0, %s198
    %s213 = sphi 0, %s199
    %s219 = sphi 0, %s221
    %s222 = sphi 0, %s219
    %s223 = sphi 0, %s222
    %s239 = sphi 0, %s223
  $region4: #{gamdnet_forward.8} parent=0 // loop_header_branch
    %18 = sbr.rel (%p16) target = $region8
  $region5: #{gamdnet_forward.8} parent=0 // loop_body
    %s20 = ssub.s32 %s15, 1
    %s21 = ssub.s32 %s15, 2
    %s22 = sadd.s32 %s15, 1
    %s23 = ssub.s32 %s15, %s22
    %p24 = scmp.eq.s32.totalorder %s23, 0
    %s26 = sadd.s32 %s25, 1
    %s27 = scalar_select %p24, %s25, %s26
    %p30 = pneg %p24
    %p31 = scmp.eq.s32.totalorder %s15, 1
    %p32 = por %p30, %p31
    %p33 = scmp.ne.s32.totalorder %s25, %s28
    %p34 = scmp.eq.s32.totalorder %s15, 0
    %p35 = por %p33, %p34
    %p36 = scmp.ne.s32.totalorder %s25, %s28
    %p37 = scmp.eq.s32.totalorder %s20, 1
    %p38 = por %p36, %p37
    %p39 = scmp.ne.s32.totalorder %s28, %s29
    %p40 = scmp.eq.s32.totalorder %s20, 0
    %p41 = por %p39, %p40
    %p42 = scmp.ne.s32.totalorder %s28, %s29
    %p43 = scmp.eq.s32.totalorder %s21, 1
    %p44 = por %p42, %p43
    %p46 = scmp.ne.s32.totalorder %s29, %s45
    %p47 = scmp.eq.s32.totalorder %s21, 0
    %p48 = por %p46, %p47
    %s50 = sadd.s32 %s49, 1
    %p53 = scmp.eq.s32.totalorder %s15, 1
    %p54 = scmp.ne.s32.totalorder %s49, %s51
    %p55 = scmp.eq.s32.totalorder %s15, 0
    %p56 = por %p54, %p55
    %p57 = scmp.ne.s32.totalorder %s49, %s51
    %p58 = scmp.eq.s32.totalorder %s20, 1
    %p59 = por %p57, %p58
    %p60 = scmp.ne.s32.totalorder %s51, %s52
    %p61 = scmp.eq.s32.totalorder %s20, 0
    %p62 = por %p60, %p61
    %p63 = scmp.ne.s32.totalorder %s51, %s52
    %p64 = scmp.eq.s32.totalorder %s21, 1
    %p65 = por %p63, %p64
    %p67 = scmp.ne.s32.totalorder %s52, %s66
    %p68 = scmp.eq.s32.totalorder %s21, 0
    %p69 = por %p67, %p68
    %s71 = sadd.s32 %s70, 1
    %p74 = scmp.eq.s32.totalorder %s15, 1
    %p75 = scmp.ne.s32.totalorder %s70, %s72
    %p76 = scmp.eq.s32.totalorder %s15, 0
    %p77 = por %p75, %p76
    %p78 = scmp.ne.s32.totalorder %s70, %s72
    %p79 = scmp.eq.s32.totalorder %s20, 1
    %p80 = por %p78, %p79
    %p81 = scmp.ne.s32.totalorder %s72, %s73
    %p82 = scmp.eq.s32.totalorder %s20, 0
    %p83 = por %p81, %p82
    %p84 = scmp.ne.s32.totalorder %s72, %s73
    %p85 = scmp.eq.s32.totalorder %s21, 1
    %p86 = por %p84, %p85
    %p88 = scmp.ne.s32.totalorder %s73, %s87
    %p89 = scmp.eq.s32.totalorder %s21, 0
    %p90 = por %p88, %p89
    %s92 = sadd.s32 %s91, 1
    %p95 = scmp.eq.s32.totalorder %s15, 1
    %p96 = scmp.ne.s32.totalorder %s91, %s93
    %p97 = scmp.eq.s32.totalorder %s15, 0
    %p98 = por %p96, %p97
    %p99 = scmp.ne.s32.totalorder %s91, %s93
    %p100 = scmp.eq.s32.totalorder %s20, 1
    %p101 = por %p99, %p100
    %p102 = scmp.ne.s32.totalorder %s93, %s94
    %p103 = scmp.eq.s32.totalorder %s20, 0
    %p104 = por %p102, %p103
    %p105 = scmp.ne.s32.totalorder %s93, %s94
    %p106 = scmp.eq.s32.totalorder %s21, 1
    %p107 = por %p105, %p106
    %p109 = scmp.ne.s32.totalorder %s94, %s108
    %p110 = scmp.eq.s32.totalorder %s21, 0
    %p111 = por %p109, %p110
    %s113 = sadd.s32 %s112, 1
    %p116 = scmp.eq.s32.totalorder %s15, 1
    %p117 = scmp.ne.s32.totalorder %s112, %s114
    %p118 = scmp.eq.s32.totalorder %s15, 0
    %p119 = por %p117, %p118
    %p120 = scmp.ne.s32.totalorder %s112, %s114
    %p121 = scmp.eq.s32.totalorder %s20, 1
    %p122 = por %p120, %p121
    %p123 = scmp.ne.s32.totalorder %s114, %s115
    %p124 = scmp.eq.s32.totalorder %s20, 0
    %p125 = por %p123, %p124
    %p126 = scmp.ne.s32.totalorder %s114, %s115
    %p127 = scmp.eq.s32.totalorder %s21, 1
    %p128 = por %p126, %p127
    %p130 = scmp.ne.s32.totalorder %s115, %s129
    %p131 = scmp.eq.s32.totalorder %s21, 0
    %p132 = por %p130, %p131
    %s134 = sadd.s32 %s133, 1
    %p137 = scmp.eq.s32.totalorder %s15, 1
    %p138 = scmp.ne.s32.totalorder %s133, %s135
    %p139 = scmp.eq.s32.totalorder %s15, 0
    %p140 = por %p138, %p139
    %p141 = scmp.ne.s32.totalorder %s133, %s135
    %p142 = scmp.eq.s32.totalorder %s20, 1
    %p143 = por %p141, %p142
    %p144 = scmp.ne.s32.totalorder %s135, %s136
    %p145 = scmp.eq.s32.totalorder %s20, 0
    %p146 = por %p144, %p145
    %p147 = scmp.ne.s32.totalorder %s135, %s136
    %p148 = scmp.eq.s32.totalorder %s21, 1
    %p149 = por %p147, %p148
    %p151 = scmp.ne.s32.totalorder %s136, %s150
    %p152 = scmp.eq.s32.totalorder %s21, 0
    %p153 = por %p151, %p152
    %s155 = sadd.s32 %s154, 1
    %p158 = scmp.eq.s32.totalorder %s15, 1
    %p159 = scmp.ne.s32.totalorder %s154, %s156
    %p160 = scmp.eq.s32.totalorder %s15, 0
    %p161 = por %p159, %p160
    %p162 = scmp.ne.s32.totalorder %s154, %s156
    %p163 = scmp.eq.s32.totalorder %s20, 1
    %p164 = por %p162, %p163
    %p165 = scmp.ne.s32.totalorder %s156, %s157
    %p166 = scmp.eq.s32.totalorder %s20, 0
    %p167 = por %p165, %p166
    %p168 = scmp.ne.s32.totalorder %s156, %s157
    %p169 = scmp.eq.s32.totalorder %s21, 1
    %p170 = por %p168, %p169
    %p172 = scmp.ne.s32.totalorder %s157, %s171
    %p173 = scmp.eq.s32.totalorder %s21, 0
    %p174 = por %p172, %p173
    %s176 = sadd.s32 %s175, 1
    %p179 = scmp.eq.s32.totalorder %s15, 1
    %p180 = scmp.ne.s32.totalorder %s175, %s177
    %p181 = scmp.eq.s32.totalorder %s15, 0
    %p182 = por %p180, %p181
    %p183 = scmp.ne.s32.totalorder %s175, %s177
    %p184 = scmp.eq.s32.totalorder %s20, 1
    %p185 = por %p183, %p184
    %p186 = scmp.ne.s32.totalorder %s177, %s178
    %p187 = scmp.eq.s32.totalorder %s20, 0
    %p188 = por %p186, %p187
    %p189 = scmp.ne.s32.totalorder %s177, %s178
    %p190 = scmp.eq.s32.totalorder %s21, 1
    %p191 = por %p189, %p190
    %p193 = scmp.ne.s32.totalorder %s178, %s192
    %p194 = scmp.eq.s32.totalorder %s21, 0
    %p195 = por %p193, %p194
    %s197 = sadd.s32 %s196, 1
    %p200 = scmp.eq.s32.totalorder %s15, 1
    %p201 = scmp.ne.s32.totalorder %s196, %s198
    %p202 = scmp.eq.s32.totalorder %s15, 0
    %p203 = por %p201, %p202
    %p204 = scmp.ne.s32.totalorder %s196, %s198
    %p205 = scmp.eq.s32.totalorder %s20, 1
    %p206 = por %p204, %p205
    %p207 = scmp.ne.s32.totalorder %s198, %s199
    %p208 = scmp.eq.s32.totalorder %s20, 0
    %p209 = por %p207, %p208
    %p210 = scmp.ne.s32.totalorder %s198, %s199
    %p211 = scmp.eq.s32.totalorder %s21, 1
    %p212 = por %p210, %p211
    %p214 = scmp.ne.s32.totalorder %s199, %s213
    %p215 = scmp.eq.s32.totalorder %s21, 0
    %p216 = por %p214, %p215
    %s217 = ssub.s32 %s15, %s22
    %p218 = scmp.eq.s32.totalorder %s217, 0
    %s220 = sadd.s32 %s219, 1
    %s221 = scalar_select %p218, %s219, %s220
    %p224 = pneg %p218
    %p225 = scmp.eq.s32.totalorder %s15, 1
    %p226 = por %p224, %p225
    %p227 = scmp.ne.s32.totalorder %s219, %s222
    %p228 = scmp.eq.s32.totalorder %s15, 0
    %p229 = por %p227, %p228
    %p230 = scmp.ne.s32.totalorder %s219, %s222
    %p231 = scmp.eq.s32.totalorder %s20, 1
    %p232 = por %p230, %p231
    %p233 = scmp.ne.s32.totalorder %s222, %s223
    %p234 = scmp.eq.s32.totalorder %s20, 0
    %p235 = por %p233, %p234
    %p236 = scmp.ne.s32.totalorder %s222, %s223
    %p237 = scmp.eq.s32.totalorder %s21, 1
    %p238 = por %p236, %p237
    %p240 = scmp.ne.s32.totalorder %s223, %s239
    %p241 = scmp.eq.s32.totalorder %s21, 0
    %p242 = por %p240, %p241
    %p243 = scmp.le.s32.totalorder 1, %s15
    %p244 = scmp.lt.s32.totalorder %s15, 3
    %p245 = pnand %p243, %p244
    %p246 = pneg %p245
    // Predicated region
    $region9: #{gamdnet_forward.8} parent=5 // pred_check
      _
    $region10: #{gamdnet_forward.8} parent=5 // pred_check_branch
      %248 = sbr.rel (%p245) target = $region12
    $region11: #{gamdnet_forward.8} parent=5 // pred_region
      %s249 = ssub.s32 %s15, 1
      // Predicated region
      $region13: #{gamdnet_forward.8} parent=11 // pred_check
        %p250 = pneg %p62
      $region14: #{gamdnet_forward.8} parent=11 // pred_check_branch
        %252 = sbr.rel (%p250) target = $region16
      $region15: #{gamdnet_forward.8} parent=11 // pred_region
        _
      $region16: #{gamdnet_forward.8} parent=11 // pred_fallthru
        _
      // Predicated region
      $region17: #{gamdnet_forward.8} parent=11 // pred_check
        %p253 = pneg %p83
      $region18: #{gamdnet_forward.8} parent=11 // pred_check_branch
        %255 = sbr.rel (%p253) target = $region20
      $region19: #{gamdnet_forward.8} parent=11 // pred_region
        _
      $region20: #{gamdnet_forward.8} parent=11 // pred_fallthru
        _
      // Predicated region
      $region21: #{gamdnet_forward.8} parent=11 // pred_check
        %p256 = pneg %p104
      $region22: #{gamdnet_forward.8} parent=11 // pred_check_branch
        %258 = sbr.rel (%p256) target = $region24
      $region23: #{gamdnet_forward.8} parent=11 // pred_region
        _
      $region24: #{gamdnet_forward.8} parent=11 // pred_fallthru
        _
      // Predicated region
      $region25: #{gamdnet_forward.8} parent=11 // pred_check
        %p259 = pneg %p125
      $region26: #{gamdnet_forward.8} parent=11 // pred_check_branch
        %261 = sbr.rel (%p259) target = $region28
      $region27: #{gamdnet_forward.8} parent=11 // pred_region
        _
      $region28: #{gamdnet_forward.8} parent=11 // pred_fallthru
        _
      // Predicated region
      $region29: #{gamdnet_forward.8} parent=11 // pred_check
        %p262 = pneg %p146
      $region30: #{gamdnet_forward.8} parent=11 // pred_check_branch
        %264 = sbr.rel (%p262) target = $region32
      $region31: #{gamdnet_forward.8} parent=11 // pred_region
        _
      $region32: #{gamdnet_forward.8} parent=11 // pred_fallthru
        _
      // Predicated region
      $region33: #{gamdnet_forward.8} parent=11 // pred_check
        %p265 = pneg %p167
      $region34: #{gamdnet_forward.8} parent=11 // pred_check_branch
        %267 = sbr.rel (%p265) target = $region36
      $region35: #{gamdnet_forward.8} parent=11 // pred_region
        _
      $region36: #{gamdnet_forward.8} parent=11 // pred_fallthru
        _
      // Predicated region
      $region37: #{gamdnet_forward.8} parent=11 // pred_check
        %p268 = pneg %p188
      $region38: #{gamdnet_forward.8} parent=11 // pred_check_branch
        %270 = sbr.rel (%p268) target = $region40
      $region39: #{gamdnet_forward.8} parent=11 // pred_region
        _
      $region40: #{gamdnet_forward.8} parent=11 // pred_fallthru
        _
      // Predicated region
      $region41: #{gamdnet_forward.8} parent=11 // pred_check
        %p271 = pneg %p209
      $region42: #{gamdnet_forward.8} parent=11 // pred_check_branch
        %273 = sbr.rel (%p271) target = $region44
      $region43: #{gamdnet_forward.8} parent=11 // pred_region
        _
      $region44: #{gamdnet_forward.8} parent=11 // pred_fallthru
        _
    $region12: #{gamdnet_forward.8} parent=5 // pred_fallthru
      _
    %p274 = scmp.lt.s32.totalorder %s15, 2
    // Predicated region
    $region45: #{gamdnet_forward.8} parent=5 // pred_check
      %p275 = pneg %p274
    $region46: #{gamdnet_forward.8} parent=5 // pred_check_branch
      %277 = sbr.rel (%p275) target = $region48
    $region47: #{gamdnet_forward.8} parent=5 // pred_region
      // Predicated region
      $region49: #{gamdnet_forward.8} parent=47 // pred_check
        %p278 = pneg %p35
      $region50: #{gamdnet_forward.8} parent=47 // pred_check_branch
        %280 = sbr.rel (%p278) target = $region52
      $region51: #{gamdnet_forward.8} parent=47 // pred_region
        %s281 = smul.u32 16, %s15
        %p282 = scmp.lt.s32.totalorder %s281, 31
        %s283 = scalar_select %p282, %s281, 31
        %s284 = smul.addr %s283, 8
        %s285 = scalar_lea.vmem %s0, %s284
        %s286 = smul.u32 16, %s15
      $region52: #{gamdnet_forward.8} parent=47 // pred_fallthru
        _
    $region48: #{gamdnet_forward.8} parent=5 // pred_fallthru
      _
    %p287 = scmp.le.s32.totalorder 1, %s15
    %p288 = scmp.lt.s32.totalorder %s15, 3
    %p289 = pnand %p287, %p288
    %p290 = pneg %p289
    // Predicated region
    $region53: #{gamdnet_forward.8} parent=5 // pred_check
      _
    $region54: #{gamdnet_forward.8} parent=5 // pred_check_branch
      %292 = sbr.rel (%p289) target = $region56
    $region55: #{gamdnet_forward.8} parent=5 // pred_region
      %s293 = ssub.s32 %s15, 1
      %s294 = smul.u32 16, %s20
      %p295 = scmp.lt.s32.totalorder %s294, 31
      %s296 = scalar_select %p295, %s294, 31
      %s297 = smul.addr %s296, 8
      %s298 = scalar_lea.vmem %s0, %s297
      %p299 = pneg %p41
      %p300 = pneg %p38
      %p301 = pneg %p62
      %p302 = pneg %p59
      %p303 = pneg %p83
      %p304 = pneg %p80
      %p305 = pneg %p104
      %p306 = pneg %p101
      %p307 = pneg %p125
      %p308 = pneg %p122
      %p309 = pneg %p146
      %p310 = pneg %p143
      %p311 = pneg %p167
      %p312 = pneg %p164
      %p313 = pneg %p188
      %p314 = pneg %p185
      %p315 = pneg %p209
      %p316 = pneg %p206
      %p317 = pneg %p235
      %p318 = pneg %p232
      %s319 = smul.u32 16, %s20
      %p320 = scmp.lt.s32.totalorder %s319, 31
      %s321 = scalar_select %p320, %s319, 31
      %s322 = smul.addr %s321, 8
      %s323 = scalar_lea.vmem %s9, %s322
      %s324 = smul.u32 16, %s20
      %p325 = scmp.lt.s32.totalorder %s324, 31
      %s326 = scalar_select %p325, %s324, 31
      %s327 = smul.addr %s326, 8
      %s328 = scalar_lea.vmem %s0, %s327
      %s329 = smul.u32 16, %s20
      %s330 = smul.u32 16, %s20
      %p331 = scmp.lt.s32.totalorder %s330, 31
      %s332 = scalar_select %p331, %s330, 31
      %s333 = smul.addr %s332, 8
      %s334 = scalar_lea.vmem %s9, %s333
      %s335 = smul.u32 16, %s20
      %v336 = vld [vmem:[%s328] sm:$0xff]
      %v337 = vld [vmem:[%s328 + $0x8] sm:$0xff]
      %v338 = vld [vmem:[%s328 + $0x10] sm:$0xff]
      %v339 = vld [vmem:[%s328 + $0x18] sm:$0xff]
      %v340 = vld [vmem:[%s328 + $0x20] sm:$0xff]
      %v341 = vld [vmem:[%s328 + $0x28] sm:$0xff]
      %v342 = vld [vmem:[%s328 + $0x30] sm:$0xff]
      %v343 = vld [vmem:[%s328 + $0x38] sm:$0xff]
      %v344 = vld [vmem:[%s328 + $0x40] sm:$0xff]
      %v345 = vld [vmem:[%s328 + $0x48] sm:$0xff]
      %v346 = vld [vmem:[%s328 + $0x50] sm:$0xff]
      %v347 = vld [vmem:[%s328 + $0x58] sm:$0xff]
      %v348 = vld [vmem:[%s328 + $0x60] sm:$0xff]
      %v349 = vld [vmem:[%s328 + $0x68] sm:$0xff]
      %v350 = vld [vmem:[%s328 + $0x70] sm:$0xff]
      %v351 = vld [vmem:[%s328 + $0x78] sm:$0xff]
      %v352 = vld [vmem:[%s1] sm:$0x7]
      %v353 = vld [vmem:[%s2] sm:$0x1]
      %355 = vset.pattern.permute.xlu0 0
      %356 = vperm.xlu0 %355, %v336
      %v357 = vpop.permute.xlu0 %356
      %360 = vset.pattern.permute.xlu0 0
      %361 = vperm.xlu0 %360, %v337
      %v362 = vpop.permute.xlu0 %361
      %365 = vset.pattern.permute.xlu0 0
      %366 = vperm.xlu0 %365, %v338
      %v367 = vpop.permute.xlu0 %366
      %370 = vset.pattern.permute.xlu0 0
      %371 = vperm.xlu0 %370, %v339
      %v372 = vpop.permute.xlu0 %371
      %375 = vset.pattern.permute.xlu0 0
      %376 = vperm.xlu0 %375, %v340
      %v377 = vpop.permute.xlu0 %376
      %380 = vset.pattern.permute.xlu0 0
      %381 = vperm.xlu0 %380, %v341
      %v382 = vpop.permute.xlu0 %381
      %385 = vset.pattern.permute.xlu0 0
      %386 = vperm.xlu0 %385, %v342
      %v387 = vpop.permute.xlu0 %386
      %390 = vset.pattern.permute.xlu0 0
      %391 = vperm.xlu0 %390, %v343
      %v392 = vpop.permute.xlu0 %391
      %395 = vset.pattern.permute.xlu0 0
      %396 = vperm.xlu0 %395, %v344
      %v397 = vpop.permute.xlu0 %396
      %400 = vset.pattern.permute.xlu0 0
      %401 = vperm.xlu0 %400, %v345
      %v402 = vpop.permute.xlu0 %401
      %405 = vset.pattern.permute.xlu0 0
      %406 = vperm.xlu0 %405, %v346
      %v407 = vpop.permute.xlu0 %406
      %410 = vset.pattern.permute.xlu0 0
      %411 = vperm.xlu0 %410, %v347
      %v412 = vpop.permute.xlu0 %411
      %415 = vset.pattern.permute.xlu0 0
      %416 = vperm.xlu0 %415, %v348
      %v417 = vpop.permute.xlu0 %416
      %420 = vset.pattern.permute.xlu0 0
      %421 = vperm.xlu0 %420, %v349
      %v422 = vpop.permute.xlu0 %421
      %425 = vset.pattern.permute.xlu0 0
      %426 = vperm.xlu0 %425, %v350
      %v427 = vpop.permute.xlu0 %426
      %430 = vset.pattern.permute.xlu0 0
      %431 = vperm.xlu0 %430, %v351
      %v432 = vpop.permute.xlu0 %431
      %v434 = vperm.slane %v352, 0
      %v435 = vmul.f32 %v357, %v434
      %v436 = vmul.f32 %v362, %v434
      %v437 = vmul.f32 %v367, %v434
      %v438 = vmul.f32 %v372, %v434
      %v439 = vmul.f32 %v377, %v434
      %v440 = vmul.f32 %v382, %v434
      %v441 = vmul.f32 %v387, %v434
      %v442 = vmul.f32 %v392, %v434
      %v443 = vmul.f32 %v397, %v434
      %v444 = vmul.f32 %v402, %v434
      %v445 = vmul.f32 %v407, %v434
      %v446 = vmul.f32 %v412, %v434
      %v447 = vmul.f32 %v417, %v434
      %v448 = vmul.f32 %v422, %v434
      %v449 = vmul.f32 %v427, %v434
      %v450 = vmul.f32 %v432, %v434
      %v452 = vperm.slane %v353, 0
      %v454 = vadd.f32 %v452, %v435
      %v455 = vadd.f32 %v452, %v436
      %v456 = vadd.f32 %v452, %v437
      %v457 = vadd.f32 %v452, %v438
      %v458 = vadd.f32 %v452, %v439
      %v459 = vadd.f32 %v452, %v440
      %v460 = vadd.f32 %v452, %v441
      %v461 = vadd.f32 %v452, %v442
      %v462 = vadd.f32 %v452, %v443
      %v463 = vadd.f32 %v452, %v444
      %v464 = vadd.f32 %v452, %v445
      %v465 = vadd.f32 %v452, %v446
      %v466 = vadd.f32 %v452, %v447
      %v467 = vadd.f32 %v452, %v448
      %v468 = vadd.f32 %v452, %v449
      %v469 = vadd.f32 %v452, %v450
      %470 = vset.pattern.permute.xlu0 1
      %471 = vperm.xlu0 %470, %v336
      %v472 = vpop.permute.xlu0 %471
      %474 = vset.pattern.permute.xlu0 1
      %475 = vperm.xlu0 %474, %v337
      %v476 = vpop.permute.xlu0 %475
      %478 = vset.pattern.permute.xlu0 1
      %479 = vperm.xlu0 %478, %v338
      %v480 = vpop.permute.xlu0 %479
      %482 = vset.pattern.permute.xlu0 1
      %483 = vperm.xlu0 %482, %v339
      %v484 = vpop.permute.xlu0 %483
      %486 = vset.pattern.permute.xlu0 1
      %487 = vperm.xlu0 %486, %v340
      %v488 = vpop.permute.xlu0 %487
      %490 = vset.pattern.permute.xlu0 1
      %491 = vperm.xlu0 %490, %v341
      %v492 = vpop.permute.xlu0 %491
      %494 = vset.pattern.permute.xlu0 1
      %495 = vperm.xlu0 %494, %v342
      %v496 = vpop.permute.xlu0 %495
      %498 = vset.pattern.permute.xlu0 1
      %499 = vperm.xlu0 %498, %v343
      %v500 = vpop.permute.xlu0 %499
      %502 = vset.pattern.permute.xlu0 1
      %503 = vperm.xlu0 %502, %v344
      %v504 = vpop.permute.xlu0 %503
      %506 = vset.pattern.permute.xlu0 1
      %507 = vperm.xlu0 %506, %v345
      %v508 = vpop.permute.xlu0 %507
      %510 = vset.pattern.permute.xlu0 1
      %511 = vperm.xlu0 %510, %v346
      %v512 = vpop.permute.xlu0 %511
      %514 = vset.pattern.permute.xlu0 1
      %515 = vperm.xlu0 %514, %v347
      %v516 = vpop.permute.xlu0 %515
      %518 = vset.pattern.permute.xlu0 1
      %519 = vperm.xlu0 %518, %v348
      %v520 = vpop.permute.xlu0 %519
      %522 = vset.pattern.permute.xlu0 1
      %523 = vperm.xlu0 %522, %v349
      %v524 = vpop.permute.xlu0 %523
      %526 = vset.pattern.permute.xlu0 1
      %527 = vperm.xlu0 %526, %v350
      %v528 = vpop.permute.xlu0 %527
      %530 = vset.pattern.permute.xlu0 1
      %531 = vperm.xlu0 %530, %v351
      %v532 = vpop.permute.xlu0 %531
      %v534 = vperm.slane %v352, 1
      %v535 = vmul.f32 %v472, %v534
      %v536 = vmul.f32 %v476, %v534
      %v537 = vmul.f32 %v480, %v534
      %v538 = vmul.f32 %v484, %v534
      %v539 = vmul.f32 %v488, %v534
      %v540 = vmul.f32 %v492, %v534
      %v541 = vmul.f32 %v496, %v534
      %v542 = vmul.f32 %v500, %v534
      %v543 = vmul.f32 %v504, %v534
      %v544 = vmul.f32 %v508, %v534
      %v545 = vmul.f32 %v512, %v534
      %v546 = vmul.f32 %v516, %v534
      %v547 = vmul.f32 %v520, %v534
      %v548 = vmul.f32 %v524, %v534
      %v549 = vmul.f32 %v528, %v534
      %v550 = vmul.f32 %v532, %v534
      %v551 = vadd.f32 %v454, %v535
      %v552 = vadd.f32 %v455, %v536
      %v553 = vadd.f32 %v456, %v537
      %v554 = vadd.f32 %v457, %v538
      %v555 = vadd.f32 %v458, %v539
      %v556 = vadd.f32 %v459, %v540
      %v557 = vadd.f32 %v460, %v541
      %v558 = vadd.f32 %v461, %v542
      %v559 = vadd.f32 %v462, %v543
      %v560 = vadd.f32 %v463, %v544
      %v561 = vadd.f32 %v464, %v545
      %v562 = vadd.f32 %v465, %v546
      %v563 = vadd.f32 %v466, %v547
      %v564 = vadd.f32 %v467, %v548
      %v565 = vadd.f32 %v468, %v549
      %v566 = vadd.f32 %v469, %v550
      %567 = vset.pattern.permute.xlu0 2
      %568 = vperm.xlu0 %567, %v336
      %v569 = vpop.permute.xlu0 %568
      %571 = vset.pattern.permute.xlu0 2
      %572 = vperm.xlu0 %571, %v337
      %v573 = vpop.permute.xlu0 %572
      %575 = vset.pattern.permute.xlu0 2
      %576 = vperm.xlu0 %575, %v338
      %v577 = vpop.permute.xlu0 %576
      %579 = vset.pattern.permute.xlu0 2
      %580 = vperm.xlu0 %579, %v339
      %v581 = vpop.permute.xlu0 %580
      %583 = vset.pattern.permute.xlu0 2
      %584 = vperm.xlu0 %583, %v340
      %v585 = vpop.permute.xlu0 %584
      %587 = vset.pattern.permute.xlu0 2
      %588 = vperm.xlu0 %587, %v341
      %v589 = vpop.permute.xlu0 %588
      %591 = vset.pattern.permute.xlu0 2
      %592 = vperm.xlu0 %591, %v342
      %v593 = vpop.permute.xlu0 %592
      %595 = vset.pattern.permute.xlu0 2
      %596 = vperm.xlu0 %595, %v343
      %v597 = vpop.permute.xlu0 %596
      %599 = vset.pattern.permute.xlu0 2
      %600 = vperm.xlu0 %599, %v344
      %v601 = vpop.permute.xlu0 %600
      %603 = vset.pattern.permute.xlu0 2
      %604 = vperm.xlu0 %603, %v345
      %v605 = vpop.permute.xlu0 %604
      %607 = vset.pattern.permute.xlu0 2
      %608 = vperm.xlu0 %607, %v346
      %v609 = vpop.permute.xlu0 %608
      %611 = vset.pattern.permute.xlu0 2
      %612 = vperm.xlu0 %611, %v347
      %v613 = vpop.permute.xlu0 %612
      %615 = vset.pattern.permute.xlu0 2
      %616 = vperm.xlu0 %615, %v348
      %v617 = vpop.permute.xlu0 %616
      %619 = vset.pattern.permute.xlu0 2
      %620 = vperm.xlu0 %619, %v349
      %v621 = vpop.permute.xlu0 %620
      %623 = vset.pattern.permute.xlu0 2
      %624 = vperm.xlu0 %623, %v350
      %v625 = vpop.permute.xlu0 %624
      %627 = vset.pattern.permute.xlu0 2
      %628 = vperm.xlu0 %627, %v351
      %v629 = vpop.permute.xlu0 %628
      %v631 = vperm.slane %v352, 2
      %v632 = vmul.f32 %v569, %v631
      %v633 = vmul.f32 %v573, %v631
      %v634 = vmul.f32 %v577, %v631
      %v635 = vmul.f32 %v581, %v631
      %v636 = vmul.f32 %v585, %v631
      %v637 = vmul.f32 %v589, %v631
      %v638 = vmul.f32 %v593, %v631
      %v639 = vmul.f32 %v597, %v631
      %v640 = vmul.f32 %v601, %v631
      %v641 = vmul.f32 %v605, %v631
      %v642 = vmul.f32 %v609, %v631
      %v643 = vmul.f32 %v613, %v631
      %v644 = vmul.f32 %v617, %v631
      %v645 = vmul.f32 %v621, %v631
      %v646 = vmul.f32 %v625, %v631
      %v647 = vmul.f32 %v629, %v631
      %v648 = vadd.f32 %v551, %v632
      %v649 = vadd.f32 %v552, %v633
      %v650 = vadd.f32 %v553, %v634
      %v651 = vadd.f32 %v554, %v635
      %v652 = vadd.f32 %v555, %v636
      %v653 = vadd.f32 %v556, %v637
      %v654 = vadd.f32 %v557, %v638
      %v655 = vadd.f32 %v558, %v639
      %v656 = vadd.f32 %v559, %v640
      %v657 = vadd.f32 %v560, %v641
      %v658 = vadd.f32 %v561, %v642
      %v659 = vadd.f32 %v562, %v643
      %v660 = vadd.f32 %v563, %v644
      %v661 = vadd.f32 %v564, %v645
      %v662 = vadd.f32 %v565, %v646
      %v663 = vadd.f32 %v566, %v647
      %v664 = vmul.f32 %v648, 0.5
      %v665 = vmul.f32 %v649, 0.5
      %v666 = vmul.f32 %v650, 0.5
      %v667 = vmul.f32 %v651, 0.5
      %v668 = vmul.f32 %v652, 0.5
      %v669 = vmul.f32 %v653, 0.5
      %v670 = vmul.f32 %v654, 0.5
      %v671 = vmul.f32 %v655, 0.5
      %v672 = vmul.f32 %v656, 0.5
      %v673 = vmul.f32 %v657, 0.5
      %v674 = vmul.f32 %v658, 0.5
      %v675 = vmul.f32 %v659, 0.5
      %v676 = vmul.f32 %v660, 0.5
      %v677 = vmul.f32 %v661, 0.5
      %v678 = vmul.f32 %v662, 0.5
      %v679 = vmul.f32 %v663, 0.5
      %v680 = vmul.f32 %v648, 0.044715
      %v681 = vmul.f32 %v649, 0.044715
      %v682 = vmul.f32 %v650, 0.044715
      %v683 = vmul.f32 %v651, 0.044715
      %v684 = vmul.f32 %v652, 0.044715
      %v685 = vmul.f32 %v653, 0.044715
      %v686 = vmul.f32 %v654, 0.044715
      %v687 = vmul.f32 %v655, 0.044715
      %v688 = vmul.f32 %v656, 0.044715
      %v689 = vmul.f32 %v657, 0.044715
      %v690 = vmul.f32 %v658, 0.044715
      %v691 = vmul.f32 %v659, 0.044715
      %v692 = vmul.f32 %v660, 0.044715
      %v693 = vmul.f32 %v661, 0.044715
      %v694 = vmul.f32 %v662, 0.044715
      %v695 = vmul.f32 %v663, 0.044715
      %v696 = vmul.f32 %v680, %v648
      %v697 = vmul.f32 %v681, %v649
      %v698 = vmul.f32 %v682, %v650
      %v699 = vmul.f32 %v683, %v651
      %v700 = vmul.f32 %v684, %v652
      %v701 = vmul.f32 %v685, %v653
      %v702 = vmul.f32 %v686, %v654
      %v703 = vmul.f32 %v687, %v655
      %v704 = vmul.f32 %v688, %v656
      %v705 = vmul.f32 %v689, %v657
      %v706 = vmul.f32 %v690, %v658
      %v707 = vmul.f32 %v691, %v659
      %v708 = vmul.f32 %v692, %v660
      %v709 = vmul.f32 %v693, %v661
      %v710 = vmul.f32 %v694, %v662
      %v711 = vmul.f32 %v695, %v663
      %v712 = vmul.f32 %v696, %v648
      %v713 = vmul.f32 %v697, %v649
      %v714 = vmul.f32 %v698, %v650
      %v715 = vmul.f32 %v699, %v651
      %v716 = vmul.f32 %v700, %v652
      %v717 = vmul.f32 %v701, %v653
      %v718 = vmul.f32 %v702, %v654
      %v719 = vmul.f32 %v703, %v655
      %v720 = vmul.f32 %v704, %v656
      %v721 = vmul.f32 %v705, %v657
      %v722 = vmul.f32 %v706, %v658
      %v723 = vmul.f32 %v707, %v659
      %v724 = vmul.f32 %v708, %v660
      %v725 = vmul.f32 %v709, %v661
      %v726 = vmul.f32 %v710, %v662
      %v727 = vmul.f32 %v711, %v663
      %v728 = vadd.f32 %v648, %v712
      %v729 = vadd.f32 %v649, %v713
      %v730 = vadd.f32 %v650, %v714
      %v731 = vadd.f32 %v651, %v715
      %v732 = vadd.f32 %v652, %v716
      %v733 = vadd.f32 %v653, %v717
      %v734 = vadd.f32 %v654, %v718
      %v735 = vadd.f32 %v655, %v719
      %v736 = vadd.f32 %v656, %v720
      %v737 = vadd.f32 %v657, %v721
      %v738 = vadd.f32 %v658, %v722
      %v739 = vadd.f32 %v659, %v723
      %v740 = vadd.f32 %v660, %v724
      %v741 = vadd.f32 %v661, %v725
      %v742 = vadd.f32 %v662, %v726
      %v743 = vadd.f32 %v663, %v727
      %v744 = vmul.f32 %v728, 0.7978846
      %v745 = vmul.f32 %v729, 0.7978846
      %v746 = vmul.f32 %v730, 0.7978846
      %v747 = vmul.f32 %v731, 0.7978846
      %v748 = vmul.f32 %v732, 0.7978846
      %v749 = vmul.f32 %v733, 0.7978846
      %v750 = vmul.f32 %v734, 0.7978846
      %v751 = vmul.f32 %v735, 0.7978846
      %v752 = vmul.f32 %v736, 0.7978846
      %v753 = vmul.f32 %v737, 0.7978846
      %v754 = vmul.f32 %v738, 0.7978846
      %v755 = vmul.f32 %v739, 0.7978846
      %v756 = vmul.f32 %v740, 0.7978846
      %v757 = vmul.f32 %v741, 0.7978846
      %v758 = vmul.f32 %v742, 0.7978846
      %v759 = vmul.f32 %v743, 0.7978846
      %v760 = vtanh.pop %v744
      %v761 = vtanh.pop %v745
      %v762 = vtanh.pop %v746
      %v763 = vtanh.pop %v747
      %v764 = vtanh.pop %v748
      %v765 = vtanh.pop %v749
      %v766 = vtanh.pop %v750
      %v767 = vtanh.pop %v751
      %v768 = vtanh.pop %v752
      %v769 = vtanh.pop %v753
      %v770 = vtanh.pop %v754
      %v771 = vtanh.pop %v755
      %v772 = vtanh.pop %v756
      %v773 = vtanh.pop %v757
      %v774 = vtanh.pop %v758
      %v775 = vtanh.pop %v759
      %v776 = vadd.f32 %v760, 1.0
      %v777 = vadd.f32 %v761, 1.0
      %v778 = vadd.f32 %v762, 1.0
      %v779 = vadd.f32 %v763, 1.0
      %v780 = vadd.f32 %v764, 1.0
      %v781 = vadd.f32 %v765, 1.0
      %v782 = vadd.f32 %v766, 1.0
      %v783 = vadd.f32 %v767, 1.0
      %v784 = vadd.f32 %v768, 1.0
      %v785 = vadd.f32 %v769, 1.0
      %v786 = vadd.f32 %v770, 1.0
      %v787 = vadd.f32 %v771, 1.0
      %v788 = vadd.f32 %v772, 1.0
      %v789 = vadd.f32 %v773, 1.0
      %v790 = vadd.f32 %v774, 1.0
      %v791 = vadd.f32 %v775, 1.0
      %v792 = vmul.f32 %v664, %v776
      %v793 = vmul.f32 %v665, %v777
      %v794 = vmul.f32 %v666, %v778
      %v795 = vmul.f32 %v667, %v779
      %v796 = vmul.f32 %v668, %v780
      %v797 = vmul.f32 %v669, %v781
      %v798 = vmul.f32 %v670, %v782
      %v799 = vmul.f32 %v671, %v783
      %v800 = vmul.f32 %v672, %v784
      %v801 = vmul.f32 %v673, %v785
      %v802 = vmul.f32 %v674, %v786
      %v803 = vmul.f32 %v675, %v787
      %v804 = vmul.f32 %v676, %v788
      %v805 = vmul.f32 %v677, %v789
      %v806 = vmul.f32 %v678, %v790
      %v807 = vmul.f32 %v679, %v791
      %v808 = vld [vmem:[%s3] sm:$0xff]
      %v809 = vld [vmem:[%s3 + $0x8] sm:$0xff]
      %v810 = vld [vmem:[%s3 + $0x10] sm:$0xff]
      %v811 = vld [vmem:[%s3 + $0x18] sm:$0xff]
      %v812 = vld [vmem:[%s4] sm:$0x1]
      %v814 = vperm.slane %v812, 0
      %vm816 = vcmask 261120
      %v818 = vsel %vm816, %v792, 0
      %v821 = vsel %vm816, %v793, 0
      %v824 = vsel %vm816, %v794, 0
      %v827 = vsel %vm816, %v795, 0
      %v830 = vsel %vm816, %v796, 0
      %v833 = vsel %vm816, %v797, 0
      %v836 = vsel %vm816, %v798, 0
      %v839 = vsel %vm816, %v799, 0
      %v842 = vsel %vm816, %v800, 0
      %v845 = vsel %vm816, %v801, 0
      %v848 = vsel %vm816, %v802, 0
      %v851 = vsel %vm816, %v803, 0
      %v854 = vsel %vm816, %v804, 0
      %v857 = vsel %vm816, %v805, 0
      %v860 = vsel %vm816, %v806, 0
      %v863 = vsel %vm816, %v807, 0
      %865 = vmatpush.msra.mxu0 0.0
      %866 = vmatpush.msra.mxu0 0.0
      %867 = vmatpush.msra.mxu0 0.0
      %868 = vmatpush.msra.mxu0 0.0
      %869 = vmatpush.msra.mxu0 0.0
      %870 = vmatpush.msra.mxu0 0.0
      %871 = vmatpush.msra.mxu0 0.0
      %872 = vmatpush.msra.mxu0 0.0
      %873 = vmatpush.msra.mxu0 0.0
      %874 = vmatpush.msra.mxu0 0.0
      %875 = vmatpush.msra.mxu0 0.0
      %876 = vmatpush.msra.mxu0 0.0
      %877 = vmatpush.msra.mxu0 %v811
      %878 = vmatpush.msra.mxu0 %v810
      %879 = vmatpush.msra.mxu0 %v809
      %880 = vmatpush.msra.mxu0 %v808
      %881 = vmatmul.f32.gmra.mxu0 %v818
      %v882 = vpop.f32.mrf.mxu0
      %v883 = vadd.f32 %v814, %v882
      %884 = vmatmul.f32.gmra.mxu0 %v821
      %v885 = vpop.f32.mrf.mxu0
      %v886 = vadd.f32 %v814, %v885
      %887 = vmatmul.f32.gmra.mxu0 %v824
      %v888 = vpop.f32.mrf.mxu0
      %v889 = vadd.f32 %v814, %v888
      %890 = vmatmul.f32.gmra.mxu0 %v827
      %v891 = vpop.f32.mrf.mxu0
      %v892 = vadd.f32 %v814, %v891
      %893 = vmatmul.f32.gmra.mxu0 %v830
      %v894 = vpop.f32.mrf.mxu0
      %v895 = vadd.f32 %v814, %v894
      %896 = vmatmul.f32.gmra.mxu0 %v833
      %v897 = vpop.f32.mrf.mxu0
      %v898 = vadd.f32 %v814, %v897
      %899 = vmatmul.f32.gmra.mxu0 %v836
      %v900 = vpop.f32.mrf.mxu0
      %v901 = vadd.f32 %v814, %v900
      %902 = vmatmul.f32.gmra.mxu0 %v839
      %v903 = vpop.f32.mrf.mxu0
      %v904 = vadd.f32 %v814, %v903
      %905 = vmatmul.f32.gmra.mxu0 %v842
      %v906 = vpop.f32.mrf.mxu0
      %v907 = vadd.f32 %v814, %v906
      %908 = vmatmul.f32.gmra.mxu0 %v845
      %v909 = vpop.f32.mrf.mxu0
      %v910 = vadd.f32 %v814, %v909
      %911 = vmatmul.f32.gmra.mxu0 %v848
      %v912 = vpop.f32.mrf.mxu0
      %v913 = vadd.f32 %v814, %v912
      %914 = vmatmul.f32.gmra.mxu0 %v851
      %v915 = vpop.f32.mrf.mxu0
      %v916 = vadd.f32 %v814, %v915
      %917 = vmatmul.f32.gmra.mxu0 %v854
      %v918 = vpop.f32.mrf.mxu0
      %v919 = vadd.f32 %v814, %v918
      %920 = vmatmul.f32.gmra.mxu0 %v857
      %v921 = vpop.f32.mrf.mxu0
      %v922 = vadd.f32 %v814, %v921
      %923 = vmatmul.f32.gmra.mxu0 %v860
      %v924 = vpop.f32.mrf.mxu0
      %v925 = vadd.f32 %v814, %v924
      %926 = vmatmul.f32.gmra.mxu0 %v863
      %v927 = vpop.f32.mrf.mxu0
      %v928 = vadd.f32 %v814, %v927
      %929 = vdwg.mxu0
      %v930 = vmul.f32 %v883, 0.5
      %v931 = vmul.f32 %v886, 0.5
      %v932 = vmul.f32 %v889, 0.5
      %v933 = vmul.f32 %v892, 0.5
      %v934 = vmul.f32 %v895, 0.5
      %v935 = vmul.f32 %v898, 0.5
      %v936 = vmul.f32 %v901, 0.5
      %v937 = vmul.f32 %v904, 0.5
      %v938 = vmul.f32 %v907, 0.5
      %v939 = vmul.f32 %v910, 0.5
      %v940 = vmul.f32 %v913, 0.5
      %v941 = vmul.f32 %v916, 0.5
      %v942 = vmul.f32 %v919, 0.5
      %v943 = vmul.f32 %v922, 0.5
      %v944 = vmul.f32 %v925, 0.5
      %v945 = vmul.f32 %v928, 0.5
      %v946 = vmul.f32 %v883, 0.044715
      %v947 = vmul.f32 %v886, 0.044715
      %v948 = vmul.f32 %v889, 0.044715
      %v949 = vmul.f32 %v892, 0.044715
      %v950 = vmul.f32 %v895, 0.044715
      %v951 = vmul.f32 %v898, 0.044715
      %v952 = vmul.f32 %v901, 0.044715
      %v953 = vmul.f32 %v904, 0.044715
      %v954 = vmul.f32 %v907, 0.044715
      %v955 = vmul.f32 %v910, 0.044715
      %v956 = vmul.f32 %v913, 0.044715
      %v957 = vmul.f32 %v916, 0.044715
      %v958 = vmul.f32 %v919, 0.044715
      %v959 = vmul.f32 %v922, 0.044715
      %v960 = vmul.f32 %v925, 0.044715
      %v961 = vmul.f32 %v928, 0.044715
      %v962 = vmul.f32 %v946, %v883
      %v963 = vmul.f32 %v947, %v886
      %v964 = vmul.f32 %v948, %v889
      %v965 = vmul.f32 %v949, %v892
      %v966 = vmul.f32 %v950, %v895
      %v967 = vmul.f32 %v951, %v898
      %v968 = vmul.f32 %v952, %v901
      %v969 = vmul.f32 %v953, %v904
      %v970 = vmul.f32 %v954, %v907
      %v971 = vmul.f32 %v955, %v910
      %v972 = vmul.f32 %v956, %v913
      %v973 = vmul.f32 %v957, %v916
      %v974 = vmul.f32 %v958, %v919
      %v975 = vmul.f32 %v959, %v922
      %v976 = vmul.f32 %v960, %v925
      %v977 = vmul.f32 %v961, %v928
      %v978 = vmul.f32 %v962, %v883
      %v979 = vmul.f32 %v963, %v886
      %v980 = vmul.f32 %v964, %v889
      %v981 = vmul.f32 %v965, %v892
      %v982 = vmul.f32 %v966, %v895
      %v983 = vmul.f32 %v967, %v898
      %v984 = vmul.f32 %v968, %v901
      %v985 = vmul.f32 %v969, %v904
      %v986 = vmul.f32 %v970, %v907
      %v987 = vmul.f32 %v971, %v910
      %v988 = vmul.f32 %v972, %v913
      %v989 = vmul.f32 %v973, %v916
      %v990 = vmul.f32 %v974, %v919
      %v991 = vmul.f32 %v975, %v922
      %v992 = vmul.f32 %v976, %v925
      %v993 = vmul.f32 %v977, %v928
      %v994 = vadd.f32 %v883, %v978
      %v995 = vadd.f32 %v886, %v979
      %v996 = vadd.f32 %v889, %v980
      %v997 = vadd.f32 %v892, %v981
      %v998 = vadd.f32 %v895, %v982
      %v999 = vadd.f32 %v898, %v983
      %v1000 = vadd.f32 %v901, %v984
      %v1001 = vadd.f32 %v904, %v985
      %v1002 = vadd.f32 %v907, %v986
      %v1003 = vadd.f32 %v910, %v987
      %v1004 = vadd.f32 %v913, %v988
      %v1005 = vadd.f32 %v916, %v989
      %v1006 = vadd.f32 %v919, %v990
      %v1007 = vadd.f32 %v922, %v991
      %v1008 = vadd.f32 %v925, %v992
      %v1009 = vadd.f32 %v928, %v993
      %v1010 = vmul.f32 %v994, 0.7978846
      %v1011 = vmul.f32 %v995, 0.7978846
      %v1012 = vmul.f32 %v996, 0.7978846
      %v1013 = vmul.f32 %v997, 0.7978846
      %v1014 = vmul.f32 %v998, 0.7978846
      %v1015 = vmul.f32 %v999, 0.7978846
      %v1016 = vmul.f32 %v1000, 0.7978846
      %v1017 = vmul.f32 %v1001, 0.7978846
      %v1018 = vmul.f32 %v1002, 0.7978846
      %v1019 = vmul.f32 %v1003, 0.7978846
      %v1020 = vmul.f32 %v1004, 0.7978846
      %v1021 = vmul.f32 %v1005, 0.7978846
      %v1022 = vmul.f32 %v1006, 0.7978846
      %v1023 = vmul.f32 %v1007, 0.7978846
      %v1024 = vmul.f32 %v1008, 0.7978846
      %v1025 = vmul.f32 %v1009, 0.7978846
      %v1026 = vtanh.pop %v1010
      %v1027 = vtanh.pop %v1011
      %v1028 = vtanh.pop %v1012
      %v1029 = vtanh.pop %v1013
      %v1030 = vtanh.pop %v1014
      %v1031 = vtanh.pop %v1015
      %v1032 = vtanh.pop %v1016
      %v1033 = vtanh.pop %v1017
      %v1034 = vtanh.pop %v1018
      %v1035 = vtanh.pop %v1019
      %v1036 = vtanh.pop %v1020
      %v1037 = vtanh.pop %v1021
      %v1038 = vtanh.pop %v1022
      %v1039 = vtanh.pop %v1023
      %v1040 = vtanh.pop %v1024
      %v1041 = vtanh.pop %v1025
      %v1042 = vadd.f32 %v1026, 1.0
      %v1043 = vadd.f32 %v1027, 1.0
      %v1044 = vadd.f32 %v1028, 1.0
      %v1045 = vadd.f32 %v1029, 1.0
      %v1046 = vadd.f32 %v1030, 1.0
      %v1047 = vadd.f32 %v1031, 1.0
      %v1048 = vadd.f32 %v1032, 1.0
      %v1049 = vadd.f32 %v1033, 1.0
      %v1050 = vadd.f32 %v1034, 1.0
      %v1051 = vadd.f32 %v1035, 1.0
      %v1052 = vadd.f32 %v1036, 1.0
      %v1053 = vadd.f32 %v1037, 1.0
      %v1054 = vadd.f32 %v1038, 1.0
      %v1055 = vadd.f32 %v1039, 1.0
      %v1056 = vadd.f32 %v1040, 1.0
      %v1057 = vadd.f32 %v1041, 1.0
      %v1058 = vmul.f32 %v930, %v1042
      %v1059 = vmul.f32 %v931, %v1043
      %v1060 = vmul.f32 %v932, %v1044
      %v1061 = vmul.f32 %v933, %v1045
      %v1062 = vmul.f32 %v934, %v1046
      %v1063 = vmul.f32 %v935, %v1047
      %v1064 = vmul.f32 %v936, %v1048
      %v1065 = vmul.f32 %v937, %v1049
      %v1066 = vmul.f32 %v938, %v1050
      %v1067 = vmul.f32 %v939, %v1051
      %v1068 = vmul.f32 %v940, %v1052
      %v1069 = vmul.f32 %v941, %v1053
      %v1070 = vmul.f32 %v942, %v1054
      %v1071 = vmul.f32 %v943, %v1055
      %v1072 = vmul.f32 %v944, %v1056
      %v1073 = vmul.f32 %v945, %v1057
      %v1074 = vld [vmem:[%s5] sm:$0xff]
      %v1075 = vld [vmem:[%s5 + $0x8] sm:$0xff]
      %v1076 = vld [vmem:[%s5 + $0x10] sm:$0xff]
      %v1077 = vld [vmem:[%s5 + $0x18] sm:$0xff]
      %v1078 = vld [vmem:[%s6] sm:$0x1]
      %v1080 = vperm.slane %v1078, 0
      %v1083 = vsel %vm816, %v1058, 0
      %v1086 = vsel %vm816, %v1059, 0
      %v1089 = vsel %vm816, %v1060, 0
      %v1092 = vsel %vm816, %v1061, 0
      %v1095 = vsel %vm816, %v1062, 0
      %v1098 = vsel %vm816, %v1063, 0
      %v1101 = vsel %vm816, %v1064, 0
      %v1104 = vsel %vm816, %v1065, 0
      %v1107 = vsel %vm816, %v1066, 0
      %v1110 = vsel %vm816, %v1067, 0
      %v1113 = vsel %vm816, %v1068, 0
      %v1116 = vsel %vm816, %v1069, 0
      %v1119 = vsel %vm816, %v1070, 0
      %v1122 = vsel %vm816, %v1071, 0
      %v1125 = vsel %vm816, %v1072, 0
      %v1128 = vsel %vm816, %v1073, 0
      %1130 = vmatpush.msra.mxu0 0.0
      %1131 = vmatpush.msra.mxu0 0.0
      %1132 = vmatpush.msra.mxu0 0.0
      %1133 = vmatpush.msra.mxu0 0.0
      %1134 = vmatpush.msra.mxu0 0.0
      %1135 = vmatpush.msra.mxu0 0.0
      %1136 = vmatpush.msra.mxu0 0.0
      %1137 = vmatpush.msra.mxu0 0.0
      %1138 = vmatpush.msra.mxu0 0.0
      %1139 = vmatpush.msra.mxu0 0.0
      %1140 = vmatpush.msra.mxu0 0.0
      %1141 = vmatpush.msra.mxu0 0.0
      %1142 = vmatpush.msra.mxu0 %v1077
      %1143 = vmatpush.msra.mxu0 %v1076
      %1144 = vmatpush.msra.mxu0 %v1075
      %1145 = vmatpush.msra.mxu0 %v1074
      %1146 = vmatmul.f32.gmra.mxu0 %v1083
      %v1147 = vpop.f32.mrf.mxu0
      %v1148 = vadd.f32 %v1080, %v1147
      %1149 = vmatmul.f32.gmra.mxu0 %v1086
      %v1150 = vpop.f32.mrf.mxu0
      %v1151 = vadd.f32 %v1080, %v1150
      %1152 = vmatmul.f32.gmra.mxu0 %v1089
      %v1153 = vpop.f32.mrf.mxu0
      %v1154 = vadd.f32 %v1080, %v1153
      %1155 = vmatmul.f32.gmra.mxu0 %v1092
      %v1156 = vpop.f32.mrf.mxu0
      %v1157 = vadd.f32 %v1080, %v1156
      %1158 = vmatmul.f32.gmra.mxu0 %v1095
      %v1159 = vpop.f32.mrf.mxu0
      %v1160 = vadd.f32 %v1080, %v1159
      %1161 = vmatmul.f32.gmra.mxu0 %v1098
      %v1162 = vpop.f32.mrf.mxu0
      %v1163 = vadd.f32 %v1080, %v1162
      %1164 = vmatmul.f32.gmra.mxu0 %v1101
      %v1165 = vpop.f32.mrf.mxu0
      %v1166 = vadd.f32 %v1080, %v1165
      %1167 = vmatmul.f32.gmra.mxu0 %v1104
      %v1168 = vpop.f32.mrf.mxu0
      %v1169 = vadd.f32 %v1080, %v1168
      %1170 = vmatmul.f32.gmra.mxu0 %v1107
      %v1171 = vpop.f32.mrf.mxu0
      %v1172 = vadd.f32 %v1080, %v1171
      %1173 = vmatmul.f32.gmra.mxu0 %v1110
      %v1174 = vpop.f32.mrf.mxu0
      %v1175 = vadd.f32 %v1080, %v1174
      %1176 = vmatmul.f32.gmra.mxu0 %v1113
      %v1177 = vpop.f32.mrf.mxu0
      %v1178 = vadd.f32 %v1080, %v1177
      %1179 = vmatmul.f32.gmra.mxu0 %v1116
      %v1180 = vpop.f32.mrf.mxu0
      %v1181 = vadd.f32 %v1080, %v1180
      %1182 = vmatmul.f32.gmra.mxu0 %v1119
      %v1183 = vpop.f32.mrf.mxu0
      %v1184 = vadd.f32 %v1080, %v1183
      %1185 = vmatmul.f32.gmra.mxu0 %v1122
      %v1186 = vpop.f32.mrf.mxu0
      %v1187 = vadd.f32 %v1080, %v1186
      %1188 = vmatmul.f32.gmra.mxu0 %v1125
      %v1189 = vpop.f32.mrf.mxu0
      %v1190 = vadd.f32 %v1080, %v1189
      %1191 = vmatmul.f32.gmra.mxu0 %v1128
      %v1192 = vpop.f32.mrf.mxu0
      %v1193 = vadd.f32 %v1080, %v1192
      %1194 = vdwg.mxu0
      %v1195 = vld [vmem:[%s7] sm:$0x1]
      %v1196 = vld [vmem:[%s8] sm:$0x1]
      %v1197 = vsel %vm816, %v1148, 0.0
      %1198 = vadd.xlane.f32.xlu0 %v1197
      %v1199 = vpop.xlane.xlu0 %1198
      %v1200 = vsel %vm816, %v1151, 0.0
      %1201 = vadd.xlane.f32.xlu0 %v1200
      %v1202 = vpop.xlane.xlu0 %1201
      %v1203 = vsel %vm816, %v1154, 0.0
      %1204 = vadd.xlane.f32.xlu0 %v1203
      %v1205 = vpop.xlane.xlu0 %1204
      %v1206 = vsel %vm816, %v1157, 0.0
      %1207 = vadd.xlane.f32.xlu0 %v1206
      %v1208 = vpop.xlane.xlu0 %1207
      %v1209 = vsel %vm816, %v1160, 0.0
      %1210 = vadd.xlane.f32.xlu0 %v1209
      %v1211 = vpop.xlane.xlu0 %1210
      %v1212 = vsel %vm816, %v1163, 0.0
      %1213 = vadd.xlane.f32.xlu0 %v1212
      %v1214 = vpop.xlane.xlu0 %1213
      %v1215 = vsel %vm816, %v1166, 0.0
      %1216 = vadd.xlane.f32.xlu0 %v1215
      %v1217 = vpop.xlane.xlu0 %1216
      %v1218 = vsel %vm816, %v1169, 0.0
      %1219 = vadd.xlane.f32.xlu0 %v1218
      %v1220 = vpop.xlane.xlu0 %1219
      %v1221 = vsel %vm816, %v1172, 0.0
      %1222 = vadd.xlane.f32.xlu0 %v1221
      %v1223 = vpop.xlane.xlu0 %1222
      %v1224 = vsel %vm816, %v1175, 0.0
      %1225 = vadd.xlane.f32.xlu0 %v1224
      %v1226 = vpop.xlane.xlu0 %1225
      %v1227 = vsel %vm816, %v1178, 0.0
      %1228 = vadd.xlane.f32.xlu0 %v1227
      %v1229 = vpop.xlane.xlu0 %1228
      %v1230 = vsel %vm816, %v1181, 0.0
      %1231 = vadd.xlane.f32.xlu0 %v1230
      %v1232 = vpop.xlane.xlu0 %1231
      %v1233 = vsel %vm816, %v1184, 0.0
      %1234 = vadd.xlane.f32.xlu0 %v1233
      %v1235 = vpop.xlane.xlu0 %1234
      %v1236 = vsel %vm816, %v1187, 0.0
      %1237 = vadd.xlane.f32.xlu0 %v1236
      %v1238 = vpop.xlane.xlu0 %1237
      %v1239 = vsel %vm816, %v1190, 0.0
      %1240 = vadd.xlane.f32.xlu0 %v1239
      %v1241 = vpop.xlane.xlu0 %1240
      %v1242 = vsel %vm816, %v1193, 0.0
      %1243 = vadd.xlane.f32.xlu0 %v1242
      %v1244 = vpop.xlane.xlu0 %1243
      %v1245 = vrcp.pop 32.0
      %v1246 = vmul.f32 32.0, %v1245
      %v1247 = vsub.f32 1.0, %v1246
      %v1248 = vmul.f32 %v1245, %v1247
      %v1249 = vadd.f32 %v1245, %v1248
      %vm1250 = vweird.f32 %v1245
      %v1251 = vsel %vm1250, %v1245, %v1249
      %v1252 = vmul.f32 %v1199, %v1251
      %v1253 = vmul.f32 %v1202, %v1251
      %v1254 = vmul.f32 %v1205, %v1251
      %v1255 = vmul.f32 %v1208, %v1251
      %v1256 = vmul.f32 %v1211, %v1251
      %v1257 = vmul.f32 %v1214, %v1251
      %v1258 = vmul.f32 %v1217, %v1251
      %v1259 = vmul.f32 %v1220, %v1251
      %v1260 = vmul.f32 %v1223, %v1251
      %v1261 = vmul.f32 %v1226, %v1251
      %v1262 = vmul.f32 %v1229, %v1251
      %v1263 = vmul.f32 %v1232, %v1251
      %v1264 = vmul.f32 %v1235, %v1251
      %v1265 = vmul.f32 %v1238, %v1251
      %v1266 = vmul.f32 %v1241, %v1251
      %v1267 = vmul.f32 %v1244, %v1251
      %v1268 = vsub.f32 %v1148, %v1252
      %v1269 = vsub.f32 %v1151, %v1253
      %v1270 = vsub.f32 %v1154, %v1254
      %v1271 = vsub.f32 %v1157, %v1255
      %v1272 = vsub.f32 %v1160, %v1256
      %v1273 = vsub.f32 %v1163, %v1257
      %v1274 = vsub.f32 %v1166, %v1258
      %v1275 = vsub.f32 %v1169, %v1259
      %v1276 = vsub.f32 %v1172, %v1260
      %v1277 = vsub.f32 %v1175, %v1261
      %v1278 = vsub.f32 %v1178, %v1262
      %v1279 = vsub.f32 %v1181, %v1263
      %v1280 = vsub.f32 %v1184, %v1264
      %v1281 = vsub.f32 %v1187, %v1265
      %v1282 = vsub.f32 %v1190, %v1266
      %v1283 = vsub.f32 %v1193, %v1267
      %v1284 = vmul.f32 %v1268, %v1268
      %v1285 = vmul.f32 %v1269, %v1269
      %v1286 = vmul.f32 %v1270, %v1270
      %v1287 = vmul.f32 %v1271, %v1271
      %v1288 = vmul.f32 %v1272, %v1272
      %v1289 = vmul.f32 %v1273, %v1273
      %v1290 = vmul.f32 %v1274, %v1274
      %v1291 = vmul.f32 %v1275, %v1275
      %v1292 = vmul.f32 %v1276, %v1276
      %v1293 = vmul.f32 %v1277, %v1277
      %v1294 = vmul.f32 %v1278, %v1278
      %v1295 = vmul.f32 %v1279, %v1279
      %v1296 = vmul.f32 %v1280, %v1280
      %v1297 = vmul.f32 %v1281, %v1281
      %v1298 = vmul.f32 %v1282, %v1282
      %v1299 = vmul.f32 %v1283, %v1283
      %v1300 = vsel %vm816, %v1284, 0.0
      %1301 = vadd.xlane.f32.xlu0 %v1300
      %v1302 = vpop.xlane.xlu0 %1301
      %v1303 = vsel %vm816, %v1285, 0.0
      %1304 = vadd.xlane.f32.xlu0 %v1303
      %v1305 = vpop.xlane.xlu0 %1304
      %v1306 = vsel %vm816, %v1286, 0.0
      %1307 = vadd.xlane.f32.xlu0 %v1306
      %v1308 = vpop.xlane.xlu0 %1307
      %v1309 = vsel %vm816, %v1287, 0.0
      %1310 = vadd.xlane.f32.xlu0 %v1309
      %v1311 = vpop.xlane.xlu0 %1310
      %v1312 = vsel %vm816, %v1288, 0.0
      %1313 = vadd.xlane.f32.xlu0 %v1312
      %v1314 = vpop.xlane.xlu0 %1313
      %v1315 = vsel %vm816, %v1289, 0.0
      %1316 = vadd.xlane.f32.xlu0 %v1315
      %v1317 = vpop.xlane.xlu0 %1316
      %v1318 = vsel %vm816, %v1290, 0.0
      %1319 = vadd.xlane.f32.xlu0 %v1318
      %v1320 = vpop.xlane.xlu0 %1319
      %v1321 = vsel %vm816, %v1291, 0.0
      %1322 = vadd.xlane.f32.xlu0 %v1321
      %v1323 = vpop.xlane.xlu0 %1322
      %v1324 = vsel %vm816, %v1292, 0.0
      %1325 = vadd.xlane.f32.xlu0 %v1324
      %v1326 = vpop.xlane.xlu0 %1325
      %v1327 = vsel %vm816, %v1293, 0.0
      %1328 = vadd.xlane.f32.xlu0 %v1327
      %v1329 = vpop.xlane.xlu0 %1328
      %v1330 = vsel %vm816, %v1294, 0.0
      %1331 = vadd.xlane.f32.xlu0 %v1330
      %v1332 = vpop.xlane.xlu0 %1331
      %v1333 = vsel %vm816, %v1295, 0.0
      %1334 = vadd.xlane.f32.xlu0 %v1333
      %v1335 = vpop.xlane.xlu0 %1334
      %v1336 = vsel %vm816, %v1296, 0.0
      %1337 = vadd.xlane.f32.xlu0 %v1336
      %v1338 = vpop.xlane.xlu0 %1337
      %v1339 = vsel %vm816, %v1297, 0.0
      %1340 = vadd.xlane.f32.xlu0 %v1339
      %v1341 = vpop.xlane.xlu0 %1340
      %v1342 = vsel %vm816, %v1298, 0.0
      %1343 = vadd.xlane.f32.xlu0 %v1342
      %v1344 = vpop.xlane.xlu0 %1343
      %v1345 = vsel %vm816, %v1299, 0.0
      %1346 = vadd.xlane.f32.xlu0 %v1345
      %v1347 = vpop.xlane.xlu0 %1346
      %v1348 = vmul.f32 %v1302, %v1251
      %v1349 = vmul.f32 %v1305, %v1251
      %v1350 = vmul.f32 %v1308, %v1251
      %v1351 = vmul.f32 %v1311, %v1251
      %v1352 = vmul.f32 %v1314, %v1251
      %v1353 = vmul.f32 %v1317, %v1251
      %v1354 = vmul.f32 %v1320, %v1251
      %v1355 = vmul.f32 %v1323, %v1251
      %v1356 = vmul.f32 %v1326, %v1251
      %v1357 = vmul.f32 %v1329, %v1251
      %v1358 = vmul.f32 %v1332, %v1251
      %v1359 = vmul.f32 %v1335, %v1251
      %v1360 = vmul.f32 %v1338, %v1251
      %v1361 = vmul.f32 %v1341, %v1251
      %v1362 = vmul.f32 %v1344, %v1251
      %v1363 = vmul.f32 %v1347, %v1251
      %v1364 = vadd.f32 %v1348, 1e-05
      %v1365 = vadd.f32 %v1349, 1e-05
      %v1366 = vadd.f32 %v1350, 1e-05
      %v1367 = vadd.f32 %v1351, 1e-05
      %v1368 = vadd.f32 %v1352, 1e-05
      %v1369 = vadd.f32 %v1353, 1e-05
      %v1370 = vadd.f32 %v1354, 1e-05
      %v1371 = vadd.f32 %v1355, 1e-05
      %v1372 = vadd.f32 %v1356, 1e-05
      %v1373 = vadd.f32 %v1357, 1e-05
      %v1374 = vadd.f32 %v1358, 1e-05
      %v1375 = vadd.f32 %v1359, 1e-05
      %v1376 = vadd.f32 %v1360, 1e-05
      %v1377 = vadd.f32 %v1361, 1e-05
      %v1378 = vadd.f32 %v1362, 1e-05
      %v1379 = vadd.f32 %v1363, 1e-05
      %v1380 = vrsqrt.pop %v1364
      %v1381 = vmul.f32 %v1380, %v1364
      %v1382 = vmul.f32 %v1381, %v1380
      %v1383 = vmul.f32 0.5, %v1382
      %v1384 = vsub.f32 1.5, %v1383
      %v1385 = vmul.f32 %v1380, %v1384
      %vm1386 = vweird.f32 %v1364
      %vm1387 = vweird.f32 %v1380
      %vm1388 = vmor %vm1386, %vm1387
      %v1389 = vsel %vm1388, %v1380, %v1385
      %v1390 = vrsqrt.pop %v1365
      %v1391 = vmul.f32 %v1390, %v1365
      %v1392 = vmul.f32 %v1391, %v1390
      %v1393 = vmul.f32 0.5, %v1392
      %v1394 = vsub.f32 1.5, %v1393
      %v1395 = vmul.f32 %v1390, %v1394
      %vm1396 = vweird.f32 %v1365
      %vm1397 = vweird.f32 %v1390
      %vm1398 = vmor %vm1396, %vm1397
      %v1399 = vsel %vm1398, %v1390, %v1395
      %v1400 = vrsqrt.pop %v1366
      %v1401 = vmul.f32 %v1400, %v1366
      %v1402 = vmul.f32 %v1401, %v1400
      %v1403 = vmul.f32 0.5, %v1402
      %v1404 = vsub.f32 1.5, %v1403
      %v1405 = vmul.f32 %v1400, %v1404
      %vm1406 = vweird.f32 %v1366
      %vm1407 = vweird.f32 %v1400
      %vm1408 = vmor %vm1406, %vm1407
      %v1409 = vsel %vm1408, %v1400, %v1405
      %v1410 = vrsqrt.pop %v1367
      %v1411 = vmul.f32 %v1410, %v1367
      %v1412 = vmul.f32 %v1411, %v1410
      %v1413 = vmul.f32 0.5, %v1412
      %v1414 = vsub.f32 1.5, %v1413
      %v1415 = vmul.f32 %v1410, %v1414
      %vm1416 = vweird.f32 %v1367
      %vm1417 = vweird.f32 %v1410
      %vm1418 = vmor %vm1416, %vm1417
      %v1419 = vsel %vm1418, %v1410, %v1415
      %v1420 = vrsqrt.pop %v1368
      %v1421 = vmul.f32 %v1420, %v1368
      %v1422 = vmul.f32 %v1421, %v1420
      %v1423 = vmul.f32 0.5, %v1422
      %v1424 = vsub.f32 1.5, %v1423
      %v1425 = vmul.f32 %v1420, %v1424
      %vm1426 = vweird.f32 %v1368
      %vm1427 = vweird.f32 %v1420
      %vm1428 = vmor %vm1426, %vm1427
      %v1429 = vsel %vm1428, %v1420, %v1425
      %v1430 = vrsqrt.pop %v1369
      %v1431 = vmul.f32 %v1430, %v1369
      %v1432 = vmul.f32 %v1431, %v1430
      %v1433 = vmul.f32 0.5, %v1432
      %v1434 = vsub.f32 1.5, %v1433
      %v1435 = vmul.f32 %v1430, %v1434
      %vm1436 = vweird.f32 %v1369
      %vm1437 = vweird.f32 %v1430
      %vm1438 = vmor %vm1436, %vm1437
      %v1439 = vsel %vm1438, %v1430, %v1435
      %v1440 = vrsqrt.pop %v1370
      %v1441 = vmul.f32 %v1440, %v1370
      %v1442 = vmul.f32 %v1441, %v1440
      %v1443 = vmul.f32 0.5, %v1442
      %v1444 = vsub.f32 1.5, %v1443
      %v1445 = vmul.f32 %v1440, %v1444
      %vm1446 = vweird.f32 %v1370
      %vm1447 = vweird.f32 %v1440
      %vm1448 = vmor %vm1446, %vm1447
      %v1449 = vsel %vm1448, %v1440, %v1445
      %v1450 = vrsqrt.pop %v1371
      %v1451 = vmul.f32 %v1450, %v1371
      %v1452 = vmul.f32 %v1451, %v1450
      %v1453 = vmul.f32 0.5, %v1452
      %v1454 = vsub.f32 1.5, %v1453
      %v1455 = vmul.f32 %v1450, %v1454
      %vm1456 = vweird.f32 %v1371
      %vm1457 = vweird.f32 %v1450
      %vm1458 = vmor %vm1456, %vm1457
      %v1459 = vsel %vm1458, %v1450, %v1455
      %v1460 = vrsqrt.pop %v1372
      %v1461 = vmul.f32 %v1460, %v1372
      %v1462 = vmul.f32 %v1461, %v1460
      %v1463 = vmul.f32 0.5, %v1462
      %v1464 = vsub.f32 1.5, %v1463
      %v1465 = vmul.f32 %v1460, %v1464
      %vm1466 = vweird.f32 %v1372
      %vm1467 = vweird.f32 %v1460
      %vm1468 = vmor %vm1466, %vm1467
      %v1469 = vsel %vm1468, %v1460, %v1465
      %v1470 = vrsqrt.pop %v1373
      %v1471 = vmul.f32 %v1470, %v1373
      %v1472 = vmul.f32 %v1471, %v1470
      %v1473 = vmul.f32 0.5, %v1472
      %v1474 = vsub.f32 1.5, %v1473
      %v1475 = vmul.f32 %v1470, %v1474
      %vm1476 = vweird.f32 %v1373
      %vm1477 = vweird.f32 %v1470
      %vm1478 = vmor %vm1476, %vm1477
      %v1479 = vsel %vm1478, %v1470, %v1475
      %v1480 = vrsqrt.pop %v1374
      %v1481 = vmul.f32 %v1480, %v1374
      %v1482 = vmul.f32 %v1481, %v1480
      %v1483 = vmul.f32 0.5, %v1482
      %v1484 = vsub.f32 1.5, %v1483
      %v1485 = vmul.f32 %v1480, %v1484
      %vm1486 = vweird.f32 %v1374
      %vm1487 = vweird.f32 %v1480
      %vm1488 = vmor %vm1486, %vm1487
      %v1489 = vsel %vm1488, %v1480, %v1485
      %v1490 = vrsqrt.pop %v1375
      %v1491 = vmul.f32 %v1490, %v1375
      %v1492 = vmul.f32 %v1491, %v1490
      %v1493 = vmul.f32 0.5, %v1492
      %v1494 = vsub.f32 1.5, %v1493
      %v1495 = vmul.f32 %v1490, %v1494
      %vm1496 = vweird.f32 %v1375
      %vm1497 = vweird.f32 %v1490
      %vm1498 = vmor %vm1496, %vm1497
      %v1499 = vsel %vm1498, %v1490, %v1495
      %v1500 = vrsqrt.pop %v1376
      %v1501 = vmul.f32 %v1500, %v1376
      %v1502 = vmul.f32 %v1501, %v1500
      %v1503 = vmul.f32 0.5, %v1502
      %v1504 = vsub.f32 1.5, %v1503
      %v1505 = vmul.f32 %v1500, %v1504
      %vm1506 = vweird.f32 %v1376
      %vm1507 = vweird.f32 %v1500
      %vm1508 = vmor %vm1506, %vm1507
      %v1509 = vsel %vm1508, %v1500, %v1505
      %v1510 = vrsqrt.pop %v1377
      %v1511 = vmul.f32 %v1510, %v1377
      %v1512 = vmul.f32 %v1511, %v1510
      %v1513 = vmul.f32 0.5, %v1512
      %v1514 = vsub.f32 1.5, %v1513
      %v1515 = vmul.f32 %v1510, %v1514
      %vm1516 = vweird.f32 %v1377
      %vm1517 = vweird.f32 %v1510
      %vm1518 = vmor %vm1516, %vm1517
      %v1519 = vsel %vm1518, %v1510, %v1515
      %v1520 = vrsqrt.pop %v1378
      %v1521 = vmul.f32 %v1520, %v1378
      %v1522 = vmul.f32 %v1521, %v1520
      %v1523 = vmul.f32 0.5, %v1522
      %v1524 = vsub.f32 1.5, %v1523
      %v1525 = vmul.f32 %v1520, %v1524
      %vm1526 = vweird.f32 %v1378
      %vm1527 = vweird.f32 %v1520
      %vm1528 = vmor %vm1526, %vm1527
      %v1529 = vsel %vm1528, %v1520, %v1525
      %v1530 = vrsqrt.pop %v1379
      %v1531 = vmul.f32 %v1530, %v1379
      %v1532 = vmul.f32 %v1531, %v1530
      %v1533 = vmul.f32 0.5, %v1532
      %v1534 = vsub.f32 1.5, %v1533
      %v1535 = vmul.f32 %v1530, %v1534
      %vm1536 = vweird.f32 %v1379
      %vm1537 = vweird.f32 %v1530
      %vm1538 = vmor %vm1536, %vm1537
      %v1539 = vsel %vm1538, %v1530, %v1535
      %v1540 = vmul.f32 %v1268, %v1389
      %v1541 = vmul.f32 %v1269, %v1399
      %v1542 = vmul.f32 %v1270, %v1409
      %v1543 = vmul.f32 %v1271, %v1419
      %v1544 = vmul.f32 %v1272, %v1429
      %v1545 = vmul.f32 %v1273, %v1439
      %v1546 = vmul.f32 %v1274, %v1449
      %v1547 = vmul.f32 %v1275, %v1459
      %v1548 = vmul.f32 %v1276, %v1469
      %v1549 = vmul.f32 %v1277, %v1479
      %v1550 = vmul.f32 %v1278, %v1489
      %v1551 = vmul.f32 %v1279, %v1499
      %v1552 = vmul.f32 %v1280, %v1509
      %v1553 = vmul.f32 %v1281, %v1519
      %v1554 = vmul.f32 %v1282, %v1529
      %v1555 = vmul.f32 %v1283, %v1539
      %v1557 = vperm.slane %v1195, 0
      %v1559 = vmul.f32 %v1540, %v1557
      %v1560 = vmul.f32 %v1541, %v1557
      %v1561 = vmul.f32 %v1542, %v1557
      %v1562 = vmul.f32 %v1543, %v1557
      %v1563 = vmul.f32 %v1544, %v1557
      %v1564 = vmul.f32 %v1545, %v1557
      %v1565 = vmul.f32 %v1546, %v1557
      %v1566 = vmul.f32 %v1547, %v1557
      %v1567 = vmul.f32 %v1548, %v1557
      %v1568 = vmul.f32 %v1549, %v1557
      %v1569 = vmul.f32 %v1550, %v1557
      %v1570 = vmul.f32 %v1551, %v1557
      %v1571 = vmul.f32 %v1552, %v1557
      %v1572 = vmul.f32 %v1553, %v1557
      %v1573 = vmul.f32 %v1554, %v1557
      %v1574 = vmul.f32 %v1555, %v1557
      %v1576 = vperm.slane %v1196, 0
      %v1578 = vadd.f32 %v1559, %v1576
      %v1579 = vadd.f32 %v1560, %v1576
      %v1580 = vadd.f32 %v1561, %v1576
      %v1581 = vadd.f32 %v1562, %v1576
      %v1582 = vadd.f32 %v1563, %v1576
      %v1583 = vadd.f32 %v1564, %v1576
      %v1584 = vadd.f32 %v1565, %v1576
      %v1585 = vadd.f32 %v1566, %v1576
      %v1586 = vadd.f32 %v1567, %v1576
      %v1587 = vadd.f32 %v1568, %v1576
      %v1588 = vadd.f32 %v1569, %v1576
      %v1589 = vadd.f32 %v1570, %v1576
      %v1590 = vadd.f32 %v1571, %v1576
      %v1591 = vadd.f32 %v1572, %v1576
      %v1592 = vadd.f32 %v1573, %v1576
      %v1593 = vadd.f32 %v1574, %v1576
      %1594 = vst.msk [vmem:[%s334] sm:$0xff] %vm816, %v1578
      %1595 = vst.msk [vmem:[%s334 + $0x8] sm:$0xff] %vm816, %v1579
      %1596 = vst.msk [vmem:[%s334 + $0x10] sm:$0xff] %vm816, %v1580
      %1597 = vst.msk [vmem:[%s334 + $0x18] sm:$0xff] %vm816, %v1581
      %1598 = vst.msk [vmem:[%s334 + $0x20] sm:$0xff] %vm816, %v1582
      %1599 = vst.msk [vmem:[%s334 + $0x28] sm:$0xff] %vm816, %v1583
      %1600 = vst.msk [vmem:[%s334 + $0x30] sm:$0xff] %vm816, %v1584
      %1601 = vst.msk [vmem:[%s334 + $0x38] sm:$0xff] %vm816, %v1585
      %1602 = vst.msk [vmem:[%s334 + $0x40] sm:$0xff] %vm816, %v1586
      %1603 = vst.msk [vmem:[%s334 + $0x48] sm:$0xff] %vm816, %v1587
      %1604 = vst.msk [vmem:[%s334 + $0x50] sm:$0xff] %vm816, %v1588
      %1605 = vst.msk [vmem:[%s334 + $0x58] sm:$0xff] %vm816, %v1589
      %1606 = vst.msk [vmem:[%s334 + $0x60] sm:$0xff] %vm816, %v1590
      %1607 = vst.msk [vmem:[%s334 + $0x68] sm:$0xff] %vm816, %v1591
      %1608 = vst.msk [vmem:[%s334 + $0x70] sm:$0xff] %vm816, %v1592
      %1609 = vst.msk [vmem:[%s334 + $0x78] sm:$0xff] %vm816, %v1593
      %s1610 = smul.u32 16, %s20
      %p1611 = scmp.lt.s32.totalorder %s1610, 31
      %s1612 = scalar_select %p1611, %s1610, 31
      %s1613 = smul.addr %s1612, 8
      %s1614 = scalar_lea.vmem %s9, %s1613
      // Predicated region
      $region57: #{gamdnet_forward.8} parent=55 // pred_check
        %p1615 = pneg %p232
      $region58: #{gamdnet_forward.8} parent=55 // pred_check_branch
        %1617 = sbr.rel (%p1615) target = $region60
      $region59: #{gamdnet_forward.8} parent=55 // pred_region
        %s1618 = smul.u32 16, %s20
      $region60: #{gamdnet_forward.8} parent=55 // pred_fallthru
        _
    $region56: #{gamdnet_forward.8} parent=5 // pred_fallthru
      _
    %p1619 = scmp.le.s32.totalorder 2, %s15
    // Predicated region
    $region61: #{gamdnet_forward.8} parent=5 // pred_check
      %p1620 = pneg %p1619
    $region62: #{gamdnet_forward.8} parent=5 // pred_check_branch
      %1622 = sbr.rel (%p1620) target = $region64
    $region63: #{gamdnet_forward.8} parent=5 // pred_region
      %s1623 = ssub.s32 %s15, 2
      // Predicated region
      $region65: #{gamdnet_forward.8} parent=63 // pred_check
        %p1624 = pneg %p238
      $region66: #{gamdnet_forward.8} parent=63 // pred_check_branch
        %1626 = sbr.rel (%p1624) target = $region68
      $region67: #{gamdnet_forward.8} parent=63 // pred_region
        %s1627 = smul.u32 16, %s21
        %p1628 = scmp.lt.s32.totalorder %s1627, 31
        %s1629 = scalar_select %p1628, %s1627, 31
        %s1630 = smul.addr %s1629, 8
        %s1631 = scalar_lea.vmem %s9, %s1630
      $region68: #{gamdnet_forward.8} parent=63 // pred_fallthru
        _
    $region64: #{gamdnet_forward.8} parent=5 // pred_fallthru
      _
  $region6: #{gamdnet_forward.8} parent=0 // loop_footer
    %s19 = sadd.s32 1, %s15
  $region7: #{gamdnet_forward.8} parent=0 // loop_footer_branch
    %14 = sbr.rel target = $region3
  $region8: #{gamdnet_forward.8} parent=0 // loop_exit
    _

// kernel: gamdnet_forward.11
$region0: #{gamdnet_forward.11}
  #allocation0 [shape = 'u32[]', space=smem, size = 0x4, offset = 0x4, fixed_abs, tag = 'smem constant byte address 0x4 - core index']
  #allocation1 [shape = 'u32[72,128]{1,0:T(1,128)}', space=vmem, size = 0x9000, scoped, tag = 'internal scratch']
  %s0 = inlined_call_operand.vmem [shape: f32[64,32], index: 0, kind: input, shape index: {}]
  %s1 = inlined_call_operand.vmem [shape: f32[64,32], index: 1, kind: input, shape index: {}]
  %s2 = inlined_call_operand.vmem [shape: f32[64,32], index: 2, kind: input, shape index: {}]
  %s3 = inlined_call_operand.vmem [shape: f32[32,32], index: 3, kind: input, shape index: {}]
  %s4 = inlined_call_operand.vmem [shape: f32[1,32], index: 4, kind: input, shape index: {}]
  %s5 = inlined_call_operand.vmem [shape: f32[64,32], index: 5, kind: output, shape index: {}]
  %s6 = sld [smem:[#allocation0]]
  $region53: #{gamdnet_forward.11} parent=0
    _
  %s8 = ssub.s32 1, %s6
  %s9 = scalar_select 0, %s8, %s6
  loop: start=0, step=1, limit=4
  $region2: #{gamdnet_forward.11} parent=0 // loop_pre_header
    _
  $region3: #{gamdnet_forward.11} parent=0 // loop_header
    %s11 = sphi 0, %s15
    %p12 = scmp.ge.s32.totalorder %s11, 4
    %s21 = sphi 0, %s23
    %s24 = sphi 0, %s21
    %s25 = sphi 0, %s24
    %s41 = sphi 0, %s25
    %s47 = sphi 0, %s49
    %s50 = sphi 0, %s47
    %s51 = sphi 0, %s50
    %s67 = sphi 0, %s51
    %s73 = sphi 0, %s75
    %s76 = sphi 0, %s73
    %s77 = sphi 0, %s76
    %s93 = sphi 0, %s77
    %s97 = sphi 0, %s97
    %s99 = sphi 0, %s97
    %s100 = sphi 0, %s99
    %s114 = sphi 0, %s100
    %s118 = sphi 0, %s118
    %s120 = sphi 0, %s118
    %s121 = sphi 0, %s120
    %s135 = sphi 0, %s121
    %s141 = sphi 0, %s143
    %s144 = sphi 0, %s141
    %s145 = sphi 0, %s144
    %s161 = sphi 0, %s145
  $region4: #{gamdnet_forward.11} parent=0 // loop_header_branch
    %14 = sbr.rel (%p12) target = $region8
  $region5: #{gamdnet_forward.11} parent=0 // loop_body
    %s16 = ssub.s32 %s11, 1
    %s17 = ssub.s32 %s11, 2
    %s18 = sadd.s32 %s11, 1
    %s19 = ssub.s32 %s11, %s18
    %p20 = scmp.eq.s32.totalorder %s19, 0
    %s22 = sadd.s32 %s21, 1
    %s23 = scalar_select %p20, %s21, %s22
    %p26 = pneg %p20
    %p27 = scmp.eq.s32.totalorder %s11, 1
    %p28 = por %p26, %p27
    %p29 = scmp.ne.s32.totalorder %s21, %s24
    %p30 = scmp.eq.s32.totalorder %s11, 0
    %p31 = por %p29, %p30
    %p32 = scmp.ne.s32.totalorder %s21, %s24
    %p33 = scmp.eq.s32.totalorder %s16, 1
    %p34 = por %p32, %p33
    %p35 = scmp.ne.s32.totalorder %s24, %s25
    %p36 = scmp.eq.s32.totalorder %s16, 0
    %p37 = por %p35, %p36
    %p38 = scmp.ne.s32.totalorder %s24, %s25
    %p39 = scmp.eq.s32.totalorder %s17, 1
    %p40 = por %p38, %p39
    %p42 = scmp.ne.s32.totalorder %s25, %s41
    %p43 = scmp.eq.s32.totalorder %s17, 0
    %p44 = por %p42, %p43
    %s45 = ssub.s32 %s11, %s18
    %p46 = scmp.eq.s32.totalorder %s45, 0
    %s48 = sadd.s32 %s47, 1
    %s49 = scalar_select %p46, %s47, %s48
    %p52 = pneg %p46
    %p53 = scmp.eq.s32.totalorder %s11, 1
    %p54 = por %p52, %p53
    %p55 = scmp.ne.s32.totalorder %s47, %s50
    %p56 = scmp.eq.s32.totalorder %s11, 0
    %p57 = por %p55, %p56
    %p58 = scmp.ne.s32.totalorder %s47, %s50
    %p59 = scmp.eq.s32.totalorder %s16, 1
    %p60 = por %p58, %p59
    %p61 = scmp.ne.s32.totalorder %s50, %s51
    %p62 = scmp.eq.s32.totalorder %s16, 0
    %p63 = por %p61, %p62
    %p64 = scmp.ne.s32.totalorder %s50, %s51
    %p65 = scmp.eq.s32.totalorder %s17, 1
    %p66 = por %p64, %p65
    %p68 = scmp.ne.s32.totalorder %s51, %s67
    %p69 = scmp.eq.s32.totalorder %s17, 0
    %p70 = por %p68, %p69
    %s71 = ssub.s32 %s11, %s18
    %p72 = scmp.eq.s32.totalorder %s71, 0
    %s74 = sadd.s32 %s73, 1
    %s75 = scalar_select %p72, %s73, %s74
    %p78 = pneg %p72
    %p79 = scmp.eq.s32.totalorder %s11, 1
    %p80 = por %p78, %p79
    %p81 = scmp.ne.s32.totalorder %s73, %s76
    %p82 = scmp.eq.s32.totalorder %s11, 0
    %p83 = por %p81, %p82
    %p84 = scmp.ne.s32.totalorder %s73, %s76
    %p85 = scmp.eq.s32.totalorder %s16, 1
    %p86 = por %p84, %p85
    %p87 = scmp.ne.s32.totalorder %s76, %s77
    %p88 = scmp.eq.s32.totalorder %s16, 0
    %p89 = por %p87, %p88
    %p90 = scmp.ne.s32.totalorder %s76, %s77
    %p91 = scmp.eq.s32.totalorder %s17, 1
    %p92 = por %p90, %p91
    %p94 = scmp.ne.s32.totalorder %s77, %s93
    %p95 = scmp.eq.s32.totalorder %s17, 0
    %p96 = por %p94, %p95
    %s98 = sadd.s32 %s97, 1
    %p101 = scmp.eq.s32.totalorder %s11, 1
    %p102 = scmp.ne.s32.totalorder %s97, %s99
    %p103 = scmp.eq.s32.totalorder %s11, 0
    %p104 = por %p102, %p103
    %p105 = scmp.ne.s32.totalorder %s97, %s99
    %p106 = scmp.eq.s32.totalorder %s16, 1
    %p107 = por %p105, %p106
    %p108 = scmp.ne.s32.totalorder %s99, %s100
    %p109 = scmp.eq.s32.totalorder %s16, 0
    %p110 = por %p108, %p109
    %p111 = scmp.ne.s32.totalorder %s99, %s100
    %p112 = scmp.eq.s32.totalorder %s17, 1
    %p113 = por %p111, %p112
    %p115 = scmp.ne.s32.totalorder %s100, %s114
    %p116 = scmp.eq.s32.totalorder %s17, 0
    %p117 = por %p115, %p116
    %s119 = sadd.s32 %s118, 1
    %p122 = scmp.eq.s32.totalorder %s11, 1
    %p123 = scmp.ne.s32.totalorder %s118, %s120
    %p124 = scmp.eq.s32.totalorder %s11, 0
    %p125 = por %p123, %p124
    %p126 = scmp.ne.s32.totalorder %s118, %s120
    %p127 = scmp.eq.s32.totalorder %s16, 1
    %p128 = por %p126, %p127
    %p129 = scmp.ne.s32.totalorder %s120, %s121
    %p130 = scmp.eq.s32.totalorder %s16, 0
    %p131 = por %p129, %p130
    %p132 = scmp.ne.s32.totalorder %s120, %s121
    %p133 = scmp.eq.s32.totalorder %s17, 1
    %p134 = por %p132, %p133
    %p136 = scmp.ne.s32.totalorder %s121, %s135
    %p137 = scmp.eq.s32.totalorder %s17, 0
    %p138 = por %p136, %p137
    %s139 = ssub.s32 %s11, %s18
    %p140 = scmp.eq.s32.totalorder %s139, 0
    %s142 = sadd.s32 %s141, 1
    %s143 = scalar_select %p140, %s141, %s142
    %p146 = pneg %p140
    %p147 = scmp.eq.s32.totalorder %s11, 1
    %p148 = por %p146, %p147
    %p149 = scmp.ne.s32.totalorder %s141, %s144
    %p150 = scmp.eq.s32.totalorder %s11, 0
    %p151 = por %p149, %p150
    %p152 = scmp.ne.s32.totalorder %s141, %s144
    %p153 = scmp.eq.s32.totalorder %s16, 1
    %p154 = por %p152, %p153
    %p155 = scmp.ne.s32.totalorder %s144, %s145
    %p156 = scmp.eq.s32.totalorder %s16, 0
    %p157 = por %p155, %p156
    %p158 = scmp.ne.s32.totalorder %s144, %s145
    %p159 = scmp.eq.s32.totalorder %s17, 1
    %p160 = por %p158, %p159
    %p162 = scmp.ne.s32.totalorder %s145, %s161
    %p163 = scmp.eq.s32.totalorder %s17, 0
    %p164 = por %p162, %p163
    %p165 = scmp.le.s32.totalorder 1, %s11
    %p166 = scmp.lt.s32.totalorder %s11, 3
    %p167 = pnand %p165, %p166
    %p168 = pneg %p167
    // Predicated region
    $region9: #{gamdnet_forward.11} parent=5 // pred_check
      _
    $region10: #{gamdnet_forward.11} parent=5 // pred_check_branch
      %170 = sbr.rel (%p167) target = $region12
    $region11: #{gamdnet_forward.11} parent=5 // pred_region
      %s171 = ssub.s32 %s11, 1
      // Predicated region
      $region13: #{gamdnet_forward.11} parent=11 // pred_check
        %p172 = pneg %p110
      $region14: #{gamdnet_forward.11} parent=11 // pred_check_branch
        %174 = sbr.rel (%p172) target = $region16
      $region15: #{gamdnet_forward.11} parent=11 // pred_region
        _
      $region16: #{gamdnet_forward.11} parent=11 // pred_fallthru
        _
      // Predicated region
      $region17: #{gamdnet_forward.11} parent=11 // pred_check
        %p175 = pneg %p131
      $region18: #{gamdnet_forward.11} parent=11 // pred_check_branch
        %177 = sbr.rel (%p175) target = $region20
      $region19: #{gamdnet_forward.11} parent=11 // pred_region
        _
      $region20: #{gamdnet_forward.11} parent=11 // pred_fallthru
        _
    $region12: #{gamdnet_forward.11} parent=5 // pred_fallthru
      _
    %p178 = scmp.lt.s32.totalorder %s11, 2
    // Predicated region
    $region21: #{gamdnet_forward.11} parent=5 // pred_check
      %p179 = pneg %p178
    $region22: #{gamdnet_forward.11} parent=5 // pred_check_branch
      %181 = sbr.rel (%p179) target = $region24
    $region23: #{gamdnet_forward.11} parent=5 // pred_region
      // Predicated region
      $region25: #{gamdnet_forward.11} parent=23 // pred_check
        %p182 = pneg %p31
      $region26: #{gamdnet_forward.11} parent=23 // pred_check_branch
        %184 = sbr.rel (%p182) target = $region28
      $region27: #{gamdnet_forward.11} parent=23 // pred_region
        %s185 = smul.u32 4, %s11
        %p186 = scmp.lt.s32.totalorder %s185, 7
        %s187 = scalar_select %p186, %s185, 7
        %s188 = smul.addr %s187, 8
        %s189 = scalar_lea.vmem %s0, %s188
        %s190 = smul.u32 4, %s11
      $region28: #{gamdnet_forward.11} parent=23 // pred_fallthru
        _
      // Predicated region
      $region29: #{gamdnet_forward.11} parent=23 // pred_check
        %p191 = pneg %p57
      $region30: #{gamdnet_forward.11} parent=23 // pred_check_branch
        %193 = sbr.rel (%p191) target = $region32
      $region31: #{gamdnet_forward.11} parent=23 // pred_region
        %s194 = smul.u32 4, %s11
        %p195 = scmp.lt.s32.totalorder %s194, 7
        %s196 = scalar_select %p195, %s194, 7
        %s197 = smul.addr %s196, 8
        %s198 = scalar_lea.vmem %s1, %s197
        %s199 = smul.u32 4, %s11
      $region32: #{gamdnet_forward.11} parent=23 // pred_fallthru
        _
      // Predicated region
      $region33: #{gamdnet_forward.11} parent=23 // pred_check
        %p200 = pneg %p83
      $region34: #{gamdnet_forward.11} parent=23 // pred_check_branch
        %202 = sbr.rel (%p200) target = $region36
      $region35: #{gamdnet_forward.11} parent=23 // pred_region
        %s203 = smul.u32 4, %s11
        %p204 = scmp.lt.s32.totalorder %s203, 7
        %s205 = scalar_select %p204, %s203, 7
        %s206 = smul.addr %s205, 8
        %s207 = scalar_lea.vmem %s2, %s206
        %s208 = smul.u32 4, %s11
      $region36: #{gamdnet_forward.11} parent=23 // pred_fallthru
        _
    $region24: #{gamdnet_forward.11} parent=5 // pred_fallthru
      _
    %p209 = scmp.le.s32.totalorder 1, %s11
    %p210 = scmp.lt.s32.totalorder %s11, 3
    %p211 = pnand %p209, %p210
    %p212 = pneg %p211
    // Predicated region
    $region37: #{gamdnet_forward.11} parent=5 // pred_check
      _
    $region38: #{gamdnet_forward.11} parent=5 // pred_check_branch
      %214 = sbr.rel (%p211) target = $region40
    $region39: #{gamdnet_forward.11} parent=5 // pred_region
      %s215 = ssub.s32 %s11, 1
      %s216 = smul.u32 4, %s16
      %p217 = scmp.lt.s32.totalorder %s216, 7
      %s218 = scalar_select %p217, %s216, 7
      %s219 = smul.addr %s218, 8
      %s220 = scalar_lea.vmem %s0, %s219
      %p221 = pneg %p37
      %p222 = pneg %p34
      %s223 = smul.u32 4, %s16
      %p224 = scmp.lt.s32.totalorder %s223, 7
      %s225 = scalar_select %p224, %s223, 7
      %s226 = smul.addr %s225, 8
      %s227 = scalar_lea.vmem %s1, %s226
      %p228 = pneg %p63
      %p229 = pneg %p60
      %s230 = smul.u32 4, %s16
      %p231 = scmp.lt.s32.totalorder %s230, 7
      %s232 = scalar_select %p231, %s230, 7
      %s233 = smul.addr %s232, 8
      %s234 = scalar_lea.vmem %s2, %s233
      %p235 = pneg %p89
      %p236 = pneg %p86
      %p237 = pneg %p110
      %p238 = pneg %p107
      %p239 = pneg %p131
      %p240 = pneg %p128
      %p241 = pneg %p157
      %p242 = pneg %p154
      %s243 = smul.u32 4, %s16
      %p244 = scmp.lt.s32.totalorder %s243, 7
      %s245 = scalar_select %p244, %s243, 7
      %s246 = smul.addr %s245, 8
      %s247 = scalar_lea.vmem %s5, %s246
      %s248 = smul.u32 4, %s16
      %p249 = scmp.lt.s32.totalorder %s248, 7
      %s250 = scalar_select %p249, %s248, 7
      %s251 = smul.addr %s250, 8
      %s252 = scalar_lea.vmem %s0, %s251
      %s253 = smul.u32 4, %s16
      %s254 = smul.u32 4, %s16
      %p255 = scmp.lt.s32.totalorder %s254, 7
      %s256 = scalar_select %p255, %s254, 7
      %s257 = smul.addr %s256, 8
      %s258 = scalar_lea.vmem %s1, %s257
      %s259 = smul.u32 4, %s16
      %s260 = smul.u32 4, %s16
      %p261 = scmp.lt.s32.totalorder %s260, 7
      %s262 = scalar_select %p261, %s260, 7
      %s263 = smul.addr %s262, 8
      %s264 = scalar_lea.vmem %s2, %s263
      %s265 = smul.u32 4, %s16
      %s266 = smul.u32 4, %s16
      %p267 = scmp.lt.s32.totalorder %s266, 7
      %s268 = scalar_select %p267, %s266, 7
      %s269 = smul.addr %s268, 8
      %s270 = scalar_lea.vmem %s5, %s269
      %s271 = smul.u32 4, %s16
      %v272 = vld [vmem:[%s258] sm:$0xff]
      %v273 = vld [vmem:[%s258 + $0x8] sm:$0xff]
      %v274 = vld [vmem:[%s258 + $0x10] sm:$0xff]
      %v275 = vld [vmem:[%s258 + $0x18] sm:$0xff]
      %v276 = vld [vmem:[%s264] sm:$0xff]
      %v277 = vld [vmem:[%s264 + $0x8] sm:$0xff]
      %v278 = vld [vmem:[%s264 + $0x10] sm:$0xff]
      %v279 = vld [vmem:[%s264 + $0x18] sm:$0xff]
      %v280 = vadd.f32 %v272, %v276
      %v281 = vadd.f32 %v273, %v277
      %v282 = vadd.f32 %v274, %v278
      %v283 = vadd.f32 %v275, %v279
      %v284 = vxor.u32 %v280, 2147483648
      %v285 = vxor.u32 %v281, 2147483648
      %v286 = vxor.u32 %v282, 2147483648
      %v287 = vxor.u32 %v283, 2147483648
      %v288 = vmul.f32 %v284, 1.442695
      %v289 = vpow.pop %v288
      %v290 = vmul.f32 %v285, 1.442695
      %v291 = vpow.pop %v290
      %v292 = vmul.f32 %v286, 1.442695
      %v293 = vpow.pop %v292
      %v294 = vmul.f32 %v287, 1.442695
      %v295 = vpow.pop %v294
      %v296 = vadd.f32 %v289, 1.0
      %v297 = vadd.f32 %v291, 1.0
      %v298 = vadd.f32 %v293, 1.0
      %v299 = vadd.f32 %v295, 1.0
      %v300 = vrcp.pop %v296
      %v301 = vmul.f32 %v296, %v300
      %v302 = vsub.f32 1.0, %v301
      %v303 = vmul.f32 %v300, %v302
      %v304 = vadd.f32 %v300, %v303
      %vm305 = vweird.f32 %v296
      %vm306 = vweird.f32 %v300
      %vm307 = vmor %vm305, %vm306
      %v308 = vsel %vm307, %v300, %v304
      %v309 = vand.u32 2147483647, %v296
      %vm310 = vcmp.eq.f32.partialorder %v309, 8.507059e+37
      %v311 = vand.u32 %v296, 2147483648
      %v312 = vor.u32 1.1754944e-38, %v311
      %v313 = vsel %vm310, %v312, %v308
      %v314 = vmul.f32 1.0, %v313
      %v315 = vrcp.pop %v297
      %v316 = vmul.f32 %v297, %v315
      %v317 = vsub.f32 1.0, %v316
      %v318 = vmul.f32 %v315, %v317
      %v319 = vadd.f32 %v315, %v318
      %vm320 = vweird.f32 %v297
      %vm321 = vweird.f32 %v315
      %vm322 = vmor %vm320, %vm321
      %v323 = vsel %vm322, %v315, %v319
      %v324 = vand.u32 2147483647, %v297
      %vm325 = vcmp.eq.f32.partialorder %v324, 8.507059e+37
      %v326 = vand.u32 %v297, 2147483648
      %v327 = vor.u32 1.1754944e-38, %v326
      %v328 = vsel %vm325, %v327, %v323
      %v329 = vmul.f32 1.0, %v328
      %v330 = vrcp.pop %v298
      %v331 = vmul.f32 %v298, %v330
      %v332 = vsub.f32 1.0, %v331
      %v333 = vmul.f32 %v330, %v332
      %v334 = vadd.f32 %v330, %v333
      %vm335 = vweird.f32 %v298
      %vm336 = vweird.f32 %v330
      %vm337 = vmor %vm335, %vm336
      %v338 = vsel %vm337, %v330, %v334
      %v339 = vand.u32 2147483647, %v298
      %vm340 = vcmp.eq.f32.partialorder %v339, 8.507059e+37
      %v341 = vand.u32 %v298, 2147483648
      %v342 = vor.u32 1.1754944e-38, %v341
      %v343 = vsel %vm340, %v342, %v338
      %v344 = vmul.f32 1.0, %v343
      %v345 = vrcp.pop %v299
      %v346 = vmul.f32 %v299, %v345
      %v347 = vsub.f32 1.0, %v346
      %v348 = vmul.f32 %v345, %v347
      %v349 = vadd.f32 %v345, %v348
      %vm350 = vweird.f32 %v299
      %vm351 = vweird.f32 %v345
      %vm352 = vmor %vm350, %vm351
      %v353 = vsel %vm352, %v345, %v349
      %v354 = vand.u32 2147483647, %v299
      %vm355 = vcmp.eq.f32.partialorder %v354, 8.507059e+37
      %v356 = vand.u32 %v299, 2147483648
      %v357 = vor.u32 1.1754944e-38, %v356
      %v358 = vsel %vm355, %v357, %v353
      %v359 = vmul.f32 1.0, %v358
      %v360 = vmul.f32 %v280, %v314
      %v361 = vmul.f32 %v281, %v329
      %v362 = vmul.f32 %v282, %v344
      %v363 = vmul.f32 %v283, %v359
      %v364 = vld [vmem:[%s3] sm:$0xff]
      %v365 = vld [vmem:[%s3 + $0x8] sm:$0xff]
      %v366 = vld [vmem:[%s3 + $0x10] sm:$0xff]
      %v367 = vld [vmem:[%s3 + $0x18] sm:$0xff]
      %v368 = vld [vmem:[%s4] sm:$0x1]
      %v370 = vperm.slane %v368, 0
      %vm372 = vcmask 261120
      %v374 = vsel %vm372, %v360, 0
      %v377 = vsel %vm372, %v361, 0
      %v380 = vsel %vm372, %v362, 0
      %v383 = vsel %vm372, %v363, 0
      %385 = vmatpush.msra.mxu0 0.0
      %386 = vmatpush.msra.mxu0 0.0
      %387 = vmatpush.msra.mxu0 0.0
      %388 = vmatpush.msra.mxu0 0.0
      %389 = vmatpush.msra.mxu0 0.0
      %390 = vmatpush.msra.mxu0 0.0
      %391 = vmatpush.msra.mxu0 0.0
      %392 = vmatpush.msra.mxu0 0.0
      %393 = vmatpush.msra.mxu0 0.0
      %394 = vmatpush.msra.mxu0 0.0
      %395 = vmatpush.msra.mxu0 0.0
      %396 = vmatpush.msra.mxu0 0.0
      %397 = vmatpush.msra.mxu0 %v367
      %398 = vmatpush.msra.mxu0 %v366
      %399 = vmatpush.msra.mxu0 %v365
      %400 = vmatpush.msra.mxu0 %v364
      %401 = vmatmul.f32.gmra.mxu0 %v374
      %v402 = vpop.f32.mrf.mxu0
      %v403 = vadd.f32 %v370, %v402
      %404 = vmatmul.f32.gmra.mxu0 %v377
      %v405 = vpop.f32.mrf.mxu0
      %v406 = vadd.f32 %v370, %v405
      %407 = vmatmul.f32.gmra.mxu0 %v380
      %v408 = vpop.f32.mrf.mxu0
      %v409 = vadd.f32 %v370, %v408
      %410 = vmatmul.f32.gmra.mxu0 %v383
      %v411 = vpop.f32.mrf.mxu0
      %v412 = vadd.f32 %v370, %v411
      %413 = vdwg.mxu0
      %v414 = vld [vmem:[%s252] sm:$0xff]
      %v415 = vld [vmem:[%s252 + $0x8] sm:$0xff]
      %v416 = vld [vmem:[%s252 + $0x10] sm:$0xff]
      %v417 = vld [vmem:[%s252 + $0x18] sm:$0xff]
      %v418 = vadd.f32 %v403, %v414
      %v419 = vadd.f32 %v406, %v415
      %v420 = vadd.f32 %v409, %v416
      %v421 = vadd.f32 %v412, %v417
      %422 = vst.msk [vmem:[%s270] sm:$0xff] %vm372, %v418
      %423 = vst.msk [vmem:[%s270 + $0x8] sm:$0xff] %vm372, %v419
      %424 = vst.msk [vmem:[%s270 + $0x10] sm:$0xff] %vm372, %v420
      %425 = vst.msk [vmem:[%s270 + $0x18] sm:$0xff] %vm372, %v421
      %s426 = smul.u32 4, %s16
      %p427 = scmp.lt.s32.totalorder %s426, 7
      %s428 = scalar_select %p427, %s426, 7
      %s429 = smul.addr %s428, 8
      %s430 = scalar_lea.vmem %s5, %s429
      // Predicated region
      $region41: #{gamdnet_forward.11} parent=39 // pred_check
        %p431 = pneg %p154
      $region42: #{gamdnet_forward.11} parent=39 // pred_check_branch
        %433 = sbr.rel (%p431) target = $region44
      $region43: #{gamdnet_forward.11} parent=39 // pred_region
        %s434 = smul.u32 4, %s16
      $region44: #{gamdnet_forward.11} parent=39 // pred_fallthru
        _
    $region40: #{gamdnet_forward.11} parent=5 // pred_fallthru
      _
    %p435 = scmp.le.s32.totalorder 2, %s11
    // Predicated region
    $region45: #{gamdnet_forward.11} parent=5 // pred_check
      %p436 = pneg %p435
    $region46: #{gamdnet_forward.11} parent=5 // pred_check_branch
      %438 = sbr.rel (%p436) target = $region48
    $region47: #{gamdnet_forward.11} parent=5 // pred_region
      %s439 = ssub.s32 %s11, 2
      // Predicated region
      $region49: #{gamdnet_forward.11} parent=47 // pred_check
        %p440 = pneg %p160
      $region50: #{gamdnet_forward.11} parent=47 // pred_check_branch
        %442 = sbr.rel (%p440) target = $region52
      $region51: #{gamdnet_forward.11} parent=47 // pred_region
        %s443 = smul.u32 4, %s17
        %p444 = scmp.lt.s32.totalorder %s443, 7
        %s445 = scalar_select %p444, %s443, 7
        %s446 = smul.addr %s445, 8
        %s447 = scalar_lea.vmem %s5, %s446
      $region52: #{gamdnet_forward.11} parent=47 // pred_fallthru
        _
    $region48: #{gamdnet_forward.11} parent=5 // pred_fallthru
      _
  $region6: #{gamdnet_forward.11} parent=0 // loop_footer
    %s15 = sadd.s32 1, %s11
  $region7: #{gamdnet_forward.11} parent=0 // loop_footer_branch
    %10 = sbr.rel target = $region3
  $region8: #{gamdnet_forward.11} parent=0 // loop_exit
    _

// kernel: gamdnet_forward.15
$region0: #{gamdnet_forward.15}
  #allocation0 [shape = 'u32[]', space=smem, size = 0x4, offset = 0x4, fixed_abs, tag = 'smem constant byte address 0x4 - core index']
  #allocation1 [shape = 'u32[72,128]{1,0:T(1,128)}', space=vmem, size = 0x9000, scoped, tag = 'internal scratch']
  %s0 = inlined_call_operand.vmem [shape: f32[64,32], index: 0, kind: input, shape index: {}]
  %s1 = inlined_call_operand.vmem [shape: f32[32,32], index: 1, kind: input, shape index: {}]
  %s2 = inlined_call_operand.vmem [shape: f32[1,32], index: 2, kind: input, shape index: {}]
  %s3 = inlined_call_operand.vmem [shape: f32[32,128], index: 3, kind: input, shape index: {}]
  %s4 = inlined_call_operand.vmem [shape: f32[1,128], index: 4, kind: input, shape index: {}]
  %s5 = inlined_call_operand.vmem [shape: f32[64,128], index: 5, kind: output, shape index: {}]
  %s6 = sld [smem:[#allocation0]]
  $region53: #{gamdnet_forward.15} parent=0
    _
  %s8 = ssub.s32 1, %s6
  %s9 = scalar_select 0, %s8, %s6
  loop: start=0, step=1, limit=4
  $region2: #{gamdnet_forward.15} parent=0 // loop_pre_header
    _
  $region3: #{gamdnet_forward.15} parent=0 // loop_header
    %s11 = sphi 0, %s15
    %p12 = scmp.ge.s32.totalorder %s11, 4
    %s21 = sphi 0, %s23
    %s24 = sphi 0, %s21
    %s25 = sphi 0, %s24
    %s41 = sphi 0, %s25
    %s45 = sphi 0, %s45
    %s47 = sphi 0, %s45
    %s48 = sphi 0, %s47
    %s62 = sphi 0, %s48
    %s66 = sphi 0, %s66
    %s68 = sphi 0, %s66
    %s69 = sphi 0, %s68
    %s83 = sphi 0, %s69
    %s87 = sphi 0, %s87
    %s89 = sphi 0, %s87
    %s90 = sphi 0, %s89
    %s104 = sphi 0, %s90
    %s108 = sphi 0, %s108
    %s110 = sphi 0, %s108
    %s111 = sphi 0, %s110
    %s125 = sphi 0, %s111
    %s131 = sphi 0, %s133
    %s134 = sphi 0, %s131
    %s135 = sphi 0, %s134
    %s151 = sphi 0, %s135
  $region4: #{gamdnet_forward.15} parent=0 // loop_header_branch
    %14 = sbr.rel (%p12) target = $region8
  $region5: #{gamdnet_forward.15} parent=0 // loop_body
    %s16 = ssub.s32 %s11, 1
    %s17 = ssub.s32 %s11, 2
    %s18 = sadd.s32 %s11, 1
    %s19 = ssub.s32 %s11, %s18
    %p20 = scmp.eq.s32.totalorder %s19, 0
    %s22 = sadd.s32 %s21, 1
    %s23 = scalar_select %p20, %s21, %s22
    %p26 = pneg %p20
    %p27 = scmp.eq.s32.totalorder %s11, 1
    %p28 = por %p26, %p27
    %p29 = scmp.ne.s32.totalorder %s21, %s24
    %p30 = scmp.eq.s32.totalorder %s11, 0
    %p31 = por %p29, %p30
    %p32 = scmp.ne.s32.totalorder %s21, %s24
    %p33 = scmp.eq.s32.totalorder %s16, 1
    %p34 = por %p32, %p33
    %p35 = scmp.ne.s32.totalorder %s24, %s25
    %p36 = scmp.eq.s32.totalorder %s16, 0
    %p37 = por %p35, %p36
    %p38 = scmp.ne.s32.totalorder %s24, %s25
    %p39 = scmp.eq.s32.totalorder %s17, 1
    %p40 = por %p38, %p39
    %p42 = scmp.ne.s32.totalorder %s25, %s41
    %p43 = scmp.eq.s32.totalorder %s17, 0
    %p44 = por %p42, %p43
    %s46 = sadd.s32 %s45, 1
    %p49 = scmp.eq.s32.totalorder %s11, 1
    %p50 = scmp.ne.s32.totalorder %s45, %s47
    %p51 = scmp.eq.s32.totalorder %s11, 0
    %p52 = por %p50, %p51
    %p53 = scmp.ne.s32.totalorder %s45, %s47
    %p54 = scmp.eq.s32.totalorder %s16, 1
    %p55 = por %p53, %p54
    %p56 = scmp.ne.s32.totalorder %s47, %s48
    %p57 = scmp.eq.s32.totalorder %s16, 0
    %p58 = por %p56, %p57
    %p59 = scmp.ne.s32.totalorder %s47, %s48
    %p60 = scmp.eq.s32.totalorder %s17, 1
    %p61 = por %p59, %p60
    %p63 = scmp.ne.s32.totalorder %s48, %s62
    %p64 = scmp.eq.s32.totalorder %s17, 0
    %p65 = por %p63, %p64
    %s67 = sadd.s32 %s66, 1
    %p70 = scmp.eq.s32.totalorder %s11, 1
    %p71 = scmp.ne.s32.totalorder %s66, %s68
    %p72 = scmp.eq.s32.totalorder %s11, 0
    %p73 = por %p71, %p72
    %p74 = scmp.ne.s32.totalorder %s66, %s68
    %p75 = scmp.eq.s32.totalorder %s16, 1
    %p76 = por %p74, %p75
    %p77 = scmp.ne.s32.totalorder %s68, %s69
    %p78 = scmp.eq.s32.totalorder %s16, 0
    %p79 = por %p77, %p78
    %p80 = scmp.ne.s32.totalorder %s68, %s69
    %p81 = scmp.eq.s32.totalorder %s17, 1
    %p82 = por %p80, %p81
    %p84 = scmp.ne.s32.totalorder %s69, %s83
    %p85 = scmp.eq.s32.totalorder %s17, 0
    %p86 = por %p84, %p85
    %s88 = sadd.s32 %s87, 1
    %p91 = scmp.eq.s32.totalorder %s11, 1
    %p92 = scmp.ne.s32.totalorder %s87, %s89
    %p93 = scmp.eq.s32.totalorder %s11, 0
    %p94 = por %p92, %p93
    %p95 = scmp.ne.s32.totalorder %s87, %s89
    %p96 = scmp.eq.s32.totalorder %s16, 1
    %p97 = por %p95, %p96
    %p98 = scmp.ne.s32.totalorder %s89, %s90
    %p99 = scmp.eq.s32.totalorder %s16, 0
    %p100 = por %p98, %p99
    %p101 = scmp.ne.s32.totalorder %s89, %s90
    %p102 = scmp.eq.s32.totalorder %s17, 1
    %p103 = por %p101, %p102
    %p105 = scmp.ne.s32.totalorder %s90, %s104
    %p106 = scmp.eq.s32.totalorder %s17, 0
    %p107 = por %p105, %p106
    %s109 = sadd.s32 %s108, 1
    %p112 = scmp.eq.s32.totalorder %s11, 1
    %p113 = scmp.ne.s32.totalorder %s108, %s110
    %p114 = scmp.eq.s32.totalorder %s11, 0
    %p115 = por %p113, %p114
    %p116 = scmp.ne.s32.totalorder %s108, %s110
    %p117 = scmp.eq.s32.totalorder %s16, 1
    %p118 = por %p116, %p117
    %p119 = scmp.ne.s32.totalorder %s110, %s111
    %p120 = scmp.eq.s32.totalorder %s16, 0
    %p121 = por %p119, %p120
    %p122 = scmp.ne.s32.totalorder %s110, %s111
    %p123 = scmp.eq.s32.totalorder %s17, 1
    %p124 = por %p122, %p123
    %p126 = scmp.ne.s32.totalorder %s111, %s125
    %p127 = scmp.eq.s32.totalorder %s17, 0
    %p128 = por %p126, %p127
    %s129 = ssub.s32 %s11, %s18
    %p130 = scmp.eq.s32.totalorder %s129, 0
    %s132 = sadd.s32 %s131, 1
    %s133 = scalar_select %p130, %s131, %s132
    %p136 = pneg %p130
    %p137 = scmp.eq.s32.totalorder %s11, 1
    %p138 = por %p136, %p137
    %p139 = scmp.ne.s32.totalorder %s131, %s134
    %p140 = scmp.eq.s32.totalorder %s11, 0
    %p141 = por %p139, %p140
    %p142 = scmp.ne.s32.totalorder %s131, %s134
    %p143 = scmp.eq.s32.totalorder %s16, 1
    %p144 = por %p142, %p143
    %p145 = scmp.ne.s32.totalorder %s134, %s135
    %p146 = scmp.eq.s32.totalorder %s16, 0
    %p147 = por %p145, %p146
    %p148 = scmp.ne.s32.totalorder %s134, %s135
    %p149 = scmp.eq.s32.totalorder %s17, 1
    %p150 = por %p148, %p149
    %p152 = scmp.ne.s32.totalorder %s135, %s151
    %p153 = scmp.eq.s32.totalorder %s17, 0
    %p154 = por %p152, %p153
    %p155 = scmp.le.s32.totalorder 1, %s11
    %p156 = scmp.lt.s32.totalorder %s11, 3
    %p157 = pnand %p155, %p156
    %p158 = pneg %p157
    // Predicated region
    $region9: #{gamdnet_forward.15} parent=5 // pred_check
      _
    $region10: #{gamdnet_forward.15} parent=5 // pred_check_branch
      %160 = sbr.rel (%p157) target = $region12
    $region11: #{gamdnet_forward.15} parent=5 // pred_region
      %s161 = ssub.s32 %s11, 1
      // Predicated region
      $region13: #{gamdnet_forward.15} parent=11 // pred_check
        %p162 = pneg %p58
      $region14: #{gamdnet_forward.15} parent=11 // pred_check_branch
        %164 = sbr.rel (%p162) target = $region16
      $region15: #{gamdnet_forward.15} parent=11 // pred_region
        _
      $region16: #{gamdnet_forward.15} parent=11 // pred_fallthru
        _
      // Predicated region
      $region17: #{gamdnet_forward.15} parent=11 // pred_check
        %p165 = pneg %p79
      $region18: #{gamdnet_forward.15} parent=11 // pred_check_branch
        %167 = sbr.rel (%p165) target = $region20
      $region19: #{gamdnet_forward.15} parent=11 // pred_region
        _
      $region20: #{gamdnet_forward.15} parent=11 // pred_fallthru
        _
      // Predicated region
      $region21: #{gamdnet_forward.15} parent=11 // pred_check
        %p168 = pneg %p100
      $region22: #{gamdnet_forward.15} parent=11 // pred_check_branch
        %170 = sbr.rel (%p168) target = $region24
      $region23: #{gamdnet_forward.15} parent=11 // pred_region
        _
      $region24: #{gamdnet_forward.15} parent=11 // pred_fallthru
        _
      // Predicated region
      $region25: #{gamdnet_forward.15} parent=11 // pred_check
        %p171 = pneg %p121
      $region26: #{gamdnet_forward.15} parent=11 // pred_check_branch
        %173 = sbr.rel (%p171) target = $region28
      $region27: #{gamdnet_forward.15} parent=11 // pred_region
        _
      $region28: #{gamdnet_forward.15} parent=11 // pred_fallthru
        _
    $region12: #{gamdnet_forward.15} parent=5 // pred_fallthru
      _
    %p174 = scmp.lt.s32.totalorder %s11, 2
    // Predicated region
    $region29: #{gamdnet_forward.15} parent=5 // pred_check
      %p175 = pneg %p174
    $region30: #{gamdnet_forward.15} parent=5 // pred_check_branch
      %177 = sbr.rel (%p175) target = $region32
    $region31: #{gamdnet_forward.15} parent=5 // pred_region
      // Predicated region
      $region33: #{gamdnet_forward.15} parent=31 // pred_check
        %p178 = pneg %p31
      $region34: #{gamdnet_forward.15} parent=31 // pred_check_branch
        %180 = sbr.rel (%p178) target = $region36
      $region35: #{gamdnet_forward.15} parent=31 // pred_region
        %s181 = smul.u32 4, %s11
        %p182 = scmp.lt.s32.totalorder %s181, 7
        %s183 = scalar_select %p182, %s181, 7
        %s184 = smul.addr %s183, 8
        %s185 = scalar_lea.vmem %s0, %s184
        %s186 = smul.u32 4, %s11
      $region36: #{gamdnet_forward.15} parent=31 // pred_fallthru
        _
    $region32: #{gamdnet_forward.15} parent=5 // pred_fallthru
      _
    %p187 = scmp.le.s32.totalorder 1, %s11
    %p188 = scmp.lt.s32.totalorder %s11, 3
    %p189 = pnand %p187, %p188
    %p190 = pneg %p189
    // Predicated region
    $region37: #{gamdnet_forward.15} parent=5 // pred_check
      _
    $region38: #{gamdnet_forward.15} parent=5 // pred_check_branch
      %192 = sbr.rel (%p189) target = $region40
    $region39: #{gamdnet_forward.15} parent=5 // pred_region
      %s193 = ssub.s32 %s11, 1
      %s194 = smul.u32 4, %s16
      %p195 = scmp.lt.s32.totalorder %s194, 7
      %s196 = scalar_select %p195, %s194, 7
      %s197 = smul.addr %s196, 8
      %s198 = scalar_lea.vmem %s0, %s197
      %p199 = pneg %p37
      %p200 = pneg %p34
      %p201 = pneg %p58
      %p202 = pneg %p55
      %p203 = pneg %p79
      %p204 = pneg %p76
      %p205 = pneg %p100
      %p206 = pneg %p97
      %p207 = pneg %p121
      %p208 = pneg %p118
      %p209 = pneg %p147
      %p210 = pneg %p144
      %s211 = smul.u32 4, %s16
      %p212 = scmp.lt.s32.totalorder %s211, 7
      %s213 = scalar_select %p212, %s211, 7
      %s214 = smul.addr %s213, 8
      %s215 = scalar_lea.vmem %s5, %s214
      %s216 = smul.u32 4, %s16
      %p217 = scmp.lt.s32.totalorder %s216, 7
      %s218 = scalar_select %p217, %s216, 7
      %s219 = smul.addr %s218, 8
      %s220 = scalar_lea.vmem %s0, %s219
      %s221 = smul.u32 4, %s16
      %s222 = smul.u32 4, %s16
      %p223 = scmp.lt.s32.totalorder %s222, 7
      %s224 = scalar_select %p223, %s222, 7
      %s225 = smul.addr %s224, 8
      %s226 = scalar_lea.vmem %s5, %s225
      %s227 = smul.u32 4, %s16
      %v228 = vld [vmem:[%s220] sm:$0xff]
      %v229 = vld [vmem:[%s220 + $0x8] sm:$0xff]
      %v230 = vld [vmem:[%s220 + $0x10] sm:$0xff]
      %v231 = vld [vmem:[%s220 + $0x18] sm:$0xff]
      %v232 = vld [vmem:[%s1] sm:$0xff]
      %v233 = vld [vmem:[%s1 + $0x8] sm:$0xff]
      %v234 = vld [vmem:[%s1 + $0x10] sm:$0xff]
      %v235 = vld [vmem:[%s1 + $0x18] sm:$0xff]
      %v236 = vld [vmem:[%s2] sm:$0x1]
      %v238 = vperm.slane %v236, 0
      %vm240 = vcmask 261120
      %v242 = vsel %vm240, %v228, 0
      %v245 = vsel %vm240, %v229, 0
      %v248 = vsel %vm240, %v230, 0
      %v251 = vsel %vm240, %v231, 0
      %253 = vmatpush.msra.mxu0 0.0
      %254 = vmatpush.msra.mxu0 0.0
      %255 = vmatpush.msra.mxu0 0.0
      %256 = vmatpush.msra.mxu0 0.0
      %257 = vmatpush.msra.mxu0 0.0
      %258 = vmatpush.msra.mxu0 0.0
      %259 = vmatpush.msra.mxu0 0.0
      %260 = vmatpush.msra.mxu0 0.0
      %261 = vmatpush.msra.mxu0 0.0
      %262 = vmatpush.msra.mxu0 0.0
      %263 = vmatpush.msra.mxu0 0.0
      %264 = vmatpush.msra.mxu0 0.0
      %265 = vmatpush.msra.mxu0 %v235
      %266 = vmatpush.msra.mxu0 %v234
      %267 = vmatpush.msra.mxu0 %v233
      %268 = vmatpush.msra.mxu0 %v232
      %269 = vmatmul.f32.gmra.mxu0 %v242
      %v270 = vpop.f32.mrf.mxu0
      %v271 = vadd.f32 %v238, %v270
      %272 = vmatmul.f32.gmra.mxu0 %v245
      %v273 = vpop.f32.mrf.mxu0
      %v274 = vadd.f32 %v238, %v273
      %275 = vmatmul.f32.gmra.mxu0 %v248
      %v276 = vpop.f32.mrf.mxu0
      %v277 = vadd.f32 %v238, %v276
      %278 = vmatmul.f32.gmra.mxu0 %v251
      %v279 = vpop.f32.mrf.mxu0
      %v280 = vadd.f32 %v238, %v279
      %281 = vdwg.mxu0
      %v282 = vmul.f32 %v271, 0.5
      %v283 = vmul.f32 %v274, 0.5
      %v284 = vmul.f32 %v277, 0.5
      %v285 = vmul.f32 %v280, 0.5
      %v286 = vmul.f32 %v271, 0.044715
      %v287 = vmul.f32 %v274, 0.044715
      %v288 = vmul.f32 %v277, 0.044715
      %v289 = vmul.f32 %v280, 0.044715
      %v290 = vmul.f32 %v286, %v271
      %v291 = vmul.f32 %v287, %v274
      %v292 = vmul.f32 %v288, %v277
      %v293 = vmul.f32 %v289, %v280
      %v294 = vmul.f32 %v290, %v271
      %v295 = vmul.f32 %v291, %v274
      %v296 = vmul.f32 %v292, %v277
      %v297 = vmul.f32 %v293, %v280
      %v298 = vadd.f32 %v271, %v294
      %v299 = vadd.f32 %v274, %v295
      %v300 = vadd.f32 %v277, %v296
      %v301 = vadd.f32 %v280, %v297
      %v302 = vmul.f32 %v298, 0.7978846
      %v303 = vmul.f32 %v299, 0.7978846
      %v304 = vmul.f32 %v300, 0.7978846
      %v305 = vmul.f32 %v301, 0.7978846
      %v306 = vtanh.pop %v302
      %v307 = vtanh.pop %v303
      %v308 = vtanh.pop %v304
      %v309 = vtanh.pop %v305
      %v310 = vadd.f32 %v306, 1.0
      %v311 = vadd.f32 %v307, 1.0
      %v312 = vadd.f32 %v308, 1.0
      %v313 = vadd.f32 %v309, 1.0
      %v314 = vmul.f32 %v282, %v310
      %v315 = vmul.f32 %v283, %v311
      %v316 = vmul.f32 %v284, %v312
      %v317 = vmul.f32 %v285, %v313
      %v318 = vld [vmem:[%s3] sm:$0xff]
      %v319 = vld [vmem:[%s3 + $0x8] sm:$0xff]
      %v320 = vld [vmem:[%s3 + $0x10] sm:$0xff]
      %v321 = vld [vmem:[%s3 + $0x18] sm:$0xff]
      %v322 = vld [vmem:[%s4] sm:$0x1]
      %v324 = vperm.slane %v322, 0
      %v327 = vsel %vm240, %v314, 0
      %v330 = vsel %vm240, %v315, 0
      %v333 = vsel %vm240, %v316, 0
      %v336 = vsel %vm240, %v317, 0
      %338 = vmatpush.msra.mxu0 0.0
      %339 = vmatpush.msra.mxu0 0.0
      %340 = vmatpush.msra.mxu0 0.0
      %341 = vmatpush.msra.mxu0 0.0
      %342 = vmatpush.msra.mxu0 0.0
      %343 = vmatpush.msra.mxu0 0.0
      %344 = vmatpush.msra.mxu0 0.0
      %345 = vmatpush.msra.mxu0 0.0
      %346 = vmatpush.msra.mxu0 0.0
      %347 = vmatpush.msra.mxu0 0.0
      %348 = vmatpush.msra.mxu0 0.0
      %349 = vmatpush.msra.mxu0 0.0
      %350 = vmatpush.msra.mxu0 %v321
      %351 = vmatpush.msra.mxu0 %v320
      %352 = vmatpush.msra.mxu0 %v319
      %353 = vmatpush.msra.mxu0 %v318
      %354 = vmatmul.f32.gmra.mxu0 %v327
      %v355 = vpop.f32.mrf.mxu0
      %v356 = vadd.f32 %v324, %v355
      %357 = vmatmul.f32.gmra.mxu0 %v330
      %v358 = vpop.f32.mrf.mxu0
      %v359 = vadd.f32 %v324, %v358
      %360 = vmatmul.f32.gmra.mxu0 %v333
      %v361 = vpop.f32.mrf.mxu0
      %v362 = vadd.f32 %v324, %v361
      %363 = vmatmul.f32.gmra.mxu0 %v336
      %v364 = vpop.f32.mrf.mxu0
      %v365 = vadd.f32 %v324, %v364
      %366 = vdwg.mxu0
      %367 = vst [vmem:[%s226] sm:$0xff] %v356
      %368 = vst [vmem:[%s226 + $0x8] sm:$0xff] %v359
      %369 = vst [vmem:[%s226 + $0x10] sm:$0xff] %v362
      %370 = vst [vmem:[%s226 + $0x18] sm:$0xff] %v365
      %s371 = smul.u32 4, %s16
      %p372 = scmp.lt.s32.totalorder %s371, 7
      %s373 = scalar_select %p372, %s371, 7
      %s374 = smul.addr %s373, 8
      %s375 = scalar_lea.vmem %s5, %s374
      // Predicated region
      $region41: #{gamdnet_forward.15} parent=39 // pred_check
        %p376 = pneg %p144
      $region42: #{gamdnet_forward.15} parent=39 // pred_check_branch
        %378 = sbr.rel (%p376) target = $region44
      $region43: #{gamdnet_forward.15} parent=39 // pred_region
        %s379 = smul.u32 4, %s16
      $region44: #{gamdnet_forward.15} parent=39 // pred_fallthru
        _
    $region40: #{gamdnet_forward.15} parent=5 // pred_fallthru
      _
    %p380 = scmp.le.s32.totalorder 2, %s11
    // Predicated region
    $region45: #{gamdnet_forward.15} parent=5 // pred_check
      %p381 = pneg %p380
    $region46: #{gamdnet_forward.15} parent=5 // pred_check_branch
      %383 = sbr.rel (%p381) target = $region48
    $region47: #{gamdnet_forward.15} parent=5 // pred_region
      %s384 = ssub.s32 %s11, 2
      // Predicated region
      $region49: #{gamdnet_forward.15} parent=47 // pred_check
        %p385 = pneg %p150
      $region50: #{gamdnet_forward.15} parent=47 // pred_check_branch
        %387 = sbr.rel (%p385) target = $region52
      $region51: #{gamdnet_forward.15} parent=47 // pred_region
        %s388 = smul.u32 4, %s17
        %p389 = scmp.lt.s32.totalorder %s388, 7
        %s390 = scalar_select %p389, %s388, 7
        %s391 = smul.addr %s390, 8
        %s392 = scalar_lea.vmem %s5, %s391
      $region52: #{gamdnet_forward.15} parent=47 // pred_fallthru
        _
    $region48: #{gamdnet_forward.15} parent=5 // pred_fallthru
      _
  $region6: #{gamdnet_forward.15} parent=0 // loop_footer
    %s15 = sadd.s32 1, %s11
  $region7: #{gamdnet_forward.15} parent=0 // loop_footer_branch
    %10 = sbr.rel target = $region3
  $region8: #{gamdnet_forward.15} parent=0 // loop_exit
    _

</llo_original>
